<compile_context>
chip_gen: v7x
topology: tpu7x:2x2x1
jax: 0.10.0
libtpu: 0.0.40
codegen_flags: <defaults>
</compile_context>

<pallas_src>
import functools

import numpy as np
import jax
import jax.numpy as jnp
from jax.experimental import pallas as pl
from jax.experimental.pallas import tpu as pltpu

GN_GROUPS = 32
GN_EPS = 1e-5


# ---------------------------------------------------------------------------
# In-kernel helpers (operate on VMEM values)
# ---------------------------------------------------------------------------
def _shift_w(x, d):
    """Shift (H, W, C) along the W (sublane) axis by d in {-1, +1}, zero filled."""
    H, W, C = x.shape
    zc = jnp.zeros((H, 1, C), x.dtype)
    if d > 0:
        return jnp.concatenate([zc, x[:, :W - 1, :]], axis=1)
    return jnp.concatenate([x[:, 1:, :], zc], axis=1)


def _shift_rows_down(y, rows):
    """out[r] = y[r - rows] with zero fill (flat (HW, C) vertical tap shift)."""
    z = jnp.zeros((rows,) + y.shape[1:], y.dtype)
    return jnp.concatenate([z, y[:-rows]], axis=0)


def _shift_rows_up(y, rows):
    """out[r] = y[r + rows] with zero fill."""
    z = jnp.zeros((rows,) + y.shape[1:], y.dtype)
    return jnp.concatenate([y[rows:], z], axis=0)


def _conv3x3(x_hwc, w_ref, b):
    """3x3 SAME conv as 3 MXU matmuls.

    x_hwc: (H, W, Cin) bf16 value.
    w_ref: (3, 3*Cin, Cout) bf16 Ref -- host-side reshape of HWIO (3,3,Cin,Cout),
           so w_ref[dh] already has the 3 horizontal taps stacked on the K axis.
    b:     (1, Cout) f32.
    Returns (H*W, Cout) f32.
    """
    H, W, Cin = x_hwc.shape
    Cout = w_ref.shape[2]
    HW = H * W

    # Single fused operand: 3 horizontally shifted copies on the contraction axis.
    xs = jnp.concatenate(
        [_shift_w(x_hwc, 1), x_hwc, _shift_w(x_hwc, -1)], axis=-1
    ).reshape(HW, 3 * Cin).astype(jnp.bfloat16)

    y_top = jnp.dot(xs, w_ref[0], preferred_element_type=jnp.float32)  # (HW, Cout)
    y_mid = jnp.dot(xs, w_ref[1], preferred_element_type=jnp.float32)
    y_bot = jnp.dot(xs, w_ref[2], preferred_element_type=jnp.float32)

    # Vertical taps resolved on the flat result: +/-W rows == +/-1 image row.
    acc = y_mid + b
    acc = acc + _shift_rows_down(y_top, W)   # dh=0 uses input row h-1
    acc = acc + _shift_rows_up(y_bot, W)     # dh=2 uses input row h+1
    return acc


def _gn_silu(h, gamma, beta, m):
    """GroupNorm(32) + SiLU, centered (two-pass) statistics.

    h: (HW, C) f32;  gamma/beta: (1, C) f32;
    m: (C, C) f32 group-membership matrix with 1/(HW*Cg) folded in.
    """
    mean = jnp.dot(jnp.sum(h, axis=0, keepdims=True), m,
                   preferred_element_type=jnp.float32)                 # (1, C)
    xc = h - mean                                                      # reused below
    var = jnp.dot(jnp.sum(xc * xc, axis=0, keepdims=True), m,
                  preferred_element_type=jnp.float32)                  # (1, C)
    y = xc * (jax.lax.rsqrt(var + GN_EPS) * gamma) + beta
    sig = pl.reciprocal(1.0 + jnp.exp(-y), approx=True)                # EUP, not VPU divide
    return y * sig


# ---------------------------------------------------------------------------
# Fused ConvBlock kernel (one batch sample per grid step)
# ---------------------------------------------------------------------------
def _conv_block_kernel(*refs, residual_mode):
    if residual_mode == "proj":
        x_ref, w1_ref, w2_ref, wr_ref, vecs_ref, m_ref, o_ref = refs
    else:
        x_ref, w1_ref, w2_ref, vecs_ref, m_ref, o_ref = refs

    _, H, W, Cin = x_ref.shape
    Cout = o_ref.shape[3]
    HW = H * W

    x = x_ref[0]                         # (H, W, Cin) bf16
    m = m_ref[...]                       # (Cout, Cout) f32
    vecs = vecs_ref[...]                 # (8, Cout) f32
    b1, g1, be1 = vecs[0:1], vecs[1:2], vecs[2:3]
    b2, g2, be2 = vecs[3:4], vecs[4:5], vecs[5:6]

    h = _conv3x3(x, w1_ref, b1)                                   # (HW, Cout) f32
    h = _gn_silu(h, g1, be1, m)
    h = _conv3x3(h.reshape(H, W, Cout).astype(jnp.bfloat16), w2_ref, b2)
    h = _gn_silu(h, g2, be2, m)

    if residual_mode == "proj":                                   # fused 1x1 projection
        br = vecs[6:7]
        res = jnp.dot(x.reshape(HW, Cin), wr_ref[...],
                      preferred_element_type=jnp.float32) + br
        h = h + res
    elif residual_mode == "identity":                             # Cin == Cout
        h = h + x.reshape(HW, Cin).astype(jnp.float32)

    o_ref[...] = h.reshape(1, H, W, Cout).astype(o_ref.dtype)


# ---------------------------------------------------------------------------
# Wrapper
# ---------------------------------------------------------------------------
def _group_matrix(c, hw):
    cg = c // GN_GROUPS
    g = np.arange(c) // cg
    m = (g[:, None] == g[None, :]).astype(np.float32) / float(hw * cg)
    return jnp.asarray(m)


def _pack_vecs(params, cout):
    rows = [params["b1"], params["g1"], params["be1"],
            params["b2"], params["g2"], params["be2"],
            params["br"], jnp.zeros((1, cout), jnp.float32)]
    return jnp.concatenate([r.astype(jnp.float32) for r in rows], axis=0)  # (8, Cout)


def conv_block_pallas(x_nhwc, p, m, residual_mode):
    N, H, W, Cin = x_nhwc.shape
    Cout = p["w1"].shape[-1]
    HW = H * W

    def batch_spec(c):
        return pl.BlockSpec((1, H, W, c), lambda n: (n, 0, 0, 0))

    def const_spec(shape):
        rank = len(shape)
        return pl.BlockSpec(shape, lambda n: (0,) * rank)

    in_specs = [batch_spec(Cin),
                const_spec((3, 3 * Cin, Cout)),
                const_spec((3, 3 * Cout, Cout))]
    args = [x_nhwc, p["w1"], p["w2"]]
    if residual_mode == "proj":
        in_specs.append(const_spec((Cin, Cout)))
        args.append(p["wr"])
    in_specs += [const_spec((8, Cout)), const_spec((Cout, Cout))]
    args += [p["vecs"], m]

    const_bytes = sum(int(np.prod(a.shape)) * a.dtype.itemsize for a in args[1:])

    # --- advisory cost estimate for XLA scheduling -------------------------
    flops = 2 * N * HW * (9 * Cin * Cout + 9 * Cout * Cout)
    if residual_mode == "proj":
        flops += 2 * N * HW * Cin * Cout
    transcendentals = 2 * N * HW * Cout                 # two SiLU exps per element
    bytes_accessed = (N * HW * Cin * 2) + (N * HW * Cout * 2) + const_bytes

    # --- VMEM budget from the actual block sizes ---------------------------
    est = (2 * (HW * Cin * 2 + HW * Cout * 2)           # double-buffered bf16 x / out blocks
           + 2 * const_bytes                            # (still) double-buffered constants
           + HW * (3 * Cin * 2 + 3 * Cout * 2 + 8 * Cout * 4))   # live intermediates
    vmem_limit = int(min(100 * 2 ** 20, max(32 * 2 ** 20, 2 * est)))

    return pl.pallas_call(
        functools.partial(_conv_block_kernel, residual_mode=residual_mode),
        out_shape=jax.ShapeDtypeStruct((N, H, W, Cout), jnp.bfloat16),
        grid=(N,),
        in_specs=in_specs,
        out_specs=pl.BlockSpec((1, H, W, Cout), lambda n: (n, 0, 0, 0)),
        compiler_params=pltpu.CompilerParams(
            dimension_semantics=("parallel",),          # disjoint outputs -> 2 TCs on v7x
            vmem_limit_bytes=vmem_limit,
        ),
        cost_estimate=pl.CostEstimate(
            flops=int(flops),
            transcendentals=int(transcendentals),
            bytes_accessed=int(bytes_accessed)),
    )(*args)


@functools.partial(jax.jit, static_argnames=("use_residual",))
def conv_block_forward(x_nchw, params, use_residual=True):
    # PyTorch NCHW -> NHWC, bf16 activation I/O.  For a stack of blocks hoist the
    # transposes / dtype casts to the model boundary.
    x = jnp.transpose(x_nchw, (0, 2, 3, 1)).astype(jnp.bfloat16)
    N, H, W, Cin = x.shape
    Cout = params["w1"].shape[-1]
    assert Cout % GN_GROUPS == 0, "GroupNorm(32) needs out_channels % 32 == 0"
    assert W % 8 == 0, "W must be a multiple of 8 (sublane-aligned shifts)"

    if use_residual:
        residual_mode = "proj" if Cin != Cout else "identity"
    else:
        residual_mode = "none"

    prepped = {
        # (3,3,Cin,Cout) HWIO -> (3, 3*Cin, Cout): horizontal taps stacked on K.
        "w1": params["w1"].reshape(3, 3 * Cin, Cout).astype(jnp.bfloat16),
        "w2": params["w2"].reshape(3, 3 * Cout, Cout).astype(jnp.bfloat16),
        "wr": params["wr"].astype(jnp.bfloat16),
        "vecs": _pack_vecs(params, Cout),
    }
    m = _group_matrix(Cout, H * W)
    out = conv_block_pallas(x, prepped, m, residual_mode)
    return jnp.transpose(out, (0, 3, 1, 2))                       # NHWC -> NCHW


def make_params(key, cin, cout):
    ks = jax.random.split(key, 10)
    s = 0.1
    bf = lambda a: a.astype(jnp.bfloat16)
    return {
        "w1": bf(s * jax.random.normal(ks[0], (3, 3, cin, cout), jnp.float32)),
        "b1": s * jax.random.normal(ks[1], (1, cout), jnp.float32),
        "g1": 1.0 + s * jax.random.normal(ks[2], (1, cout), jnp.float32),
        "be1": s * jax.random.normal(ks[3], (1, cout), jnp.float32),
        "w2": bf(s * jax.random.normal(ks[4], (3, 3, cout, cout), jnp.float32)),
        "b2": s * jax.random.normal(ks[5], (1, cout), jnp.float32),
        "g2": 1.0 + s * jax.random.normal(ks[6], (1, cout), jnp.float32),
        "be2": s * jax.random.normal(ks[7], (1, cout), jnp.float32),
        "wr": bf(s * jax.random.normal(ks[8], (cin, cout), jnp.float32)),
        "br": s * jax.random.normal(ks[9], (1, cout), jnp.float32),
    }


# ---------------------------------------------------------------------------
# Pure-JAX reference (bf16 matmuls, f32 GN) for correctness check
# ---------------------------------------------------------------------------
def ref_forward(x_nchw, p, use_residual=True):
    x = jnp.transpose(x_nchw, (0, 2, 3, 1)).astype(jnp.bfloat16)
    cin, cout = x.shape[-1], p["w1"].shape[-1]

    def conv3(v, w, b):
        y = jax.lax.conv_general_dilated(
            v.astype(jnp.bfloat16), w.astype(jnp.bfloat16), (1, 1), "SAME",
            dimension_numbers=("NHWC", "HWIO", "NHWC"),
            preferred_element_type=jnp.float32)
        return y + b.reshape(1, 1, 1, -1)

    def gn(v, g, be):
        N, H, W, C = v.shape
        cg = C // GN_GROUPS
        vr = v.reshape(N, H, W, GN_GROUPS, cg)
        mean = vr.mean(axis=(1, 2, 4), keepdims=True)
        var = vr.var(axis=(1, 2, 4), keepdims=True)
        vn = ((vr - mean) / jnp.sqrt(var + GN_EPS)).reshape(N, H, W, C)
        return vn * g.reshape(1, 1, 1, -1) + be.reshape(1, 1, 1, -1)

    silu = lambda v: v * jax.nn.sigmoid(v)
    h = silu(gn(conv3(x, p["w1"], p["b1"]), p["g1"], p["be1"]))
    h = silu(gn(conv3(h, p["w2"], p["b2"]), p["g2"], p["be2"]))
    if use_residual:
        if cin != cout:
            res = (jnp.einsum("nhwc,cd->nhwd", x, p["wr"].astype(jnp.bfloat16),
                              preferred_element_type=jnp.float32)
                   + p["br"].reshape(1, 1, 1, -1))
        else:
            res = x.astype(jnp.float32)
        h = h + res
    return jnp.transpose(h, (0, 3, 1, 2))


if __name__ == "__main__":
    key = jax.random.PRNGKey(0)
    kx, kp, kx2, kp2 = jax.random.split(key, 4)

    # Case 1: cin != cout -> fused 1x1 residual-projection path.
    N, CIN, COUT, H, W = 2, 16, 32, 16, 16   # GroupNorm(32, COUT) requires COUT % 32 == 0
    x = jax.random.normal(kx, (N, CIN, H, W), jnp.float32)        # NCHW like PyTorch
    params = make_params(kp, CIN, COUT)
    out = jax.block_until_ready(conv_block_forward(x, params, use_residual=True))
    assert out.shape == (N, COUT, H, W)
    ref = jax.block_until_ready(ref_forward(x, params, use_residual=True))
    np.testing.assert_allclose(np.asarray(out.astype(jnp.float32)),
                               np.asarray(ref), rtol=2e-2, atol=3e-2)

    # Case 2: cin == cout -> identity-residual path.
    x2 = jax.random.normal(kx2, (N, COUT, H, W), jnp.float32)
    params2 = make_params(kp2, COUT, COUT)
    out2 = jax.block_until_ready(conv_block_forward(x2, params2, use_residual=True))
    ref2 = jax.block_until_ready(ref_forward(x2, params2, use_residual=True))
    np.testing.assert_allclose(np.asarray(out2.astype(jnp.float32)),
                               np.asarray(ref2), rtol=2e-2, atol=3e-2)

    print("KERNEL_OK")
</pallas_src>

<mosaic_0001>
module attributes {stable_mosaic.version = 11 : i64} {
  func.func @_conv_block_kernel(%arg0: i32, %arg1: memref<1x16x16x16xbf16, #tpu.memory_space<vmem>>, %arg2: memref<3x48x32xbf16, #tpu.memory_space<vmem>>, %arg3: memref<3x96x32xbf16, #tpu.memory_space<vmem>>, %arg4: memref<16x32xbf16, #tpu.memory_space<vmem>>, %arg5: memref<8x32xf32, #tpu.memory_space<vmem>>, %arg6: memref<32x32xf32, #tpu.memory_space<vmem>>, %arg7: memref<1x16x16x32xbf16, #tpu.memory_space<vmem>>) attributes {dimension_semantics = [#tpu.dimension_semantics<parallel>], iteration_bounds = array<i64: 2>, scalar_prefetch = 0 : i64, scratch_operands = 0 : i64, tpu.core_type = #tpu.core_type<tc>, window_params = [{transform_indices = @transform_0, window_bounds = array<i64: 1, 16, 16, 16>}, {pipeline_mode = #tpu.pipeline_mode<synchronous>, transform_indices = @transform_1, window_bounds = array<i64: 3, 48, 32>}, {pipeline_mode = #tpu.pipeline_mode<synchronous>, transform_indices = @transform_2, window_bounds = array<i64: 3, 96, 32>}, {pipeline_mode = #tpu.pipeline_mode<synchronous>, transform_indices = @transform_3, window_bounds = array<i64: 16, 32>}, {pipeline_mode = #tpu.pipeline_mode<synchronous>, transform_indices = @transform_4, window_bounds = array<i64: 8, 32>}, {pipeline_mode = #tpu.pipeline_mode<synchronous>, transform_indices = @transform_5, window_bounds = array<i64: 32, 32>}, {transform_indices = @transform_6, window_bounds = array<i64: 1, 16, 16, 32>}]} {
    %c0 = arith.constant 0 : index
    %c0_0 = arith.constant 0 : index
    %c0_1 = arith.constant 0 : index
    %c0_2 = arith.constant 0 : index
    %0 = vector.load %arg1[%c0, %c0_0, %c0_1, %c0_2] : memref<1x16x16x16xbf16, #tpu.memory_space<vmem>>, vector<1x16x16x16xbf16>
    %1 = vector.shape_cast %0 : vector<1x16x16x16xbf16> to vector<16x16x16xbf16>
    %c0_3 = arith.constant 0 : index
    %c0_4 = arith.constant 0 : index
    %2 = vector.load %arg6[%c0_3, %c0_4] : memref<32x32xf32, #tpu.memory_space<vmem>>, vector<32x32xf32>
    %c0_5 = arith.constant 0 : index
    %c0_6 = arith.constant 0 : index
    %3 = vector.load %arg5[%c0_5, %c0_6] : memref<8x32xf32, #tpu.memory_space<vmem>>, vector<8x32xf32>
    %4 = vector.extract_strided_slice %3 {offsets = [0, 0], sizes = [1, 32], strides = [1, 1]} : vector<8x32xf32> to vector<1x32xf32>
    %5 = vector.extract_strided_slice %3 {offsets = [1, 0], sizes = [1, 32], strides = [1, 1]} : vector<8x32xf32> to vector<1x32xf32>
    %6 = vector.extract_strided_slice %3 {offsets = [2, 0], sizes = [1, 32], strides = [1, 1]} : vector<8x32xf32> to vector<1x32xf32>
    %7 = vector.extract_strided_slice %3 {offsets = [3, 0], sizes = [1, 32], strides = [1, 1]} : vector<8x32xf32> to vector<1x32xf32>
    %8 = vector.extract_strided_slice %3 {offsets = [4, 0], sizes = [1, 32], strides = [1, 1]} : vector<8x32xf32> to vector<1x32xf32>
    %9 = vector.extract_strided_slice %3 {offsets = [5, 0], sizes = [1, 32], strides = [1, 1]} : vector<8x32xf32> to vector<1x32xf32>
    %cst = arith.constant 0.000000e+00 : bf16
    %10 = vector.broadcast %cst : bf16 to vector<16x1x16xbf16>
    %11 = vector.extract_strided_slice %1 {offsets = [0, 0, 0], sizes = [16, 15, 16], strides = [1, 1, 1]} : vector<16x16x16xbf16> to vector<16x15x16xbf16>
    %12 = tpu.concatenate %10, %11 in 1 : vector<16x1x16xbf16>, vector<16x15x16xbf16> -> vector<16x16x16xbf16>
    %cst_7 = arith.constant 0.000000e+00 : bf16
    %13 = vector.broadcast %cst_7 : bf16 to vector<16x1x16xbf16>
    %14 = vector.extract_strided_slice %1 {offsets = [0, 1, 0], sizes = [16, 15, 16], strides = [1, 1, 1]} : vector<16x16x16xbf16> to vector<16x15x16xbf16>
    %15 = tpu.concatenate %14, %13 in 1 : vector<16x15x16xbf16>, vector<16x1x16xbf16> -> vector<16x16x16xbf16>
    %16 = tpu.concatenate %12, %1, %15 in 2 : vector<16x16x16xbf16>, vector<16x16x16xbf16>, vector<16x16x16xbf16> -> vector<16x16x48xbf16>
    %17 = vector.shape_cast %16 : vector<16x16x48xbf16> to vector<256x48xbf16>
    %c0_8 = arith.constant 0 : index
    %c0_9 = arith.constant 0 : index
    %c0_10 = arith.constant 0 : index
    %18 = vector.load %arg2[%c0_8, %c0_9, %c0_10] : memref<3x48x32xbf16, #tpu.memory_space<vmem>>, vector<1x48x32xbf16>
    %19 = vector.shape_cast %18 : vector<1x48x32xbf16> to vector<48x32xbf16>
    %cst_11 = arith.constant dense<0.000000e+00> : vector<256x32xf32>
    %20 = tpu.matmul %17, %19, %cst_11 {dimension_numbers = #tpu.dot_dimension_numbers<[1], [0], [0], [1], [0, 0, 1, 1], [], []>} : vector<256x48xbf16>, vector<48x32xbf16>, vector<256x32xf32> -> vector<256x32xf32>
    %c1 = arith.constant 1 : index
    %c0_12 = arith.constant 0 : index
    %c0_13 = arith.constant 0 : index
    %21 = vector.load %arg2[%c1, %c0_12, %c0_13] : memref<3x48x32xbf16, #tpu.memory_space<vmem>>, vector<1x48x32xbf16>
    %22 = vector.shape_cast %21 : vector<1x48x32xbf16> to vector<48x32xbf16>
    %cst_14 = arith.constant dense<0.000000e+00> : vector<256x32xf32>
    %23 = tpu.matmul %17, %22, %cst_14 {dimension_numbers = #tpu.dot_dimension_numbers<[1], [0], [0], [1], [0, 0, 1, 1], [], []>} : vector<256x48xbf16>, vector<48x32xbf16>, vector<256x32xf32> -> vector<256x32xf32>
    %c2 = arith.constant 2 : index
    %c0_15 = arith.constant 0 : index
    %c0_16 = arith.constant 0 : index
    %24 = vector.load %arg2[%c2, %c0_15, %c0_16] : memref<3x48x32xbf16, #tpu.memory_space<vmem>>, vector<1x48x32xbf16>
    %25 = vector.shape_cast %24 : vector<1x48x32xbf16> to vector<48x32xbf16>
    %cst_17 = arith.constant dense<0.000000e+00> : vector<256x32xf32>
    %26 = tpu.matmul %17, %25, %cst_17 {dimension_numbers = #tpu.dot_dimension_numbers<[1], [0], [0], [1], [0, 0, 1, 1], [], []>} : vector<256x48xbf16>, vector<48x32xbf16>, vector<256x32xf32> -> vector<256x32xf32>
    %27 = vector.broadcast %4 : vector<1x32xf32> to vector<256x32xf32>
    %28 = arith.addf %23, %27 : vector<256x32xf32>
    %cst_18 = arith.constant 0.000000e+00 : f32
    %29 = vector.broadcast %cst_18 : f32 to vector<16x32xf32>
    %30 = vector.extract_strided_slice %20 {offsets = [0, 0], sizes = [240, 32], strides = [1, 1]} : vector<256x32xf32> to vector<240x32xf32>
    %31 = tpu.concatenate %29, %30 in 0 : vector<16x32xf32>, vector<240x32xf32> -> vector<256x32xf32>
    %32 = arith.addf %28, %31 : vector<256x32xf32>
    %cst_19 = arith.constant 0.000000e+00 : f32
    %33 = vector.broadcast %cst_19 : f32 to vector<16x32xf32>
    %34 = vector.extract_strided_slice %26 {offsets = [16, 0], sizes = [240, 32], strides = [1, 1]} : vector<256x32xf32> to vector<240x32xf32>
    %35 = tpu.concatenate %34, %33 in 0 : vector<240x32xf32>, vector<16x32xf32> -> vector<256x32xf32>
    %36 = arith.addf %32, %35 : vector<256x32xf32>
    %cst_20 = arith.constant dense<0.000000e+00> : vector<32xf32>
    %37 = vector.multi_reduction <add>, %36, %cst_20 [0] : vector<256x32xf32> to vector<32xf32>
    %38 = vector.shape_cast %37 : vector<32xf32> to vector<1x32xf32>
    %cst_21 = arith.constant dense<0.000000e+00> : vector<1x32xf32>
    %39 = tpu.matmul %38, %2, %cst_21 {dimension_numbers = #tpu.dot_dimension_numbers<[1], [0], [0], [1], [0, 0, 1, 1], [], []>} : vector<1x32xf32>, vector<32x32xf32>, vector<1x32xf32> -> vector<1x32xf32>
    %40 = vector.broadcast %39 : vector<1x32xf32> to vector<256x32xf32>
    %41 = arith.subf %36, %40 : vector<256x32xf32>
    %42 = arith.mulf %41, %41 : vector<256x32xf32>
    %cst_22 = arith.constant dense<0.000000e+00> : vector<32xf32>
    %43 = vector.multi_reduction <add>, %42, %cst_22 [0] : vector<256x32xf32> to vector<32xf32>
    %44 = vector.shape_cast %43 : vector<32xf32> to vector<1x32xf32>
    %cst_23 = arith.constant dense<0.000000e+00> : vector<1x32xf32>
    %45 = tpu.matmul %44, %2, %cst_23 {dimension_numbers = #tpu.dot_dimension_numbers<[1], [0], [0], [1], [0, 0, 1, 1], [], []>} : vector<1x32xf32>, vector<32x32xf32>, vector<1x32xf32> -> vector<1x32xf32>
    %cst_24 = arith.constant 9.99999974E-6 : f32
    %46 = vector.broadcast %cst_24 : f32 to vector<1x32xf32>
    %47 = arith.addf %45, %46 : vector<1x32xf32>
    %48 = math.rsqrt %47 : vector<1x32xf32>
    %49 = arith.mulf %48, %5 : vector<1x32xf32>
    %50 = vector.broadcast %49 : vector<1x32xf32> to vector<256x32xf32>
    %51 = arith.mulf %41, %50 : vector<256x32xf32>
    %52 = vector.broadcast %6 : vector<1x32xf32> to vector<256x32xf32>
    %53 = arith.addf %51, %52 : vector<256x32xf32>
    %cst_25 = arith.constant 0.000000e+00 : f32
    %54 = vector.broadcast %cst_25 : f32 to vector<256x32xf32>
    %55 = arith.subf %54, %53 : vector<256x32xf32>
    %56 = math.exp %55 : vector<256x32xf32>
    %cst_26 = arith.constant 1.000000e+00 : f32
    %57 = vector.broadcast %cst_26 : f32 to vector<256x32xf32>
    %58 = arith.addf %57, %56 : vector<256x32xf32>
    %59 = tpu.reciprocal %58 {approx = true} : vector<256x32xf32> -> vector<256x32xf32>
    %60 = arith.mulf %53, %59 : vector<256x32xf32>
    %61 = vector.shape_cast %60 : vector<256x32xf32> to vector<16x16x32xf32>
    %62 = arith.truncf %61 : vector<16x16x32xf32> to vector<16x16x32xbf16>
    %cst_27 = arith.constant 0.000000e+00 : bf16
    %63 = vector.broadcast %cst_27 : bf16 to vector<16x1x32xbf16>
    %64 = vector.extract_strided_slice %62 {offsets = [0, 0, 0], sizes = [16, 15, 32], strides = [1, 1, 1]} : vector<16x16x32xbf16> to vector<16x15x32xbf16>
    %65 = tpu.concatenate %63, %64 in 1 : vector<16x1x32xbf16>, vector<16x15x32xbf16> -> vector<16x16x32xbf16>
    %cst_28 = arith.constant 0.000000e+00 : bf16
    %66 = vector.broadcast %cst_28 : bf16 to vector<16x1x32xbf16>
    %67 = vector.extract_strided_slice %62 {offsets = [0, 1, 0], sizes = [16, 15, 32], strides = [1, 1, 1]} : vector<16x16x32xbf16> to vector<16x15x32xbf16>
    %68 = tpu.concatenate %67, %66 in 1 : vector<16x15x32xbf16>, vector<16x1x32xbf16> -> vector<16x16x32xbf16>
    %69 = tpu.concatenate %65, %62, %68 in 2 : vector<16x16x32xbf16>, vector<16x16x32xbf16>, vector<16x16x32xbf16> -> vector<16x16x96xbf16>
    %70 = vector.shape_cast %69 : vector<16x16x96xbf16> to vector<256x96xbf16>
    %c0_29 = arith.constant 0 : index
    %c0_30 = arith.constant 0 : index
    %c0_31 = arith.constant 0 : index
    %71 = vector.load %arg3[%c0_29, %c0_30, %c0_31] : memref<3x96x32xbf16, #tpu.memory_space<vmem>>, vector<1x96x32xbf16>
    %72 = vector.shape_cast %71 : vector<1x96x32xbf16> to vector<96x32xbf16>
    %cst_32 = arith.constant dense<0.000000e+00> : vector<256x32xf32>
    %73 = tpu.matmul %70, %72, %cst_32 {dimension_numbers = #tpu.dot_dimension_numbers<[1], [0], [0], [1], [0, 0, 1, 1], [], []>} : vector<256x96xbf16>, vector<96x32xbf16>, vector<256x32xf32> -> vector<256x32xf32>
    %c1_33 = arith.constant 1 : index
    %c0_34 = arith.constant 0 : index
    %c0_35 = arith.constant 0 : index
    %74 = vector.load %arg3[%c1_33, %c0_34, %c0_35] : memref<3x96x32xbf16, #tpu.memory_space<vmem>>, vector<1x96x32xbf16>
    %75 = vector.shape_cast %74 : vector<1x96x32xbf16> to vector<96x32xbf16>
    %cst_36 = arith.constant dense<0.000000e+00> : vector<256x32xf32>
    %76 = tpu.matmul %70, %75, %cst_36 {dimension_numbers = #tpu.dot_dimension_numbers<[1], [0], [0], [1], [0, 0, 1, 1], [], []>} : vector<256x96xbf16>, vector<96x32xbf16>, vector<256x32xf32> -> vector<256x32xf32>
    %c2_37 = arith.constant 2 : index
    %c0_38 = arith.constant 0 : index
    %c0_39 = arith.constant 0 : index
    %77 = vector.load %arg3[%c2_37, %c0_38, %c0_39] : memref<3x96x32xbf16, #tpu.memory_space<vmem>>, vector<1x96x32xbf16>
    %78 = vector.shape_cast %77 : vector<1x96x32xbf16> to vector<96x32xbf16>
    %cst_40 = arith.constant dense<0.000000e+00> : vector<256x32xf32>
    %79 = tpu.matmul %70, %78, %cst_40 {dimension_numbers = #tpu.dot_dimension_numbers<[1], [0], [0], [1], [0, 0, 1, 1], [], []>} : vector<256x96xbf16>, vector<96x32xbf16>, vector<256x32xf32> -> vector<256x32xf32>
    %80 = vector.broadcast %7 : vector<1x32xf32> to vector<256x32xf32>
    %81 = arith.addf %76, %80 : vector<256x32xf32>
    %cst_41 = arith.constant 0.000000e+00 : f32
    %82 = vector.broadcast %cst_41 : f32 to vector<16x32xf32>
    %83 = vector.extract_strided_slice %73 {offsets = [0, 0], sizes = [240, 32], strides = [1, 1]} : vector<256x32xf32> to vector<240x32xf32>
    %84 = tpu.concatenate %82, %83 in 0 : vector<16x32xf32>, vector<240x32xf32> -> vector<256x32xf32>
    %85 = arith.addf %81, %84 : vector<256x32xf32>
    %cst_42 = arith.constant 0.000000e+00 : f32
    %86 = vector.broadcast %cst_42 : f32 to vector<16x32xf32>
    %87 = vector.extract_strided_slice %79 {offsets = [16, 0], sizes = [240, 32], strides = [1, 1]} : vector<256x32xf32> to vector<240x32xf32>
    %88 = tpu.concatenate %87, %86 in 0 : vector<240x32xf32>, vector<16x32xf32> -> vector<256x32xf32>
    %89 = arith.addf %85, %88 : vector<256x32xf32>
    %cst_43 = arith.constant dense<0.000000e+00> : vector<32xf32>
    %90 = vector.multi_reduction <add>, %89, %cst_43 [0] : vector<256x32xf32> to vector<32xf32>
    %91 = vector.shape_cast %90 : vector<32xf32> to vector<1x32xf32>
    %cst_44 = arith.constant dense<0.000000e+00> : vector<1x32xf32>
    %92 = tpu.matmul %91, %2, %cst_44 {dimension_numbers = #tpu.dot_dimension_numbers<[1], [0], [0], [1], [0, 0, 1, 1], [], []>} : vector<1x32xf32>, vector<32x32xf32>, vector<1x32xf32> -> vector<1x32xf32>
    %93 = vector.broadcast %92 : vector<1x32xf32> to vector<256x32xf32>
    %94 = arith.subf %89, %93 : vector<256x32xf32>
    %95 = arith.mulf %94, %94 : vector<256x32xf32>
    %cst_45 = arith.constant dense<0.000000e+00> : vector<32xf32>
    %96 = vector.multi_reduction <add>, %95, %cst_45 [0] : vector<256x32xf32> to vector<32xf32>
    %97 = vector.shape_cast %96 : vector<32xf32> to vector<1x32xf32>
    %cst_46 = arith.constant dense<0.000000e+00> : vector<1x32xf32>
    %98 = tpu.matmul %97, %2, %cst_46 {dimension_numbers = #tpu.dot_dimension_numbers<[1], [0], [0], [1], [0, 0, 1, 1], [], []>} : vector<1x32xf32>, vector<32x32xf32>, vector<1x32xf32> -> vector<1x32xf32>
    %cst_47 = arith.constant 9.99999974E-6 : f32
    %99 = vector.broadcast %cst_47 : f32 to vector<1x32xf32>
    %100 = arith.addf %98, %99 : vector<1x32xf32>
    %101 = math.rsqrt %100 : vector<1x32xf32>
    %102 = arith.mulf %101, %8 : vector<1x32xf32>
    %103 = vector.broadcast %102 : vector<1x32xf32> to vector<256x32xf32>
    %104 = arith.mulf %94, %103 : vector<256x32xf32>
    %105 = vector.broadcast %9 : vector<1x32xf32> to vector<256x32xf32>
    %106 = arith.addf %104, %105 : vector<256x32xf32>
    %cst_48 = arith.constant 0.000000e+00 : f32
    %107 = vector.broadcast %cst_48 : f32 to vector<256x32xf32>
    %108 = arith.subf %107, %106 : vector<256x32xf32>
    %109 = math.exp %108 : vector<256x32xf32>
    %cst_49 = arith.constant 1.000000e+00 : f32
    %110 = vector.broadcast %cst_49 : f32 to vector<256x32xf32>
    %111 = arith.addf %110, %109 : vector<256x32xf32>
    %112 = tpu.reciprocal %111 {approx = true} : vector<256x32xf32> -> vector<256x32xf32>
    %113 = arith.mulf %106, %112 : vector<256x32xf32>
    %114 = vector.extract_strided_slice %3 {offsets = [6, 0], sizes = [1, 32], strides = [1, 1]} : vector<8x32xf32> to vector<1x32xf32>
    %115 = vector.shape_cast %1 : vector<16x16x16xbf16> to vector<256x16xbf16>
    %c0_50 = arith.constant 0 : index
    %c0_51 = arith.constant 0 : index
    %116 = vector.load %arg4[%c0_50, %c0_51] : memref<16x32xbf16, #tpu.memory_space<vmem>>, vector<16x32xbf16>
    %cst_52 = arith.constant dense<0.000000e+00> : vector<256x32xf32>
    %117 = tpu.matmul %115, %116, %cst_52 {dimension_numbers = #tpu.dot_dimension_numbers<[1], [0], [0], [1], [0, 0, 1, 1], [], []>} : vector<256x16xbf16>, vector<16x32xbf16>, vector<256x32xf32> -> vector<256x32xf32>
    %118 = vector.broadcast %114 : vector<1x32xf32> to vector<256x32xf32>
    %119 = arith.addf %117, %118 : vector<256x32xf32>
    %120 = arith.addf %113, %119 : vector<256x32xf32>
    %121 = vector.shape_cast %120 : vector<256x32xf32> to vector<1x16x16x32xf32>
    %122 = arith.truncf %121 : vector<1x16x16x32xf32> to vector<1x16x16x32xbf16>
    %c0_53 = arith.constant 0 : index
    %c0_54 = arith.constant 0 : index
    %c0_55 = arith.constant 0 : index
    %c0_56 = arith.constant 0 : index
    %123 = vector.load %arg7[%c0_53, %c0_54, %c0_55, %c0_56] : memref<1x16x16x32xbf16, #tpu.memory_space<vmem>>, vector<1x16x16x32xbf16>
    tpu.vector_store %arg7[%c0_53, %c0_54, %c0_55, %c0_56], %122 {strides = array<i32>} : memref<1x16x16x32xbf16, #tpu.memory_space<vmem>>, vector<1x16x16x32xbf16>,
    return
  }
  func.func @transform_0(%arg0: i32) -> (i32, i32, i32, i32) {
    %c0_i32 = arith.constant 0 : i32
    %c0_i32_0 = arith.constant 0 : i32
    %c0_i32_1 = arith.constant 0 : i32
    %c0_i32_2 = arith.constant 0 : i32
    return %arg0, %c0_i32, %c0_i32_0, %c0_i32_1 : i32, i32, i32, i32
  }
  func.func @transform_1(%arg0: i32) -> (i32, i32, i32) {
    %c0_i32 = arith.constant 0 : i32
    %c0_i32_0 = arith.constant 0 : i32
    %c0_i32_1 = arith.constant 0 : i32
    %c0_i32_2 = arith.constant 0 : i32
    return %c0_i32, %c0_i32_0, %c0_i32_1 : i32, i32, i32
  }
  func.func @transform_2(%arg0: i32) -> (i32, i32, i32) {
    %c0_i32 = arith.constant 0 : i32
    %c0_i32_0 = arith.constant 0 : i32
    %c0_i32_1 = arith.constant 0 : i32
    %c0_i32_2 = arith.constant 0 : i32
    return %c0_i32, %c0_i32_0, %c0_i32_1 : i32, i32, i32
  }
  func.func @transform_3(%arg0: i32) -> (i32, i32) {
    %c0_i32 = arith.constant 0 : i32
    %c0_i32_0 = arith.constant 0 : i32
    %c0_i32_1 = arith.constant 0 : i32
    return %c0_i32, %c0_i32_0 : i32, i32
  }
  func.func @transform_4(%arg0: i32) -> (i32, i32) {
    %c0_i32 = arith.constant 0 : i32
    %c0_i32_0 = arith.constant 0 : i32
    %c0_i32_1 = arith.constant 0 : i32
    return %c0_i32, %c0_i32_0 : i32, i32
  }
  func.func @transform_5(%arg0: i32) -> (i32, i32) {
    %c0_i32 = arith.constant 0 : i32
    %c0_i32_0 = arith.constant 0 : i32
    %c0_i32_1 = arith.constant 0 : i32
    return %c0_i32, %c0_i32_0 : i32, i32
  }
  func.func @transform_6(%arg0: i32) -> (i32, i32, i32, i32) {
    %c0_i32 = arith.constant 0 : i32
    %c0_i32_0 = arith.constant 0 : i32
    %c0_i32_1 = arith.constant 0 : i32
    %c0_i32_2 = arith.constant 0 : i32
    return %arg0, %c0_i32, %c0_i32_0, %c0_i32_1 : i32, i32, i32, i32
  }
}

</mosaic_0001>

<llo_original>
// kernel: conv_block_forward.1
$region0: #{conv_block_forward.1}
  #allocation0 [shape = 'u32[]', space=smem, size = 0x4, offset = 0x4, fixed_abs, tag = 'smem constant byte address 0x4 - core index']
  #allocation1 [shape = 'u32[144,128]{1,0:T(1,128)}', space=vmem, size = 0x12000, scoped, tag = 'internal scratch']
  %s0 = inlined_call_operand.vmem [shape: bf16[2,16,16,16], index: 0, kind: input, shape index: {}]
  %s1 = inlined_call_operand.vmem [shape: bf16[3,48,32], index: 1, kind: input, shape index: {}]
  %s2 = inlined_call_operand.vmem [shape: bf16[3,96,32], index: 2, kind: input, shape index: {}]
  %s3 = inlined_call_operand.vmem [shape: bf16[16,32], index: 3, kind: input, shape index: {}]
  %s4 = inlined_call_operand.vmem [shape: f32[8,32], index: 4, kind: input, shape index: {}]
  %s5 = inlined_call_operand.vmem [shape: f32[32,32], index: 5, kind: input, shape index: {}]
  %s6 = inlined_call_operand.hbm [shape: bf16[2,16,16,32], index: 6, kind: output, shape index: {}]
  %s7 = sld [smem:[#allocation0]]
  $region57: #{conv_block_forward.1} parent=0
    _
  %s9 = ssub.s32 1, %s7
  %s10 = scalar_select 0, %s9, %s7
  $region1: #{conv_block_forward.1} parent=0
    #allocation2 [shape = 'u8[131072]{0}', space=vmem, size = 0x20000, scoped, tag = 'output window, operand 0']
    #allocation3 [shape = 's32[2]{0}', space=sflag, size = 0x8, scoped, tag = 'scoped memory for conv_block_forward.1']
    %11 = vsyncpa [#allocation3], 0
    %s12 = scalar_lea.sflag [#allocation3], 1
    %13 = vsyncpa %s12, 0
    loop: start=0, step=1, limit=4
    $region2: #{conv_block_forward.1} parent=1 // loop_pre_header
      _
    $region3: #{conv_block_forward.1} parent=1 // loop_header
      %s15 = sphi 0, %s19
      %p16 = scmp.ge.s32.totalorder %s15, 4
      %s25 = sphi 0, %s27
      %s28 = sphi 0, %s25
      %s29 = sphi 0, %s28
      %s45 = sphi 0, %s29
      %s49 = sphi 0, %s49
      %s51 = sphi 0, %s49
      %s52 = sphi 0, %s51
      %s66 = sphi 0, %s52
      %s70 = sphi 0, %s70
      %s72 = sphi 0, %s70
      %s73 = sphi 0, %s72
      %s87 = sphi 0, %s73
      %s91 = sphi 0, %s91
      %s93 = sphi 0, %s91
      %s94 = sphi 0, %s93
      %s108 = sphi 0, %s94
      %s112 = sphi 0, %s112
      %s114 = sphi 0, %s112
      %s115 = sphi 0, %s114
      %s129 = sphi 0, %s115
      %s133 = sphi 0, %s133
      %s135 = sphi 0, %s133
      %s136 = sphi 0, %s135
      %s150 = sphi 0, %s136
      %s156 = sphi 0, %s158
      %s159 = sphi 0, %s156
      %s160 = sphi 0, %s159
      %s176 = sphi 0, %s160
    $region4: #{conv_block_forward.1} parent=1 // loop_header_branch
      %18 = sbr.rel (%p16) target = $region8
    $region5: #{conv_block_forward.1} parent=1 // loop_body
      %s20 = ssub.s32 %s15, 1
      %s21 = ssub.s32 %s15, 2
      %s22 = sadd.s32 %s15, 1
      %s23 = ssub.s32 %s15, %s22
      %p24 = scmp.eq.s32.totalorder %s23, 0
      %s26 = sadd.s32 %s25, 1
      %s27 = scalar_select %p24, %s25, %s26
      %p30 = pneg %p24
      %p31 = scmp.eq.s32.totalorder %s15, 1
      %p32 = por %p30, %p31
      %p33 = scmp.ne.s32.totalorder %s25, %s28
      %p34 = scmp.eq.s32.totalorder %s15, 0
      %p35 = por %p33, %p34
      %p36 = scmp.ne.s32.totalorder %s25, %s28
      %p37 = scmp.eq.s32.totalorder %s20, 1
      %p38 = por %p36, %p37
      %p39 = scmp.ne.s32.totalorder %s28, %s29
      %p40 = scmp.eq.s32.totalorder %s20, 0
      %p41 = por %p39, %p40
      %p42 = scmp.ne.s32.totalorder %s28, %s29
      %p43 = scmp.eq.s32.totalorder %s21, 1
      %p44 = por %p42, %p43
      %p46 = scmp.ne.s32.totalorder %s29, %s45
      %p47 = scmp.eq.s32.totalorder %s21, 0
      %p48 = por %p46, %p47
      %s50 = sadd.s32 %s49, 1
      %p53 = scmp.eq.s32.totalorder %s15, 1
      %p54 = scmp.ne.s32.totalorder %s49, %s51
      %p55 = scmp.eq.s32.totalorder %s15, 0
      %p56 = por %p54, %p55
      %p57 = scmp.ne.s32.totalorder %s49, %s51
      %p58 = scmp.eq.s32.totalorder %s20, 1
      %p59 = por %p57, %p58
      %p60 = scmp.ne.s32.totalorder %s51, %s52
      %p61 = scmp.eq.s32.totalorder %s20, 0
      %p62 = por %p60, %p61
      %p63 = scmp.ne.s32.totalorder %s51, %s52
      %p64 = scmp.eq.s32.totalorder %s21, 1
      %p65 = por %p63, %p64
      %p67 = scmp.ne.s32.totalorder %s52, %s66
      %p68 = scmp.eq.s32.totalorder %s21, 0
      %p69 = por %p67, %p68
      %s71 = sadd.s32 %s70, 1
      %p74 = scmp.eq.s32.totalorder %s15, 1
      %p75 = scmp.ne.s32.totalorder %s70, %s72
      %p76 = scmp.eq.s32.totalorder %s15, 0
      %p77 = por %p75, %p76
      %p78 = scmp.ne.s32.totalorder %s70, %s72
      %p79 = scmp.eq.s32.totalorder %s20, 1
      %p80 = por %p78, %p79
      %p81 = scmp.ne.s32.totalorder %s72, %s73
      %p82 = scmp.eq.s32.totalorder %s20, 0
      %p83 = por %p81, %p82
      %p84 = scmp.ne.s32.totalorder %s72, %s73
      %p85 = scmp.eq.s32.totalorder %s21, 1
      %p86 = por %p84, %p85
      %p88 = scmp.ne.s32.totalorder %s73, %s87
      %p89 = scmp.eq.s32.totalorder %s21, 0
      %p90 = por %p88, %p89
      %s92 = sadd.s32 %s91, 1
      %p95 = scmp.eq.s32.totalorder %s15, 1
      %p96 = scmp.ne.s32.totalorder %s91, %s93
      %p97 = scmp.eq.s32.totalorder %s15, 0
      %p98 = por %p96, %p97
      %p99 = scmp.ne.s32.totalorder %s91, %s93
      %p100 = scmp.eq.s32.totalorder %s20, 1
      %p101 = por %p99, %p100
      %p102 = scmp.ne.s32.totalorder %s93, %s94
      %p103 = scmp.eq.s32.totalorder %s20, 0
      %p104 = por %p102, %p103
      %p105 = scmp.ne.s32.totalorder %s93, %s94
      %p106 = scmp.eq.s32.totalorder %s21, 1
      %p107 = por %p105, %p106
      %p109 = scmp.ne.s32.totalorder %s94, %s108
      %p110 = scmp.eq.s32.totalorder %s21, 0
      %p111 = por %p109, %p110
      %s113 = sadd.s32 %s112, 1
      %p116 = scmp.eq.s32.totalorder %s15, 1
      %p117 = scmp.ne.s32.totalorder %s112, %s114
      %p118 = scmp.eq.s32.totalorder %s15, 0
      %p119 = por %p117, %p118
      %p120 = scmp.ne.s32.totalorder %s112, %s114
      %p121 = scmp.eq.s32.totalorder %s20, 1
      %p122 = por %p120, %p121
      %p123 = scmp.ne.s32.totalorder %s114, %s115
      %p124 = scmp.eq.s32.totalorder %s20, 0
      %p125 = por %p123, %p124
      %p126 = scmp.ne.s32.totalorder %s114, %s115
      %p127 = scmp.eq.s32.totalorder %s21, 1
      %p128 = por %p126, %p127
      %p130 = scmp.ne.s32.totalorder %s115, %s129
      %p131 = scmp.eq.s32.totalorder %s21, 0
      %p132 = por %p130, %p131
      %s134 = sadd.s32 %s133, 1
      %p137 = scmp.eq.s32.totalorder %s15, 1
      %p138 = scmp.ne.s32.totalorder %s133, %s135
      %p139 = scmp.eq.s32.totalorder %s15, 0
      %p140 = por %p138, %p139
      %p141 = scmp.ne.s32.totalorder %s133, %s135
      %p142 = scmp.eq.s32.totalorder %s20, 1
      %p143 = por %p141, %p142
      %p144 = scmp.ne.s32.totalorder %s135, %s136
      %p145 = scmp.eq.s32.totalorder %s20, 0
      %p146 = por %p144, %p145
      %p147 = scmp.ne.s32.totalorder %s135, %s136
      %p148 = scmp.eq.s32.totalorder %s21, 1
      %p149 = por %p147, %p148
      %p151 = scmp.ne.s32.totalorder %s136, %s150
      %p152 = scmp.eq.s32.totalorder %s21, 0
      %p153 = por %p151, %p152
      %s154 = ssub.s32 %s15, %s22
      %p155 = scmp.eq.s32.totalorder %s154, 0
      %s157 = sadd.s32 %s156, 1
      %s158 = scalar_select %p155, %s156, %s157
      %p161 = pneg %p155
      %p162 = scmp.eq.s32.totalorder %s15, 1
      %p163 = por %p161, %p162
      %p164 = scmp.ne.s32.totalorder %s156, %s159
      %p165 = scmp.eq.s32.totalorder %s15, 0
      %p166 = por %p164, %p165
      %p167 = scmp.ne.s32.totalorder %s156, %s159
      %p168 = scmp.eq.s32.totalorder %s20, 1
      %p169 = por %p167, %p168
      %p170 = scmp.ne.s32.totalorder %s159, %s160
      %p171 = scmp.eq.s32.totalorder %s20, 0
      %p172 = por %p170, %p171
      %p173 = scmp.ne.s32.totalorder %s159, %s160
      %p174 = scmp.eq.s32.totalorder %s21, 1
      %p175 = por %p173, %p174
      %p177 = scmp.ne.s32.totalorder %s160, %s176
      %p178 = scmp.eq.s32.totalorder %s21, 0
      %p179 = por %p177, %p178
      %p180 = scmp.le.s32.totalorder 1, %s15
      %p181 = scmp.lt.s32.totalorder %s15, 3
      %p182 = pnand %p180, %p181
      %p183 = pneg %p182
      // Predicated region
      $region9: #{conv_block_forward.1} parent=5 // pred_check
        _
      $region10: #{conv_block_forward.1} parent=5 // pred_check_branch
        %185 = sbr.rel (%p182) target = $region12
      $region11: #{conv_block_forward.1} parent=5 // pred_region
        %s186 = ssub.s32 %s15, 1
        // Predicated region
        $region13: #{conv_block_forward.1} parent=11 // pred_check
          %p187 = pneg %p62
        $region14: #{conv_block_forward.1} parent=11 // pred_check_branch
          %189 = sbr.rel (%p187) target = $region16
        $region15: #{conv_block_forward.1} parent=11 // pred_region
          _
        $region16: #{conv_block_forward.1} parent=11 // pred_fallthru
          _
        // Predicated region
        $region17: #{conv_block_forward.1} parent=11 // pred_check
          %p190 = pneg %p83
        $region18: #{conv_block_forward.1} parent=11 // pred_check_branch
          %192 = sbr.rel (%p190) target = $region20
        $region19: #{conv_block_forward.1} parent=11 // pred_region
          _
        $region20: #{conv_block_forward.1} parent=11 // pred_fallthru
          _
        // Predicated region
        $region21: #{conv_block_forward.1} parent=11 // pred_check
          %p193 = pneg %p104
        $region22: #{conv_block_forward.1} parent=11 // pred_check_branch
          %195 = sbr.rel (%p193) target = $region24
        $region23: #{conv_block_forward.1} parent=11 // pred_region
          _
        $region24: #{conv_block_forward.1} parent=11 // pred_fallthru
          _
        // Predicated region
        $region25: #{conv_block_forward.1} parent=11 // pred_check
          %p196 = pneg %p125
        $region26: #{conv_block_forward.1} parent=11 // pred_check_branch
          %198 = sbr.rel (%p196) target = $region28
        $region27: #{conv_block_forward.1} parent=11 // pred_region
          _
        $region28: #{conv_block_forward.1} parent=11 // pred_fallthru
          _
        // Predicated region
        $region29: #{conv_block_forward.1} parent=11 // pred_check
          %p199 = pneg %p146
        $region30: #{conv_block_forward.1} parent=11 // pred_check_branch
          %201 = sbr.rel (%p199) target = $region32
        $region31: #{conv_block_forward.1} parent=11 // pred_region
          _
        $region32: #{conv_block_forward.1} parent=11 // pred_fallthru
          _
      $region12: #{conv_block_forward.1} parent=5 // pred_fallthru
        _
      %p202 = scmp.lt.s32.totalorder %s15, 2
      // Predicated region
      $region33: #{conv_block_forward.1} parent=5 // pred_check
        %p203 = pneg %p202
      $region34: #{conv_block_forward.1} parent=5 // pred_check_branch
        %205 = sbr.rel (%p203) target = $region36
      $region35: #{conv_block_forward.1} parent=5 // pred_region
        // Predicated region
        $region37: #{conv_block_forward.1} parent=35 // pred_check
          %p206 = pneg %p35
        $region38: #{conv_block_forward.1} parent=35 // pred_check_branch
          %208 = sbr.rel (%p206) target = $region40
        $region39: #{conv_block_forward.1} parent=35 // pred_region
          %p209 = scmp.lt.s32.totalorder %s15, 1
          %s210 = scalar_select %p209, %s15, 1
          %s211 = smul.addr %s210, 32
          %s212 = smul.addr %s211, 4
          %s213 = scalar_lea.vmem %s0, %s212
        $region40: #{conv_block_forward.1} parent=35 // pred_fallthru
          _
      $region36: #{conv_block_forward.1} parent=5 // pred_fallthru
        _
      %p214 = scmp.le.s32.totalorder 1, %s15
      %p215 = scmp.lt.s32.totalorder %s15, 3
      %p216 = pnand %p214, %p215
      %p217 = pneg %p216
      // Predicated region
      $region41: #{conv_block_forward.1} parent=5 // pred_check
        _
      $region42: #{conv_block_forward.1} parent=5 // pred_check_branch
        %219 = sbr.rel (%p216) target = $region44
      $region43: #{conv_block_forward.1} parent=5 // pred_region
        %s220 = ssub.s32 %s15, 1
        %p221 = scmp.lt.s32.totalorder %s20, 1
        %s222 = scalar_select %p221, %s20, 1
        %s223 = smul.addr %s222, 32
        %s224 = smul.addr %s223, 4
        %s225 = scalar_lea.vmem %s0, %s224
        %p226 = pneg %p41
        %p227 = pneg %p38
        %p228 = pneg %p62
        %p229 = pneg %p59
        %p230 = pneg %p83
        %p231 = pneg %p80
        %p232 = pneg %p104
        %p233 = pneg %p101
        %p234 = pneg %p125
        %p235 = pneg %p122
        %p236 = pneg %p146
        %p237 = pneg %p143
        %p238 = pneg %p172
        %p239 = pneg %p169
        %s240 = sand.u32 %s159, 1
        %s241 = scalar_lea.sflag [#allocation3], %s240
        %s242 = sand.u32 %s159, 1
        %s243 = smul.addr %s242, 128
        %s244 = scalar_lea.vmem [#allocation2], %s243
        %p245 = scmp.lt.s32.totalorder %s20, 1
        %s246 = scalar_select %p245, %s20, 1
        %s247 = smul.addr %s246, 32
        %s248 = smul.addr %s247, 4
        %s249 = scalar_lea.vmem %s0, %s248
        %v251 = vld [vmem:[%s249] sm:$0xf]
        %v252 = vld [vmem:[%s249 + $0x4] sm:$0xf]
        %v253 = vld [vmem:[%s249 + $0x8] sm:$0xf]
        %v254 = vld [vmem:[%s249 + $0xc] sm:$0xf]
        %v255 = vld [vmem:[%s249 + $0x10] sm:$0xf]
        %v256 = vld [vmem:[%s249 + $0x14] sm:$0xf]
        %v257 = vld [vmem:[%s249 + $0x18] sm:$0xf]
        %v258 = vld [vmem:[%s249 + $0x1c] sm:$0xf]
        %v259 = vld [vmem:[%s249 + $0x20] sm:$0xf]
        %v260 = vld [vmem:[%s249 + $0x24] sm:$0xf]
        %v261 = vld [vmem:[%s249 + $0x28] sm:$0xf]
        %v262 = vld [vmem:[%s249 + $0x2c] sm:$0xf]
        %v263 = vld [vmem:[%s249 + $0x30] sm:$0xf]
        %v264 = vld [vmem:[%s249 + $0x34] sm:$0xf]
        %v265 = vld [vmem:[%s249 + $0x38] sm:$0xf]
        %v266 = vld [vmem:[%s249 + $0x3c] sm:$0xf]
        %v267 = vld [vmem:[%s249 + $0x40] sm:$0xf]
        %v268 = vld [vmem:[%s249 + $0x44] sm:$0xf]
        %v269 = vld [vmem:[%s249 + $0x48] sm:$0xf]
        %v270 = vld [vmem:[%s249 + $0x4c] sm:$0xf]
        %v271 = vld [vmem:[%s249 + $0x50] sm:$0xf]
        %v272 = vld [vmem:[%s249 + $0x54] sm:$0xf]
        %v273 = vld [vmem:[%s249 + $0x58] sm:$0xf]
        %v274 = vld [vmem:[%s249 + $0x5c] sm:$0xf]
        %v275 = vld [vmem:[%s249 + $0x60] sm:$0xf]
        %v276 = vld [vmem:[%s249 + $0x64] sm:$0xf]
        %v277 = vld [vmem:[%s249 + $0x68] sm:$0xf]
        %v278 = vld [vmem:[%s249 + $0x6c] sm:$0xf]
        %v279 = vld [vmem:[%s249 + $0x70] sm:$0xf]
        %v280 = vld [vmem:[%s249 + $0x74] sm:$0xf]
        %v281 = vld [vmem:[%s249 + $0x78] sm:$0xf]
        %v282 = vld [vmem:[%s249 + $0x7c] sm:$0xf]
        %v283 = vld [vmem:[%s5] sm:$0xff]
        %v284 = vld [vmem:[%s5 + $0x8] sm:$0xff]
        %v285 = vld [vmem:[%s5 + $0x10] sm:$0xff]
        %v286 = vld [vmem:[%s5 + $0x18] sm:$0xff]
        %v287 = vld [vmem:[%s4] sm:$0xff]
        %v320 = vunpack.c.l.b16 %v251
        %v321 = vunpack.c.l.b16 %v252
        %v322 = vunpack.c.l.b16 %v253
        %v323 = vunpack.c.l.b16 %v254
        %v324 = vunpack.c.l.b16 %v255
        %v325 = vunpack.c.l.b16 %v256
        %v326 = vunpack.c.l.b16 %v257
        %v327 = vunpack.c.l.b16 %v258
        %v328 = vunpack.c.l.b16 %v259
        %v329 = vunpack.c.l.b16 %v260
        %v330 = vunpack.c.l.b16 %v261
        %v331 = vunpack.c.l.b16 %v262
        %v332 = vunpack.c.l.b16 %v263
        %v333 = vunpack.c.l.b16 %v264
        %v334 = vunpack.c.l.b16 %v265
        %v335 = vunpack.c.l.b16 %v266
        %v336 = vunpack.c.l.b16 %v267
        %v337 = vunpack.c.l.b16 %v268
        %v338 = vunpack.c.l.b16 %v269
        %v339 = vunpack.c.l.b16 %v270
        %v340 = vunpack.c.l.b16 %v271
        %v341 = vunpack.c.l.b16 %v272
        %v342 = vunpack.c.l.b16 %v273
        %v343 = vunpack.c.l.b16 %v274
        %v344 = vunpack.c.l.b16 %v275
        %v345 = vunpack.c.l.b16 %v276
        %v346 = vunpack.c.l.b16 %v277
        %v347 = vunpack.c.l.b16 %v278
        %v348 = vunpack.c.l.b16 %v279
        %v349 = vunpack.c.l.b16 %v280
        %v350 = vunpack.c.l.b16 %v281
        %v351 = vunpack.c.l.b16 %v282
        %v352 = vpack.c.b16 %v321, %v320
        %v353 = vpack.c.b16 %v323, %v322
        %v354 = vpack.c.b16 %v325, %v324
        %v355 = vpack.c.b16 %v327, %v326
        %v356 = vpack.c.b16 %v329, %v328
        %v357 = vpack.c.b16 %v331, %v330
        %v358 = vpack.c.b16 %v333, %v332
        %v359 = vpack.c.b16 %v335, %v334
        %v360 = vpack.c.b16 %v337, %v336
        %v361 = vpack.c.b16 %v339, %v338
        %v362 = vpack.c.b16 %v341, %v340
        %v363 = vpack.c.b16 %v343, %v342
        %v364 = vpack.c.b16 %v345, %v344
        %v365 = vpack.c.b16 %v347, %v346
        %v366 = vpack.c.b16 %v349, %v348
        %v367 = vpack.c.b16 %v351, %v350
        %v369 = vshrl.u32 %v352, 16
        %v371 = vrot.slane %v369, 7
        %v372 = vshll.u32 %v352, 16
        %v374 = vor.u32 %v371, %v372
        %v376 = vshrl.u32 %v353, 16
        %v378 = vrot.slane %v376, 7
        %v379 = vshll.u32 %v353, 16
        %v381 = vor.u32 %v378, %v379
        %v383 = vshrl.u32 %v354, 16
        %v385 = vrot.slane %v383, 7
        %v386 = vshll.u32 %v354, 16
        %v388 = vor.u32 %v385, %v386
        %v390 = vshrl.u32 %v355, 16
        %v392 = vrot.slane %v390, 7
        %v393 = vshll.u32 %v355, 16
        %v395 = vor.u32 %v392, %v393
        %v397 = vshrl.u32 %v356, 16
        %v399 = vrot.slane %v397, 7
        %v400 = vshll.u32 %v356, 16
        %v402 = vor.u32 %v399, %v400
        %v404 = vshrl.u32 %v357, 16
        %v406 = vrot.slane %v404, 7
        %v407 = vshll.u32 %v357, 16
        %v409 = vor.u32 %v406, %v407
        %v411 = vshrl.u32 %v358, 16
        %v413 = vrot.slane %v411, 7
        %v414 = vshll.u32 %v358, 16
        %v416 = vor.u32 %v413, %v414
        %v418 = vshrl.u32 %v359, 16
        %v420 = vrot.slane %v418, 7
        %v421 = vshll.u32 %v359, 16
        %v423 = vor.u32 %v420, %v421
        %v425 = vshrl.u32 %v360, 16
        %v427 = vrot.slane %v425, 7
        %v428 = vshll.u32 %v360, 16
        %v430 = vor.u32 %v427, %v428
        %v432 = vshrl.u32 %v361, 16
        %v434 = vrot.slane %v432, 7
        %v435 = vshll.u32 %v361, 16
        %v437 = vor.u32 %v434, %v435
        %v439 = vshrl.u32 %v362, 16
        %v441 = vrot.slane %v439, 7
        %v442 = vshll.u32 %v362, 16
        %v444 = vor.u32 %v441, %v442
        %v446 = vshrl.u32 %v363, 16
        %v448 = vrot.slane %v446, 7
        %v449 = vshll.u32 %v363, 16
        %v451 = vor.u32 %v448, %v449
        %v453 = vshrl.u32 %v364, 16
        %v455 = vrot.slane %v453, 7
        %v456 = vshll.u32 %v364, 16
        %v458 = vor.u32 %v455, %v456
        %v460 = vshrl.u32 %v365, 16
        %v462 = vrot.slane %v460, 7
        %v463 = vshll.u32 %v365, 16
        %v465 = vor.u32 %v462, %v463
        %v467 = vshrl.u32 %v366, 16
        %v469 = vrot.slane %v467, 7
        %v470 = vshll.u32 %v366, 16
        %v472 = vor.u32 %v469, %v470
        %v474 = vshrl.u32 %v367, 16
        %v476 = vrot.slane %v474, 7
        %v477 = vshll.u32 %v367, 16
        %v479 = vor.u32 %v476, %v477
        %vm496 = vcmask 1040384
        %vm497 = vsmask.f32 256
        %vm498 = vmand %vm496, %vm497
        %v499 = vsel %vm498, 0, %v374
        %v500 = vsel %vm498, 0, %v381
        %v501 = vsel %vm498, 0, %v388
        %v502 = vsel %vm498, 0, %v395
        %v503 = vsel %vm498, 0, %v402
        %v504 = vsel %vm498, 0, %v409
        %v505 = vsel %vm498, 0, %v416
        %v506 = vsel %vm498, 0, %v423
        %v507 = vsel %vm498, 0, %v430
        %v508 = vsel %vm498, 0, %v437
        %v509 = vsel %vm498, 0, %v444
        %v510 = vsel %vm498, 0, %v451
        %v511 = vsel %vm498, 0, %v458
        %v512 = vsel %vm498, 0, %v465
        %v513 = vsel %vm498, 0, %v472
        %v514 = vsel %vm498, 0, %v479
        %v515 = vrot.slane %v372, 1
        %v516 = vor.u32 %v369, %v515
        %v517 = vrot.slane %v379, 1
        %v518 = vor.u32 %v376, %v517
        %v519 = vrot.slane %v386, 1
        %v520 = vor.u32 %v383, %v519
        %v521 = vrot.slane %v393, 1
        %v522 = vor.u32 %v390, %v521
        %v523 = vrot.slane %v400, 1
        %v524 = vor.u32 %v397, %v523
        %v525 = vrot.slane %v407, 1
        %v526 = vor.u32 %v404, %v525
        %v527 = vrot.slane %v414, 1
        %v528 = vor.u32 %v411, %v527
        %v529 = vrot.slane %v421, 1
        %v530 = vor.u32 %v418, %v529
        %v531 = vrot.slane %v428, 1
        %v532 = vor.u32 %v425, %v531
        %v533 = vrot.slane %v435, 1
        %v534 = vor.u32 %v432, %v533
        %v535 = vrot.slane %v442, 1
        %v536 = vor.u32 %v439, %v535
        %v537 = vrot.slane %v449, 1
        %v538 = vor.u32 %v446, %v537
        %v539 = vrot.slane %v456, 1
        %v540 = vor.u32 %v453, %v539
        %v541 = vrot.slane %v463, 1
        %v542 = vor.u32 %v460, %v541
        %v543 = vrot.slane %v470, 1
        %v544 = vor.u32 %v467, %v543
        %v545 = vrot.slane %v477, 1
        %v546 = vor.u32 %v474, %v545
        %vm563 = vcmask 1047552
        %vm564 = vsmask.f32 7424
        %vm565 = vmand %vm563, %vm564
        %v566 = vsel %vm565, %v516, 0
        %v567 = vsel %vm565, %v518, 0
        %v568 = vsel %vm565, %v520, 0
        %v569 = vsel %vm565, %v522, 0
        %v570 = vsel %vm565, %v524, 0
        %v571 = vsel %vm565, %v526, 0
        %v572 = vsel %vm565, %v528, 0
        %v573 = vsel %vm565, %v530, 0
        %v574 = vsel %vm565, %v532, 0
        %v575 = vsel %vm565, %v534, 0
        %v576 = vsel %vm565, %v536, 0
        %v577 = vsel %vm565, %v538, 0
        %v578 = vsel %vm565, %v540, 0
        %v579 = vsel %vm565, %v542, 0
        %v580 = vsel %vm565, %v544, 0
        %v581 = vsel %vm565, %v546, 0
        %582 = vrot.lane.b32.xlu0 %v352, 16
        %v583 = vpop.permute.xlu0 %582
        %584 = vrot.lane.b32.xlu0 %v353, 16
        %v585 = vpop.permute.xlu0 %584
        %586 = vrot.lane.b32.xlu0 %v354, 16
        %v587 = vpop.permute.xlu0 %586
        %588 = vrot.lane.b32.xlu0 %v355, 16
        %v589 = vpop.permute.xlu0 %588
        %590 = vrot.lane.b32.xlu0 %v356, 16
        %v591 = vpop.permute.xlu0 %590
        %592 = vrot.lane.b32.xlu0 %v357, 16
        %v593 = vpop.permute.xlu0 %592
        %594 = vrot.lane.b32.xlu0 %v358, 16
        %v595 = vpop.permute.xlu0 %594
        %596 = vrot.lane.b32.xlu0 %v359, 16
        %v597 = vpop.permute.xlu0 %596
        %598 = vrot.lane.b32.xlu0 %v360, 16
        %v599 = vpop.permute.xlu0 %598
        %600 = vrot.lane.b32.xlu0 %v361, 16
        %v601 = vpop.permute.xlu0 %600
        %602 = vrot.lane.b32.xlu0 %v362, 16
        %v603 = vpop.permute.xlu0 %602
        %604 = vrot.lane.b32.xlu0 %v363, 16
        %v605 = vpop.permute.xlu0 %604
        %606 = vrot.lane.b32.xlu0 %v364, 16
        %v607 = vpop.permute.xlu0 %606
        %608 = vrot.lane.b32.xlu0 %v365, 16
        %v609 = vpop.permute.xlu0 %608
        %610 = vrot.lane.b32.xlu0 %v366, 16
        %v611 = vpop.permute.xlu0 %610
        %612 = vrot.lane.b32.xlu0 %v367, 16
        %v613 = vpop.permute.xlu0 %612
        %630 = vrot.lane.b32.xlu0 %v566, 32
        %v631 = vpop.permute.xlu0 %630
        %632 = vrot.lane.b32.xlu0 %v567, 32
        %v633 = vpop.permute.xlu0 %632
        %634 = vrot.lane.b32.xlu0 %v568, 32
        %v635 = vpop.permute.xlu0 %634
        %636 = vrot.lane.b32.xlu0 %v569, 32
        %v637 = vpop.permute.xlu0 %636
        %638 = vrot.lane.b32.xlu0 %v570, 32
        %v639 = vpop.permute.xlu0 %638
        %640 = vrot.lane.b32.xlu0 %v571, 32
        %v641 = vpop.permute.xlu0 %640
        %642 = vrot.lane.b32.xlu0 %v572, 32
        %v643 = vpop.permute.xlu0 %642
        %644 = vrot.lane.b32.xlu0 %v573, 32
        %v645 = vpop.permute.xlu0 %644
        %646 = vrot.lane.b32.xlu0 %v574, 32
        %v647 = vpop.permute.xlu0 %646
        %648 = vrot.lane.b32.xlu0 %v575, 32
        %v649 = vpop.permute.xlu0 %648
        %650 = vrot.lane.b32.xlu0 %v576, 32
        %v651 = vpop.permute.xlu0 %650
        %652 = vrot.lane.b32.xlu0 %v577, 32
        %v653 = vpop.permute.xlu0 %652
        %654 = vrot.lane.b32.xlu0 %v578, 32
        %v655 = vpop.permute.xlu0 %654
        %656 = vrot.lane.b32.xlu0 %v579, 32
        %v657 = vpop.permute.xlu0 %656
        %658 = vrot.lane.b32.xlu0 %v580, 32
        %v659 = vpop.permute.xlu0 %658
        %660 = vrot.lane.b32.xlu0 %v581, 32
        %v661 = vpop.permute.xlu0 %660
        %vm662 = vcmask 130048
        %v665 = vsel %vm662, %v499, %v583
        %v668 = vsel %vm662, %v500, %v585
        %v671 = vsel %vm662, %v501, %v587
        %v674 = vsel %vm662, %v502, %v589
        %v677 = vsel %vm662, %v503, %v591
        %v680 = vsel %vm662, %v504, %v593
        %v683 = vsel %vm662, %v505, %v595
        %v686 = vsel %vm662, %v506, %v597
        %v689 = vsel %vm662, %v507, %v599
        %v692 = vsel %vm662, %v508, %v601
        %v695 = vsel %vm662, %v509, %v603
        %v698 = vsel %vm662, %v510, %v605
        %v701 = vsel %vm662, %v511, %v607
        %v704 = vsel %vm662, %v512, %v609
        %v707 = vsel %vm662, %v513, %v611
        %v710 = vsel %vm662, %v514, %v613
        %vm711 = vcmask 261120
        %v713 = vsel %vm711, %v665, %v631
        %v715 = vsel %vm711, %v668, %v633
        %v717 = vsel %vm711, %v671, %v635
        %v719 = vsel %vm711, %v674, %v637
        %v721 = vsel %vm711, %v677, %v639
        %v723 = vsel %vm711, %v680, %v641
        %v725 = vsel %vm711, %v683, %v643
        %v727 = vsel %vm711, %v686, %v645
        %v729 = vsel %vm711, %v689, %v647
        %v731 = vsel %vm711, %v692, %v649
        %v733 = vsel %vm711, %v695, %v651
        %v735 = vsel %vm711, %v698, %v653
        %v737 = vsel %vm711, %v701, %v655
        %v739 = vsel %vm711, %v704, %v657
        %v741 = vsel %vm711, %v707, %v659
        %v743 = vsel %vm711, %v710, %v661
        %v744 = vld [vmem:[%s1] sm:$0xf]
        %v745 = vld [vmem:[%s1 + $0x4] sm:$0xf]
        %v746 = vld [vmem:[%s1 + $0x8] sm:$0xf]
        %v747 = vld [vmem:[%s1 + $0xc] sm:$0xf]
        %v748 = vld [vmem:[%s1 + $0x10] sm:$0xf]
        %v749 = vld [vmem:[%s1 + $0x14] sm:$0xf]
        %v756 = vunpack.c.l.b16 %v744
        %v757 = vunpack.c.l.b16 %v745
        %v758 = vunpack.c.l.b16 %v746
        %v759 = vunpack.c.l.b16 %v747
        %v760 = vunpack.c.l.b16 %v748
        %v761 = vunpack.c.l.b16 %v749
        %v762 = vpack.c.b16 %v757, %v756
        %v763 = vpack.c.b16 %v759, %v758
        %v764 = vpack.c.b16 %v761, %v760
        %vm768 = vcmask 392192
        %v769 = vsel %vm768, %v713, 0
        %v771 = vsel %vm768, %v715, 0
        %v773 = vsel %vm768, %v717, 0
        %v775 = vsel %vm768, %v719, 0
        %v777 = vsel %vm768, %v721, 0
        %v779 = vsel %vm768, %v723, 0
        %v781 = vsel %vm768, %v725, 0
        %v783 = vsel %vm768, %v727, 0
        %v785 = vsel %vm768, %v729, 0
        %v787 = vsel %vm768, %v731, 0
        %v789 = vsel %vm768, %v733, 0
        %v791 = vsel %vm768, %v735, 0
        %v793 = vsel %vm768, %v737, 0
        %v795 = vsel %vm768, %v739, 0
        %v797 = vsel %vm768, %v741, 0
        %v799 = vsel %vm768, %v743, 0
        %801 = vmatprep.subr.bf16.mxu0 0
        %802 = vmatpush1.bf16.msra.mxu0 %v762
        %803 = vmatprep.subr.bf16.mxu0 0
        %804 = vmatpush1.bf16.msra.mxu0 %v763
        %805 = vmatprep.subr.bf16.mxu0 0
        %806 = vmatpush1.bf16.msra.mxu0 %v764
        %807 = vmatprep.subr.bf16.mxu0 0
        %808 = vmatpush1.bf16.msra.mxu0 0
        %809 = vmatprep.subr.bf16.mxu0 0
        %810 = vmatpush1.bf16.msra.mxu0 0
        %811 = vmatprep.subr.bf16.mxu0 0
        %812 = vmatpush1.bf16.msra.mxu0 0
        %813 = vmatprep.subr.bf16.mxu0 0
        %814 = vmatpush1.bf16.msra.mxu0 0
        %815 = vmatprep.subr.bf16.mxu0 0
        %816 = vmatpush1.bf16.msra.mxu0 0
        %817 = vmatprep.subr.bf16.mxu0 0
        %818 = vmatpush1.bf16.msra.mxu0 0
        %819 = vmatprep.subr.bf16.mxu0 0
        %820 = vmatpush1.bf16.msra.mxu0 0
        %821 = vmatprep.subr.bf16.mxu0 0
        %822 = vmatpush1.bf16.msra.mxu0 0
        %823 = vmatprep.subr.bf16.mxu0 0
        %824 = vmatpush1.bf16.msra.mxu0 0
        %825 = vmatprep.subr.bf16.mxu0 0
        %826 = vmatpush1.bf16.msra.mxu0 0
        %827 = vmatprep.subr.bf16.mxu0 0
        %828 = vmatpush1.bf16.msra.mxu0 0
        %829 = vmatprep.subr.bf16.mxu0 0
        %830 = vmatpush1.bf16.msra.mxu0 0
        %831 = vmatprep.subr.bf16.mxu0 0
        %832 = vmatpush1.bf16.msra.mxu0 0
        %833 = vmatprep.mubr.bf16.mxu0 0
        %834 = vmatmul.mubr.bf16.gmra.mrb[0].mxu0 %v769
        %v835 = vpop.f32.mrb[0].mxu0
        %v836 = vadd.f32 0.0, %v835
        %v837 = vpop.f32.mrb[0].mxu0
        %v838 = vpop.f32.mrb[0].mxu0
        %v839 = vadd.f32 0.0, %v838
        %v840 = vpop.f32.mrb[0].mxu0
        %841 = vmatprep.mubr.bf16.mxu0 0
        %842 = vmatmul.mubr.bf16.gmra.mrb[0].mxu0 %v771
        %v843 = vpop.f32.mrb[0].mxu0
        %v844 = vadd.f32 0.0, %v843
        %v845 = vpop.f32.mrb[0].mxu0
        %v846 = vpop.f32.mrb[0].mxu0
        %v847 = vadd.f32 0.0, %v846
        %v848 = vpop.f32.mrb[0].mxu0
        %849 = vmatprep.mubr.bf16.mxu0 0
        %850 = vmatmul.mubr.bf16.gmra.mrb[0].mxu0 %v773
        %v851 = vpop.f32.mrb[0].mxu0
        %v852 = vadd.f32 0.0, %v851
        %v853 = vpop.f32.mrb[0].mxu0
        %v854 = vpop.f32.mrb[0].mxu0
        %v855 = vadd.f32 0.0, %v854
        %v856 = vpop.f32.mrb[0].mxu0
        %857 = vmatprep.mubr.bf16.mxu0 0
        %858 = vmatmul.mubr.bf16.gmra.mrb[0].mxu0 %v775
        %v859 = vpop.f32.mrb[0].mxu0
        %v860 = vadd.f32 0.0, %v859
        %v861 = vpop.f32.mrb[0].mxu0
        %v862 = vpop.f32.mrb[0].mxu0
        %v863 = vadd.f32 0.0, %v862
        %v864 = vpop.f32.mrb[0].mxu0
        %865 = vmatprep.mubr.bf16.mxu0 0
        %866 = vmatmul.mubr.bf16.gmra.mrb[0].mxu0 %v777
        %v867 = vpop.f32.mrb[0].mxu0
        %v868 = vadd.f32 0.0, %v867
        %v869 = vpop.f32.mrb[0].mxu0
        %v870 = vpop.f32.mrb[0].mxu0
        %v871 = vadd.f32 0.0, %v870
        %v872 = vpop.f32.mrb[0].mxu0
        %873 = vmatprep.mubr.bf16.mxu0 0
        %874 = vmatmul.mubr.bf16.gmra.mrb[0].mxu0 %v779
        %v875 = vpop.f32.mrb[0].mxu0
        %v876 = vadd.f32 0.0, %v875
        %v877 = vpop.f32.mrb[0].mxu0
        %v878 = vpop.f32.mrb[0].mxu0
        %v879 = vadd.f32 0.0, %v878
        %v880 = vpop.f32.mrb[0].mxu0
        %881 = vmatprep.mubr.bf16.mxu0 0
        %882 = vmatmul.mubr.bf16.gmra.mrb[0].mxu0 %v781
        %v883 = vpop.f32.mrb[0].mxu0
        %v884 = vadd.f32 0.0, %v883
        %v885 = vpop.f32.mrb[0].mxu0
        %v886 = vpop.f32.mrb[0].mxu0
        %v887 = vadd.f32 0.0, %v886
        %v888 = vpop.f32.mrb[0].mxu0
        %889 = vmatprep.mubr.bf16.mxu0 0
        %890 = vmatmul.mubr.bf16.gmra.mrb[0].mxu0 %v783
        %v891 = vpop.f32.mrb[0].mxu0
        %v892 = vadd.f32 0.0, %v891
        %v893 = vpop.f32.mrb[0].mxu0
        %v894 = vpop.f32.mrb[0].mxu0
        %v895 = vadd.f32 0.0, %v894
        %v896 = vpop.f32.mrb[0].mxu0
        %897 = vmatprep.mubr.bf16.mxu0 0
        %898 = vmatmul.mubr.bf16.gmra.mrb[0].mxu0 %v785
        %v899 = vpop.f32.mrb[0].mxu0
        %v900 = vadd.f32 0.0, %v899
        %v901 = vpop.f32.mrb[0].mxu0
        %v902 = vpop.f32.mrb[0].mxu0
        %v903 = vadd.f32 0.0, %v902
        %v904 = vpop.f32.mrb[0].mxu0
        %905 = vmatprep.mubr.bf16.mxu0 0
        %906 = vmatmul.mubr.bf16.gmra.mrb[0].mxu0 %v787
        %v907 = vpop.f32.mrb[0].mxu0
        %v908 = vadd.f32 0.0, %v907
        %v909 = vpop.f32.mrb[0].mxu0
        %v910 = vpop.f32.mrb[0].mxu0
        %v911 = vadd.f32 0.0, %v910
        %v912 = vpop.f32.mrb[0].mxu0
        %913 = vmatprep.mubr.bf16.mxu0 0
        %914 = vmatmul.mubr.bf16.gmra.mrb[0].mxu0 %v789
        %v915 = vpop.f32.mrb[0].mxu0
        %v916 = vadd.f32 0.0, %v915
        %v917 = vpop.f32.mrb[0].mxu0
        %v918 = vpop.f32.mrb[0].mxu0
        %v919 = vadd.f32 0.0, %v918
        %v920 = vpop.f32.mrb[0].mxu0
        %921 = vmatprep.mubr.bf16.mxu0 0
        %922 = vmatmul.mubr.bf16.gmra.mrb[0].mxu0 %v791
        %v923 = vpop.f32.mrb[0].mxu0
        %v924 = vadd.f32 0.0, %v923
        %v925 = vpop.f32.mrb[0].mxu0
        %v926 = vpop.f32.mrb[0].mxu0
        %v927 = vadd.f32 0.0, %v926
        %v928 = vpop.f32.mrb[0].mxu0
        %929 = vmatprep.mubr.bf16.mxu0 0
        %930 = vmatmul.mubr.bf16.gmra.mrb[0].mxu0 %v793
        %v931 = vpop.f32.mrb[0].mxu0
        %v932 = vadd.f32 0.0, %v931
        %v933 = vpop.f32.mrb[0].mxu0
        %v934 = vpop.f32.mrb[0].mxu0
        %v935 = vadd.f32 0.0, %v934
        %v936 = vpop.f32.mrb[0].mxu0
        %937 = vmatprep.mubr.bf16.mxu0 0
        %938 = vmatmul.mubr.bf16.gmra.mrb[0].mxu0 %v795
        %v939 = vpop.f32.mrb[0].mxu0
        %v940 = vadd.f32 0.0, %v939
        %v941 = vpop.f32.mrb[0].mxu0
        %v942 = vpop.f32.mrb[0].mxu0
        %v943 = vadd.f32 0.0, %v942
        %v944 = vpop.f32.mrb[0].mxu0
        %945 = vmatprep.mubr.bf16.mxu0 0
        %946 = vmatmul.mubr.bf16.gmra.mrb[0].mxu0 %v797
        %v947 = vpop.f32.mrb[0].mxu0
        %v948 = vadd.f32 0.0, %v947
        %v949 = vpop.f32.mrb[0].mxu0
        %v950 = vpop.f32.mrb[0].mxu0
        %v951 = vadd.f32 0.0, %v950
        %v952 = vpop.f32.mrb[0].mxu0
        %953 = vmatprep.mubr.bf16.mxu0 0
        %954 = vmatmul.mubr.bf16.gmra.mrb[0].mxu0 %v799
        %v955 = vpop.f32.mrb[0].mxu0
        %v956 = vpop.f32.mrb[0].mxu0
        %v957 = vpop.f32.mrb[0].mxu0
        %v958 = vpop.f32.mrb[0].mxu0
        %959 = vdwg.mxu0
        %s960 = scalar_lea.vmem %s1, 24
        %v961 = vld [vmem:[%s960] sm:$0xf]
        %v962 = vld [vmem:[%s960 + $0x4] sm:$0xf]
        %v963 = vld [vmem:[%s960 + $0x8] sm:$0xf]
        %v964 = vld [vmem:[%s960 + $0xc] sm:$0xf]
        %v965 = vld [vmem:[%s960 + $0x10] sm:$0xf]
        %v966 = vld [vmem:[%s960 + $0x14] sm:$0xf]
        %s967 = scalar_lea.vmem %s1, 48
        %v968 = vld [vmem:[%s967] sm:$0xf]
        %v969 = vld [vmem:[%s967 + $0x4] sm:$0xf]
        %v970 = vld [vmem:[%s967 + $0x8] sm:$0xf]
        %v971 = vld [vmem:[%s967 + $0xc] sm:$0xf]
        %v972 = vld [vmem:[%s967 + $0x10] sm:$0xf]
        %v973 = vld [vmem:[%s967 + $0x14] sm:$0xf]
        %v980 = vunpack.c.l.b16 %v968
        %v981 = vunpack.c.l.b16 %v969
        %v982 = vunpack.c.l.b16 %v970
        %v983 = vunpack.c.l.b16 %v971
        %v984 = vunpack.c.l.b16 %v972
        %v985 = vunpack.c.l.b16 %v973
        %v986 = vpack.c.b16 %v981, %v980
        %v987 = vpack.c.b16 %v983, %v982
        %v988 = vpack.c.b16 %v985, %v984
        %992 = vmatprep.subr.bf16.mxu0 0
        %993 = vmatpush1.bf16.msra.mxu0 %v986
        %994 = vmatprep.subr.bf16.mxu0 0
        %995 = vmatpush1.bf16.msra.mxu0 %v987
        %996 = vmatprep.subr.bf16.mxu0 0
        %997 = vmatpush1.bf16.msra.mxu0 %v988
        %998 = vmatprep.subr.bf16.mxu0 0
        %999 = vmatpush1.bf16.msra.mxu0 0
        %1000 = vmatprep.subr.bf16.mxu0 0
        %1001 = vmatpush1.bf16.msra.mxu0 0
        %1002 = vmatprep.subr.bf16.mxu0 0
        %1003 = vmatpush1.bf16.msra.mxu0 0
        %1004 = vmatprep.subr.bf16.mxu0 0
        %1005 = vmatpush1.bf16.msra.mxu0 0
        %1006 = vmatprep.subr.bf16.mxu0 0
        %1007 = vmatpush1.bf16.msra.mxu0 0
        %1008 = vmatprep.subr.bf16.mxu0 0
        %1009 = vmatpush1.bf16.msra.mxu0 0
        %1010 = vmatprep.subr.bf16.mxu0 0
        %1011 = vmatpush1.bf16.msra.mxu0 0
        %1012 = vmatprep.subr.bf16.mxu0 0
        %1013 = vmatpush1.bf16.msra.mxu0 0
        %1014 = vmatprep.subr.bf16.mxu0 0
        %1015 = vmatpush1.bf16.msra.mxu0 0
        %1016 = vmatprep.subr.bf16.mxu0 0
        %1017 = vmatpush1.bf16.msra.mxu0 0
        %1018 = vmatprep.subr.bf16.mxu0 0
        %1019 = vmatpush1.bf16.msra.mxu0 0
        %1020 = vmatprep.subr.bf16.mxu0 0
        %1021 = vmatpush1.bf16.msra.mxu0 0
        %1022 = vmatprep.subr.bf16.mxu0 0
        %1023 = vmatpush1.bf16.msra.mxu0 0
        %1024 = vmatprep.mubr.bf16.mxu0 0
        %1025 = vmatmul.mubr.bf16.gmra.mrb[0].mxu0 %v769
        %v1026 = vpop.f32.mrb[0].mxu0
        %v1027 = vpop.f32.mrb[0].mxu0
        %v1028 = vpop.f32.mrb[0].mxu0
        %v1029 = vpop.f32.mrb[0].mxu0
        %1030 = vmatprep.mubr.bf16.mxu0 0
        %1031 = vmatmul.mubr.bf16.gmra.mrb[0].mxu0 %v771
        %v1032 = vpop.f32.mrb[0].mxu0
        %v1033 = vadd.f32 0.0, %v1032
        %v1034 = vpop.f32.mrb[0].mxu0
        %v1035 = vpop.f32.mrb[0].mxu0
        %v1036 = vadd.f32 0.0, %v1035
        %v1037 = vpop.f32.mrb[0].mxu0
        %1038 = vmatprep.mubr.bf16.mxu0 0
        %1039 = vmatmul.mubr.bf16.gmra.mrb[0].mxu0 %v773
        %v1040 = vpop.f32.mrb[0].mxu0
        %v1041 = vadd.f32 0.0, %v1040
        %v1042 = vpop.f32.mrb[0].mxu0
        %v1043 = vpop.f32.mrb[0].mxu0
        %v1044 = vadd.f32 0.0, %v1043
        %v1045 = vpop.f32.mrb[0].mxu0
        %1046 = vmatprep.mubr.bf16.mxu0 0
        %1047 = vmatmul.mubr.bf16.gmra.mrb[0].mxu0 %v775
        %v1048 = vpop.f32.mrb[0].mxu0
        %v1049 = vadd.f32 0.0, %v1048
        %v1050 = vpop.f32.mrb[0].mxu0
        %v1051 = vpop.f32.mrb[0].mxu0
        %v1052 = vadd.f32 0.0, %v1051
        %v1053 = vpop.f32.mrb[0].mxu0
        %1054 = vmatprep.mubr.bf16.mxu0 0
        %1055 = vmatmul.mubr.bf16.gmra.mrb[0].mxu0 %v777
        %v1056 = vpop.f32.mrb[0].mxu0
        %v1057 = vadd.f32 0.0, %v1056
        %v1058 = vpop.f32.mrb[0].mxu0
        %v1059 = vpop.f32.mrb[0].mxu0
        %v1060 = vadd.f32 0.0, %v1059
        %v1061 = vpop.f32.mrb[0].mxu0
        %1062 = vmatprep.mubr.bf16.mxu0 0
        %1063 = vmatmul.mubr.bf16.gmra.mrb[0].mxu0 %v779
        %v1064 = vpop.f32.mrb[0].mxu0
        %v1065 = vadd.f32 0.0, %v1064
        %v1066 = vpop.f32.mrb[0].mxu0
        %v1067 = vpop.f32.mrb[0].mxu0
        %v1068 = vadd.f32 0.0, %v1067
        %v1069 = vpop.f32.mrb[0].mxu0
        %1070 = vmatprep.mubr.bf16.mxu0 0
        %1071 = vmatmul.mubr.bf16.gmra.mrb[0].mxu0 %v781
        %v1072 = vpop.f32.mrb[0].mxu0
        %v1073 = vadd.f32 0.0, %v1072
        %v1074 = vpop.f32.mrb[0].mxu0
        %v1075 = vpop.f32.mrb[0].mxu0
        %v1076 = vadd.f32 0.0, %v1075
        %v1077 = vpop.f32.mrb[0].mxu0
        %1078 = vmatprep.mubr.bf16.mxu0 0
        %1079 = vmatmul.mubr.bf16.gmra.mrb[0].mxu0 %v783
        %v1080 = vpop.f32.mrb[0].mxu0
        %v1081 = vadd.f32 0.0, %v1080
        %v1082 = vpop.f32.mrb[0].mxu0
        %v1083 = vpop.f32.mrb[0].mxu0
        %v1084 = vadd.f32 0.0, %v1083
        %v1085 = vpop.f32.mrb[0].mxu0
        %1086 = vmatprep.mubr.bf16.mxu0 0
        %1087 = vmatmul.mubr.bf16.gmra.mrb[0].mxu0 %v785
        %v1088 = vpop.f32.mrb[0].mxu0
        %v1089 = vadd.f32 0.0, %v1088
        %v1090 = vpop.f32.mrb[0].mxu0
        %v1091 = vpop.f32.mrb[0].mxu0
        %v1092 = vadd.f32 0.0, %v1091
        %v1093 = vpop.f32.mrb[0].mxu0
        %1094 = vmatprep.mubr.bf16.mxu0 0
        %1095 = vmatmul.mubr.bf16.gmra.mrb[0].mxu0 %v787
        %v1096 = vpop.f32.mrb[0].mxu0
        %v1097 = vadd.f32 0.0, %v1096
        %v1098 = vpop.f32.mrb[0].mxu0
        %v1099 = vpop.f32.mrb[0].mxu0
        %v1100 = vadd.f32 0.0, %v1099
        %v1101 = vpop.f32.mrb[0].mxu0
        %1102 = vmatprep.mubr.bf16.mxu0 0
        %1103 = vmatmul.mubr.bf16.gmra.mrb[0].mxu0 %v789
        %v1104 = vpop.f32.mrb[0].mxu0
        %v1105 = vadd.f32 0.0, %v1104
        %v1106 = vpop.f32.mrb[0].mxu0
        %v1107 = vpop.f32.mrb[0].mxu0
        %v1108 = vadd.f32 0.0, %v1107
        %v1109 = vpop.f32.mrb[0].mxu0
        %1110 = vmatprep.mubr.bf16.mxu0 0
        %1111 = vmatmul.mubr.bf16.gmra.mrb[0].mxu0 %v791
        %v1112 = vpop.f32.mrb[0].mxu0
        %v1113 = vadd.f32 0.0, %v1112
        %v1114 = vpop.f32.mrb[0].mxu0
        %v1115 = vpop.f32.mrb[0].mxu0
        %v1116 = vadd.f32 0.0, %v1115
        %v1117 = vpop.f32.mrb[0].mxu0
        %1118 = vmatprep.mubr.bf16.mxu0 0
        %1119 = vmatmul.mubr.bf16.gmra.mrb[0].mxu0 %v793
        %v1120 = vpop.f32.mrb[0].mxu0
        %v1121 = vadd.f32 0.0, %v1120
        %v1122 = vpop.f32.mrb[0].mxu0
        %v1123 = vpop.f32.mrb[0].mxu0
        %v1124 = vadd.f32 0.0, %v1123
        %v1125 = vpop.f32.mrb[0].mxu0
        %1126 = vmatprep.mubr.bf16.mxu0 0
        %1127 = vmatmul.mubr.bf16.gmra.mrb[0].mxu0 %v795
        %v1128 = vpop.f32.mrb[0].mxu0
        %v1129 = vadd.f32 0.0, %v1128
        %v1130 = vpop.f32.mrb[0].mxu0
        %v1131 = vpop.f32.mrb[0].mxu0
        %v1132 = vadd.f32 0.0, %v1131
        %v1133 = vpop.f32.mrb[0].mxu0
        %1134 = vmatprep.mubr.bf16.mxu0 0
        %1135 = vmatmul.mubr.bf16.gmra.mrb[0].mxu0 %v797
        %v1136 = vpop.f32.mrb[0].mxu0
        %v1137 = vadd.f32 0.0, %v1136
        %v1138 = vpop.f32.mrb[0].mxu0
        %v1139 = vpop.f32.mrb[0].mxu0
        %v1140 = vadd.f32 0.0, %v1139
        %v1141 = vpop.f32.mrb[0].mxu0
        %1142 = vmatprep.mubr.bf16.mxu0 0
        %1143 = vmatmul.mubr.bf16.gmra.mrb[0].mxu0 %v799
        %v1144 = vpop.f32.mrb[0].mxu0
        %v1145 = vadd.f32 0.0, %v1144
        %v1146 = vpop.f32.mrb[0].mxu0
        %v1147 = vpop.f32.mrb[0].mxu0
        %v1148 = vadd.f32 0.0, %v1147
        %v1149 = vpop.f32.mrb[0].mxu0
        %1150 = vdwg.mxu0
        %v1151 = vlaneseq
        %v1152 = vshrl.u32 %v1151, 7
        %v1153 = vsub.s32 0, %v1152
        %v1154 = vrot.slane %v287, %v1153
        %v1161 = vunpack.c.l.b16 %v961
        %v1162 = vunpack.c.l.b16 %v962
        %v1163 = vunpack.c.l.b16 %v963
        %v1164 = vunpack.c.l.b16 %v964
        %v1165 = vunpack.c.l.b16 %v965
        %v1166 = vunpack.c.l.b16 %v966
        %v1167 = vpack.c.b16 %v1162, %v1161
        %v1168 = vpack.c.b16 %v1164, %v1163
        %v1169 = vpack.c.b16 %v1166, %v1165
        %1173 = vmatprep.subr.bf16.mxu0 0
        %1174 = vmatpush1.bf16.msra.mxu0 %v1167
        %1175 = vmatprep.subr.bf16.mxu0 0
        %1176 = vmatpush1.bf16.msra.mxu0 %v1168
        %1177 = vmatprep.subr.bf16.mxu0 0
        %1178 = vmatpush1.bf16.msra.mxu0 %v1169
        %1179 = vmatprep.subr.bf16.mxu0 0
        %1180 = vmatpush1.bf16.msra.mxu0 0
        %1181 = vmatprep.subr.bf16.mxu0 0
        %1182 = vmatpush1.bf16.msra.mxu0 0
        %1183 = vmatprep.subr.bf16.mxu0 0
        %1184 = vmatpush1.bf16.msra.mxu0 0
        %1185 = vmatprep.subr.bf16.mxu0 0
        %1186 = vmatpush1.bf16.msra.mxu0 0
        %1187 = vmatprep.subr.bf16.mxu0 0
        %1188 = vmatpush1.bf16.msra.mxu0 0
        %1189 = vmatprep.subr.bf16.mxu0 0
        %1190 = vmatpush1.bf16.msra.mxu0 0
        %1191 = vmatprep.subr.bf16.mxu0 0
        %1192 = vmatpush1.bf16.msra.mxu0 0
        %1193 = vmatprep.subr.bf16.mxu0 0
        %1194 = vmatpush1.bf16.msra.mxu0 0
        %1195 = vmatprep.subr.bf16.mxu0 0
        %1196 = vmatpush1.bf16.msra.mxu0 0
        %1197 = vmatprep.subr.bf16.mxu0 0
        %1198 = vmatpush1.bf16.msra.mxu0 0
        %1199 = vmatprep.subr.bf16.mxu0 0
        %1200 = vmatpush1.bf16.msra.mxu0 0
        %1201 = vmatprep.subr.bf16.mxu0 0
        %1202 = vmatpush1.bf16.msra.mxu0 0
        %1203 = vmatprep.subr.bf16.mxu0 0
        %1204 = vmatpush1.bf16.msra.mxu0 0
        %1205 = vmatprep.mubr.bf16.mxu0 0
        %1206 = vmatmul.mubr.bf16.gmra.mrb[0].mxu0 %v769
        %v1207 = vpop.f32.mrb[0].mxu0
        %v1208 = vadd.f32 %v1154, %v1207
        %v1209 = vpop.f32.mrb[0].mxu0
        %v1210 = vpop.f32.mrb[0].mxu0
        %v1211 = vadd.f32 %v1154, %v1210
        %v1212 = vpop.f32.mrb[0].mxu0
        %1213 = vmatprep.mubr.bf16.mxu0 0
        %1214 = vmatmul.mubr.bf16.gmra.mrb[0].mxu0 %v771
        %v1215 = vpop.f32.mrb[0].mxu0
        %v1216 = vadd.f32 %v1154, %v1215
        %v1217 = vpop.f32.mrb[0].mxu0
        %v1218 = vpop.f32.mrb[0].mxu0
        %v1219 = vadd.f32 %v1154, %v1218
        %v1220 = vpop.f32.mrb[0].mxu0
        %1221 = vmatprep.mubr.bf16.mxu0 0
        %1222 = vmatmul.mubr.bf16.gmra.mrb[0].mxu0 %v773
        %v1223 = vpop.f32.mrb[0].mxu0
        %v1224 = vadd.f32 %v1154, %v1223
        %v1225 = vpop.f32.mrb[0].mxu0
        %v1226 = vpop.f32.mrb[0].mxu0
        %v1227 = vadd.f32 %v1154, %v1226
        %v1228 = vpop.f32.mrb[0].mxu0
        %1229 = vmatprep.mubr.bf16.mxu0 0
        %1230 = vmatmul.mubr.bf16.gmra.mrb[0].mxu0 %v775
        %v1231 = vpop.f32.mrb[0].mxu0
        %v1232 = vadd.f32 %v1154, %v1231
        %v1233 = vpop.f32.mrb[0].mxu0
        %v1234 = vpop.f32.mrb[0].mxu0
        %v1235 = vadd.f32 %v1154, %v1234
        %v1236 = vpop.f32.mrb[0].mxu0
        %1237 = vmatprep.mubr.bf16.mxu0 0
        %1238 = vmatmul.mubr.bf16.gmra.mrb[0].mxu0 %v777
        %v1239 = vpop.f32.mrb[0].mxu0
        %v1240 = vadd.f32 %v1154, %v1239
        %v1241 = vpop.f32.mrb[0].mxu0
        %v1242 = vpop.f32.mrb[0].mxu0
        %v1243 = vadd.f32 %v1154, %v1242
        %v1244 = vpop.f32.mrb[0].mxu0
        %1245 = vmatprep.mubr.bf16.mxu0 0
        %1246 = vmatmul.mubr.bf16.gmra.mrb[0].mxu0 %v779
        %v1247 = vpop.f32.mrb[0].mxu0
        %v1248 = vadd.f32 %v1154, %v1247
        %v1249 = vpop.f32.mrb[0].mxu0
        %v1250 = vpop.f32.mrb[0].mxu0
        %v1251 = vadd.f32 %v1154, %v1250
        %v1252 = vpop.f32.mrb[0].mxu0
        %1253 = vmatprep.mubr.bf16.mxu0 0
        %1254 = vmatmul.mubr.bf16.gmra.mrb[0].mxu0 %v781
        %v1255 = vpop.f32.mrb[0].mxu0
        %v1256 = vadd.f32 %v1154, %v1255
        %v1257 = vpop.f32.mrb[0].mxu0
        %v1258 = vpop.f32.mrb[0].mxu0
        %v1259 = vadd.f32 %v1154, %v1258
        %v1260 = vpop.f32.mrb[0].mxu0
        %1261 = vmatprep.mubr.bf16.mxu0 0
        %1262 = vmatmul.mubr.bf16.gmra.mrb[0].mxu0 %v783
        %v1263 = vpop.f32.mrb[0].mxu0
        %v1264 = vadd.f32 %v1154, %v1263
        %v1265 = vpop.f32.mrb[0].mxu0
        %v1266 = vpop.f32.mrb[0].mxu0
        %v1267 = vadd.f32 %v1154, %v1266
        %v1268 = vpop.f32.mrb[0].mxu0
        %1269 = vmatprep.mubr.bf16.mxu0 0
        %1270 = vmatmul.mubr.bf16.gmra.mrb[0].mxu0 %v785
        %v1271 = vpop.f32.mrb[0].mxu0
        %v1272 = vadd.f32 %v1154, %v1271
        %v1273 = vpop.f32.mrb[0].mxu0
        %v1274 = vpop.f32.mrb[0].mxu0
        %v1275 = vadd.f32 %v1154, %v1274
        %v1276 = vpop.f32.mrb[0].mxu0
        %1277 = vmatprep.mubr.bf16.mxu0 0
        %1278 = vmatmul.mubr.bf16.gmra.mrb[0].mxu0 %v787
        %v1279 = vpop.f32.mrb[0].mxu0
        %v1280 = vadd.f32 %v1154, %v1279
        %v1281 = vpop.f32.mrb[0].mxu0
        %v1282 = vpop.f32.mrb[0].mxu0
        %v1283 = vadd.f32 %v1154, %v1282
        %v1284 = vpop.f32.mrb[0].mxu0
        %1285 = vmatprep.mubr.bf16.mxu0 0
        %1286 = vmatmul.mubr.bf16.gmra.mrb[0].mxu0 %v789
        %v1287 = vpop.f32.mrb[0].mxu0
        %v1288 = vadd.f32 %v1154, %v1287
        %v1289 = vpop.f32.mrb[0].mxu0
        %v1290 = vpop.f32.mrb[0].mxu0
        %v1291 = vadd.f32 %v1154, %v1290
        %v1292 = vpop.f32.mrb[0].mxu0
        %1293 = vmatprep.mubr.bf16.mxu0 0
        %1294 = vmatmul.mubr.bf16.gmra.mrb[0].mxu0 %v791
        %v1295 = vpop.f32.mrb[0].mxu0
        %v1296 = vadd.f32 %v1154, %v1295
        %v1297 = vpop.f32.mrb[0].mxu0
        %v1298 = vpop.f32.mrb[0].mxu0
        %v1299 = vadd.f32 %v1154, %v1298
        %v1300 = vpop.f32.mrb[0].mxu0
        %1301 = vmatprep.mubr.bf16.mxu0 0
        %1302 = vmatmul.mubr.bf16.gmra.mrb[0].mxu0 %v793
        %v1303 = vpop.f32.mrb[0].mxu0
        %v1304 = vadd.f32 %v1154, %v1303
        %v1305 = vpop.f32.mrb[0].mxu0
        %v1306 = vpop.f32.mrb[0].mxu0
        %v1307 = vadd.f32 %v1154, %v1306
        %v1308 = vpop.f32.mrb[0].mxu0
        %1309 = vmatprep.mubr.bf16.mxu0 0
        %1310 = vmatmul.mubr.bf16.gmra.mrb[0].mxu0 %v795
        %v1311 = vpop.f32.mrb[0].mxu0
        %v1312 = vadd.f32 %v1154, %v1311
        %v1313 = vpop.f32.mrb[0].mxu0
        %v1314 = vpop.f32.mrb[0].mxu0
        %v1315 = vadd.f32 %v1154, %v1314
        %v1316 = vpop.f32.mrb[0].mxu0
        %1317 = vmatprep.mubr.bf16.mxu0 0
        %1318 = vmatmul.mubr.bf16.gmra.mrb[0].mxu0 %v797
        %v1319 = vpop.f32.mrb[0].mxu0
        %v1320 = vadd.f32 %v1154, %v1319
        %v1321 = vpop.f32.mrb[0].mxu0
        %v1322 = vpop.f32.mrb[0].mxu0
        %v1323 = vadd.f32 %v1154, %v1322
        %v1324 = vpop.f32.mrb[0].mxu0
        %1325 = vmatprep.mubr.bf16.mxu0 0
        %1326 = vmatmul.mubr.bf16.gmra.mrb[0].mxu0 %v799
        %v1327 = vpop.f32.mrb[0].mxu0
        %v1328 = vadd.f32 %v1154, %v1327
        %v1329 = vpop.f32.mrb[0].mxu0
        %v1330 = vpop.f32.mrb[0].mxu0
        %v1331 = vadd.f32 %v1154, %v1330
        %v1332 = vpop.f32.mrb[0].mxu0
        %1333 = vdwg.mxu0
        %v1334 = vadd.f32 %v1208, 0.0
        %v1335 = vadd.f32 %v1211, 0.0
        %v1336 = vadd.f32 %v1216, %v836
        %v1337 = vadd.f32 %v1219, %v839
        %v1338 = vadd.f32 %v1224, %v844
        %v1339 = vadd.f32 %v1227, %v847
        %v1340 = vadd.f32 %v1232, %v852
        %v1341 = vadd.f32 %v1235, %v855
        %v1342 = vadd.f32 %v1240, %v860
        %v1343 = vadd.f32 %v1243, %v863
        %v1344 = vadd.f32 %v1248, %v868
        %v1345 = vadd.f32 %v1251, %v871
        %v1346 = vadd.f32 %v1256, %v876
        %v1347 = vadd.f32 %v1259, %v879
        %v1348 = vadd.f32 %v1264, %v884
        %v1349 = vadd.f32 %v1267, %v887
        %v1350 = vadd.f32 %v1272, %v892
        %v1351 = vadd.f32 %v1275, %v895
        %v1352 = vadd.f32 %v1280, %v900
        %v1353 = vadd.f32 %v1283, %v903
        %v1354 = vadd.f32 %v1288, %v908
        %v1355 = vadd.f32 %v1291, %v911
        %v1356 = vadd.f32 %v1296, %v916
        %v1357 = vadd.f32 %v1299, %v919
        %v1358 = vadd.f32 %v1304, %v924
        %v1359 = vadd.f32 %v1307, %v927
        %v1360 = vadd.f32 %v1312, %v932
        %v1361 = vadd.f32 %v1315, %v935
        %v1362 = vadd.f32 %v1320, %v940
        %v1363 = vadd.f32 %v1323, %v943
        %v1364 = vadd.f32 %v1328, %v948
        %v1365 = vadd.f32 %v1331, %v951
        %v1366 = vadd.f32 %v1334, %v1033
        %v1367 = vadd.f32 %v1335, %v1036
        %v1368 = vadd.f32 %v1336, %v1041
        %v1369 = vadd.f32 %v1337, %v1044
        %v1370 = vadd.f32 %v1338, %v1049
        %v1371 = vadd.f32 %v1339, %v1052
        %v1372 = vadd.f32 %v1340, %v1057
        %v1373 = vadd.f32 %v1341, %v1060
        %v1374 = vadd.f32 %v1342, %v1065
        %v1375 = vadd.f32 %v1343, %v1068
        %v1376 = vadd.f32 %v1344, %v1073
        %v1377 = vadd.f32 %v1345, %v1076
        %v1378 = vadd.f32 %v1346, %v1081
        %v1379 = vadd.f32 %v1347, %v1084
        %v1380 = vadd.f32 %v1348, %v1089
        %v1381 = vadd.f32 %v1349, %v1092
        %v1382 = vadd.f32 %v1350, %v1097
        %v1383 = vadd.f32 %v1351, %v1100
        %v1384 = vadd.f32 %v1352, %v1105
        %v1385 = vadd.f32 %v1353, %v1108
        %v1386 = vadd.f32 %v1354, %v1113
        %v1387 = vadd.f32 %v1355, %v1116
        %v1388 = vadd.f32 %v1356, %v1121
        %v1389 = vadd.f32 %v1357, %v1124
        %v1390 = vadd.f32 %v1358, %v1129
        %v1391 = vadd.f32 %v1359, %v1132
        %v1392 = vadd.f32 %v1360, %v1137
        %v1393 = vadd.f32 %v1361, %v1140
        %v1394 = vadd.f32 %v1362, %v1145
        %v1395 = vadd.f32 %v1363, %v1148
        %v1396 = vadd.f32 %v1364, 0.0
        %v1397 = vadd.f32 %v1365, 0.0
        %v1398 = vsel %vm711, %v1366, 0.0
        %v1399 = vsel %vm711, %v1367, 0.0
        %v1400 = vadd.f32 %v1398, %v1399
        %v1401 = vsel %vm711, %v1368, 0.0
        %v1402 = vadd.f32 %v1400, %v1401
        %v1403 = vsel %vm711, %v1369, 0.0
        %v1404 = vadd.f32 %v1402, %v1403
        %v1405 = vsel %vm711, %v1370, 0.0
        %v1406 = vadd.f32 %v1404, %v1405
        %v1407 = vsel %vm711, %v1371, 0.0
        %v1408 = vadd.f32 %v1406, %v1407
        %v1409 = vsel %vm711, %v1372, 0.0
        %v1410 = vadd.f32 %v1408, %v1409
        %v1411 = vsel %vm711, %v1373, 0.0
        %v1412 = vadd.f32 %v1410, %v1411
        %v1413 = vsel %vm711, %v1374, 0.0
        %v1414 = vadd.f32 %v1412, %v1413
        %v1415 = vsel %vm711, %v1375, 0.0
        %v1416 = vadd.f32 %v1414, %v1415
        %v1417 = vsel %vm711, %v1376, 0.0
        %v1418 = vadd.f32 %v1416, %v1417
        %v1419 = vsel %vm711, %v1377, 0.0
        %v1420 = vadd.f32 %v1418, %v1419
        %v1421 = vsel %vm711, %v1378, 0.0
        %v1422 = vadd.f32 %v1420, %v1421
        %v1423 = vsel %vm711, %v1379, 0.0
        %v1424 = vadd.f32 %v1422, %v1423
        %v1425 = vsel %vm711, %v1380, 0.0
        %v1426 = vadd.f32 %v1424, %v1425
        %v1427 = vsel %vm711, %v1381, 0.0
        %v1428 = vadd.f32 %v1426, %v1427
        %v1429 = vsel %vm711, %v1382, 0.0
        %v1430 = vadd.f32 %v1428, %v1429
        %v1431 = vsel %vm711, %v1383, 0.0
        %v1432 = vadd.f32 %v1430, %v1431
        %v1433 = vsel %vm711, %v1384, 0.0
        %v1434 = vadd.f32 %v1432, %v1433
        %v1435 = vsel %vm711, %v1385, 0.0
        %v1436 = vadd.f32 %v1434, %v1435
        %v1437 = vsel %vm711, %v1386, 0.0
        %v1438 = vadd.f32 %v1436, %v1437
        %v1439 = vsel %vm711, %v1387, 0.0
        %v1440 = vadd.f32 %v1438, %v1439
        %v1441 = vsel %vm711, %v1388, 0.0
        %v1442 = vadd.f32 %v1440, %v1441
        %v1443 = vsel %vm711, %v1389, 0.0
        %v1444 = vadd.f32 %v1442, %v1443
        %v1445 = vsel %vm711, %v1390, 0.0
        %v1446 = vadd.f32 %v1444, %v1445
        %v1447 = vsel %vm711, %v1391, 0.0
        %v1448 = vadd.f32 %v1446, %v1447
        %v1449 = vsel %vm711, %v1392, 0.0
        %v1450 = vadd.f32 %v1448, %v1449
        %v1451 = vsel %vm711, %v1393, 0.0
        %v1452 = vadd.f32 %v1450, %v1451
        %v1453 = vsel %vm711, %v1394, 0.0
        %v1454 = vadd.f32 %v1452, %v1453
        %v1455 = vsel %vm711, %v1395, 0.0
        %v1456 = vadd.f32 %v1454, %v1455
        %v1457 = vsel %vm711, %v1396, 0.0
        %v1458 = vadd.f32 %v1456, %v1457
        %v1459 = vsel %vm711, %v1397, 0.0
        %v1460 = vadd.f32 %v1458, %v1459
        %v1461 = vrot.slane %v1460, 4
        %v1462 = vadd.f32 %v1460, %v1461
        %v1463 = vrot.slane %v1462, 2
        %v1464 = vadd.f32 %v1462, %v1463
        %v1465 = vrot.slane %v1464, 1
        %v1466 = vadd.f32 %v1464, %v1465
        %v1468 = vsel %vm711, %v1466, 0
        %1470 = vmatprep.subr.mxu0 0.0
        %1471 = vmatpush1.msra.mxu0 %v283
        %1472 = vmatprep.subr.mxu0 0.0
        %1473 = vmatpush1.msra.mxu0 %v284
        %1474 = vmatprep.subr.mxu0 0.0
        %1475 = vmatpush1.msra.mxu0 %v285
        %1476 = vmatprep.subr.mxu0 0.0
        %1477 = vmatpush1.msra.mxu0 %v286
        %1478 = vmatprep.subr.mxu0 0.0
        %1479 = vmatpush1.msra.mxu0 0.0
        %1480 = vmatprep.subr.mxu0 0.0
        %1481 = vmatpush1.msra.mxu0 0.0
        %1482 = vmatprep.subr.mxu0 0.0
        %1483 = vmatpush1.msra.mxu0 0.0
        %1484 = vmatprep.subr.mxu0 0.0
        %1485 = vmatpush1.msra.mxu0 0.0
        %1486 = vmatprep.subr.mxu0 0.0
        %1487 = vmatpush1.msra.mxu0 0.0
        %1488 = vmatprep.subr.mxu0 0.0
        %1489 = vmatpush1.msra.mxu0 0.0
        %1490 = vmatprep.subr.mxu0 0.0
        %1491 = vmatpush1.msra.mxu0 0.0
        %1492 = vmatprep.subr.mxu0 0.0
        %1493 = vmatpush1.msra.mxu0 0.0
        %1494 = vmatprep.subr.mxu0 0.0
        %1495 = vmatpush1.msra.mxu0 0.0
        %1496 = vmatprep.subr.mxu0 0.0
        %1497 = vmatpush1.msra.mxu0 0.0
        %1498 = vmatprep.subr.mxu0 0.0
        %1499 = vmatpush1.msra.mxu0 0.0
        %1500 = vmatprep.subr.mxu0 0.0
        %1501 = vmatpush1.msra.mxu0 0.0
        %1502 = vmatprep.subr.mxu0 0.0
        %1503 = vmatpush1.msra.mxu0 0.0
        %1504 = vmatprep.subr.mxu0 0.0
        %1505 = vmatpush1.msra.mxu0 0.0
        %1506 = vmatprep.subr.mxu0 0.0
        %1507 = vmatpush1.msra.mxu0 0.0
        %1508 = vmatprep.subr.mxu0 0.0
        %1509 = vmatpush1.msra.mxu0 0.0
        %1510 = vmatprep.subr.mxu0 0.0
        %1511 = vmatpush1.msra.mxu0 0.0
        %1512 = vmatprep.subr.mxu0 0.0
        %1513 = vmatpush1.msra.mxu0 0.0
        %1514 = vmatprep.subr.mxu0 0.0
        %1515 = vmatpush1.msra.mxu0 0.0
        %1516 = vmatprep.subr.mxu0 0.0
        %1517 = vmatpush1.msra.mxu0 0.0
        %1518 = vmatprep.subr.mxu0 0.0
        %1519 = vmatpush1.msra.mxu0 0.0
        %1520 = vmatprep.subr.mxu0 0.0
        %1521 = vmatpush1.msra.mxu0 0.0
        %1522 = vmatprep.subr.mxu0 0.0
        %1523 = vmatpush1.msra.mxu0 0.0
        %1524 = vmatprep.subr.mxu0 0.0
        %1525 = vmatpush1.msra.mxu0 0.0
        %1526 = vmatprep.subr.mxu0 0.0
        %1527 = vmatpush1.msra.mxu0 0.0
        %1528 = vmatprep.subr.mxu0 0.0
        %1529 = vmatpush1.msra.mxu0 0.0
        %1530 = vmatprep.subr.mxu0 0.0
        %1531 = vmatpush1.msra.mxu0 0.0
        %1532 = vmatprep.subr.mxu0 0.0
        %1533 = vmatpush1.msra.mxu0 0.0
        %1534 = vmatprep.mubr.f32.mxu0 0.0
        %1535 = vmatmul.mubr.f32.gmra.mrb[0].mxu0 %v1468
        %v1536 = vpop.f32.mrb[0].mxu0
        %v1537 = vadd.f32 0.0, %v1536
        %v1538 = vpop.f32.mrb[0].mxu0
        %1539 = vdwg.mxu0
        %v1540 = vlaneseq
        %v1541 = vshrl.u32 %v1540, 7
        %v1542 = vsub.s32 0, %v1541
        %v1543 = vrot.slane %v1537, %v1542
        %v1544 = vsub.f32 %v1366, %v1543
        %v1545 = vsub.f32 %v1367, %v1543
        %v1546 = vsub.f32 %v1368, %v1543
        %v1547 = vsub.f32 %v1369, %v1543
        %v1548 = vsub.f32 %v1370, %v1543
        %v1549 = vsub.f32 %v1371, %v1543
        %v1550 = vsub.f32 %v1372, %v1543
        %v1551 = vsub.f32 %v1373, %v1543
        %v1552 = vsub.f32 %v1374, %v1543
        %v1553 = vsub.f32 %v1375, %v1543
        %v1554 = vsub.f32 %v1376, %v1543
        %v1555 = vsub.f32 %v1377, %v1543
        %v1556 = vsub.f32 %v1378, %v1543
        %v1557 = vsub.f32 %v1379, %v1543
        %v1558 = vsub.f32 %v1380, %v1543
        %v1559 = vsub.f32 %v1381, %v1543
        %v1560 = vsub.f32 %v1382, %v1543
        %v1561 = vsub.f32 %v1383, %v1543
        %v1562 = vsub.f32 %v1384, %v1543
        %v1563 = vsub.f32 %v1385, %v1543
        %v1564 = vsub.f32 %v1386, %v1543
        %v1565 = vsub.f32 %v1387, %v1543
        %v1566 = vsub.f32 %v1388, %v1543
        %v1567 = vsub.f32 %v1389, %v1543
        %v1568 = vsub.f32 %v1390, %v1543
        %v1569 = vsub.f32 %v1391, %v1543
        %v1570 = vsub.f32 %v1392, %v1543
        %v1571 = vsub.f32 %v1393, %v1543
        %v1572 = vsub.f32 %v1394, %v1543
        %v1573 = vsub.f32 %v1395, %v1543
        %v1574 = vsub.f32 %v1396, %v1543
        %v1575 = vsub.f32 %v1397, %v1543
        %v1576 = vmul.f32 %v1544, %v1544
        %v1577 = vmul.f32 %v1545, %v1545
        %v1578 = vmul.f32 %v1546, %v1546
        %v1579 = vmul.f32 %v1547, %v1547
        %v1580 = vmul.f32 %v1548, %v1548
        %v1581 = vmul.f32 %v1549, %v1549
        %v1582 = vmul.f32 %v1550, %v1550
        %v1583 = vmul.f32 %v1551, %v1551
        %v1584 = vmul.f32 %v1552, %v1552
        %v1585 = vmul.f32 %v1553, %v1553
        %v1586 = vmul.f32 %v1554, %v1554
        %v1587 = vmul.f32 %v1555, %v1555
        %v1588 = vmul.f32 %v1556, %v1556
        %v1589 = vmul.f32 %v1557, %v1557
        %v1590 = vmul.f32 %v1558, %v1558
        %v1591 = vmul.f32 %v1559, %v1559
        %v1592 = vmul.f32 %v1560, %v1560
        %v1593 = vmul.f32 %v1561, %v1561
        %v1594 = vmul.f32 %v1562, %v1562
        %v1595 = vmul.f32 %v1563, %v1563
        %v1596 = vmul.f32 %v1564, %v1564
        %v1597 = vmul.f32 %v1565, %v1565
        %v1598 = vmul.f32 %v1566, %v1566
        %v1599 = vmul.f32 %v1567, %v1567
        %v1600 = vmul.f32 %v1568, %v1568
        %v1601 = vmul.f32 %v1569, %v1569
        %v1602 = vmul.f32 %v1570, %v1570
        %v1603 = vmul.f32 %v1571, %v1571
        %v1604 = vmul.f32 %v1572, %v1572
        %v1605 = vmul.f32 %v1573, %v1573
        %v1606 = vmul.f32 %v1574, %v1574
        %v1607 = vmul.f32 %v1575, %v1575
        %v1608 = vsel %vm711, %v1576, 0.0
        %v1609 = vsel %vm711, %v1577, 0.0
        %v1610 = vadd.f32 %v1608, %v1609
        %v1611 = vsel %vm711, %v1578, 0.0
        %v1612 = vadd.f32 %v1610, %v1611
        %v1613 = vsel %vm711, %v1579, 0.0
        %v1614 = vadd.f32 %v1612, %v1613
        %v1615 = vsel %vm711, %v1580, 0.0
        %v1616 = vadd.f32 %v1614, %v1615
        %v1617 = vsel %vm711, %v1581, 0.0
        %v1618 = vadd.f32 %v1616, %v1617
        %v1619 = vsel %vm711, %v1582, 0.0
        %v1620 = vadd.f32 %v1618, %v1619
        %v1621 = vsel %vm711, %v1583, 0.0
        %v1622 = vadd.f32 %v1620, %v1621
        %v1623 = vsel %vm711, %v1584, 0.0
        %v1624 = vadd.f32 %v1622, %v1623
        %v1625 = vsel %vm711, %v1585, 0.0
        %v1626 = vadd.f32 %v1624, %v1625
        %v1627 = vsel %vm711, %v1586, 0.0
        %v1628 = vadd.f32 %v1626, %v1627
        %v1629 = vsel %vm711, %v1587, 0.0
        %v1630 = vadd.f32 %v1628, %v1629
        %v1631 = vsel %vm711, %v1588, 0.0
        %v1632 = vadd.f32 %v1630, %v1631
        %v1633 = vsel %vm711, %v1589, 0.0
        %v1634 = vadd.f32 %v1632, %v1633
        %v1635 = vsel %vm711, %v1590, 0.0
        %v1636 = vadd.f32 %v1634, %v1635
        %v1637 = vsel %vm711, %v1591, 0.0
        %v1638 = vadd.f32 %v1636, %v1637
        %v1639 = vsel %vm711, %v1592, 0.0
        %v1640 = vadd.f32 %v1638, %v1639
        %v1641 = vsel %vm711, %v1593, 0.0
        %v1642 = vadd.f32 %v1640, %v1641
        %v1643 = vsel %vm711, %v1594, 0.0
        %v1644 = vadd.f32 %v1642, %v1643
        %v1645 = vsel %vm711, %v1595, 0.0
        %v1646 = vadd.f32 %v1644, %v1645
        %v1647 = vsel %vm711, %v1596, 0.0
        %v1648 = vadd.f32 %v1646, %v1647
        %v1649 = vsel %vm711, %v1597, 0.0
        %v1650 = vadd.f32 %v1648, %v1649
        %v1651 = vsel %vm711, %v1598, 0.0
        %v1652 = vadd.f32 %v1650, %v1651
        %v1653 = vsel %vm711, %v1599, 0.0
        %v1654 = vadd.f32 %v1652, %v1653
        %v1655 = vsel %vm711, %v1600, 0.0
        %v1656 = vadd.f32 %v1654, %v1655
        %v1657 = vsel %vm711, %v1601, 0.0
        %v1658 = vadd.f32 %v1656, %v1657
        %v1659 = vsel %vm711, %v1602, 0.0
        %v1660 = vadd.f32 %v1658, %v1659
        %v1661 = vsel %vm711, %v1603, 0.0
        %v1662 = vadd.f32 %v1660, %v1661
        %v1663 = vsel %vm711, %v1604, 0.0
        %v1664 = vadd.f32 %v1662, %v1663
        %v1665 = vsel %vm711, %v1605, 0.0
        %v1666 = vadd.f32 %v1664, %v1665
        %v1667 = vsel %vm711, %v1606, 0.0
        %v1668 = vadd.f32 %v1666, %v1667
        %v1669 = vsel %vm711, %v1607, 0.0
        %v1670 = vadd.f32 %v1668, %v1669
        %v1671 = vrot.slane %v1670, 4
        %v1672 = vadd.f32 %v1670, %v1671
        %v1673 = vrot.slane %v1672, 2
        %v1674 = vadd.f32 %v1672, %v1673
        %v1675 = vrot.slane %v1674, 1
        %v1676 = vadd.f32 %v1674, %v1675
        %v1678 = vsel %vm711, %v1676, 0
        %1680 = vmatprep.subr.mxu0 0.0
        %1681 = vmatpush1.msra.mxu0 %v283
        %1682 = vmatprep.subr.mxu0 0.0
        %1683 = vmatpush1.msra.mxu0 %v284
        %1684 = vmatprep.subr.mxu0 0.0
        %1685 = vmatpush1.msra.mxu0 %v285
        %1686 = vmatprep.subr.mxu0 0.0
        %1687 = vmatpush1.msra.mxu0 %v286
        %1688 = vmatprep.subr.mxu0 0.0
        %1689 = vmatpush1.msra.mxu0 0.0
        %1690 = vmatprep.subr.mxu0 0.0
        %1691 = vmatpush1.msra.mxu0 0.0
        %1692 = vmatprep.subr.mxu0 0.0
        %1693 = vmatpush1.msra.mxu0 0.0
        %1694 = vmatprep.subr.mxu0 0.0
        %1695 = vmatpush1.msra.mxu0 0.0
        %1696 = vmatprep.subr.mxu0 0.0
        %1697 = vmatpush1.msra.mxu0 0.0
        %1698 = vmatprep.subr.mxu0 0.0
        %1699 = vmatpush1.msra.mxu0 0.0
        %1700 = vmatprep.subr.mxu0 0.0
        %1701 = vmatpush1.msra.mxu0 0.0
        %1702 = vmatprep.subr.mxu0 0.0
        %1703 = vmatpush1.msra.mxu0 0.0
        %1704 = vmatprep.subr.mxu0 0.0
        %1705 = vmatpush1.msra.mxu0 0.0
        %1706 = vmatprep.subr.mxu0 0.0
        %1707 = vmatpush1.msra.mxu0 0.0
        %1708 = vmatprep.subr.mxu0 0.0
        %1709 = vmatpush1.msra.mxu0 0.0
        %1710 = vmatprep.subr.mxu0 0.0
        %1711 = vmatpush1.msra.mxu0 0.0
        %1712 = vmatprep.subr.mxu0 0.0
        %1713 = vmatpush1.msra.mxu0 0.0
        %1714 = vmatprep.subr.mxu0 0.0
        %1715 = vmatpush1.msra.mxu0 0.0
        %1716 = vmatprep.subr.mxu0 0.0
        %1717 = vmatpush1.msra.mxu0 0.0
        %1718 = vmatprep.subr.mxu0 0.0
        %1719 = vmatpush1.msra.mxu0 0.0
        %1720 = vmatprep.subr.mxu0 0.0
        %1721 = vmatpush1.msra.mxu0 0.0
        %1722 = vmatprep.subr.mxu0 0.0
        %1723 = vmatpush1.msra.mxu0 0.0
        %1724 = vmatprep.subr.mxu0 0.0
        %1725 = vmatpush1.msra.mxu0 0.0
        %1726 = vmatprep.subr.mxu0 0.0
        %1727 = vmatpush1.msra.mxu0 0.0
        %1728 = vmatprep.subr.mxu0 0.0
        %1729 = vmatpush1.msra.mxu0 0.0
        %1730 = vmatprep.subr.mxu0 0.0
        %1731 = vmatpush1.msra.mxu0 0.0
        %1732 = vmatprep.subr.mxu0 0.0
        %1733 = vmatpush1.msra.mxu0 0.0
        %1734 = vmatprep.subr.mxu0 0.0
        %1735 = vmatpush1.msra.mxu0 0.0
        %1736 = vmatprep.subr.mxu0 0.0
        %1737 = vmatpush1.msra.mxu0 0.0
        %1738 = vmatprep.subr.mxu0 0.0
        %1739 = vmatpush1.msra.mxu0 0.0
        %1740 = vmatprep.subr.mxu0 0.0
        %1741 = vmatpush1.msra.mxu0 0.0
        %1742 = vmatprep.subr.mxu0 0.0
        %1743 = vmatpush1.msra.mxu0 0.0
        %1744 = vmatprep.mubr.f32.mxu0 0.0
        %1745 = vmatmul.mubr.f32.gmra.mrb[0].mxu0 %v1678
        %v1746 = vpop.f32.mrb[0].mxu0
        %v1747 = vadd.f32 1e-05, %v1746
        %v1748 = vpop.f32.mrb[0].mxu0
        %1749 = vdwg.mxu0
        %v1750 = vrsqrt.pop %v1747
        %v1752 = vrot.slane %v287, 1
        %v1754 = vmul.f32 %v1750, %v1752
        %v1755 = vlaneseq
        %v1756 = vshrl.u32 %v1755, 7
        %v1757 = vsub.s32 0, %v1756
        %v1758 = vrot.slane %v1754, %v1757
        %v1759 = vmul.f32 %v1544, %v1758
        %v1760 = vmul.f32 %v1545, %v1758
        %v1761 = vmul.f32 %v1546, %v1758
        %v1762 = vmul.f32 %v1547, %v1758
        %v1763 = vmul.f32 %v1548, %v1758
        %v1764 = vmul.f32 %v1549, %v1758
        %v1765 = vmul.f32 %v1550, %v1758
        %v1766 = vmul.f32 %v1551, %v1758
        %v1767 = vmul.f32 %v1552, %v1758
        %v1768 = vmul.f32 %v1553, %v1758
        %v1769 = vmul.f32 %v1554, %v1758
        %v1770 = vmul.f32 %v1555, %v1758
        %v1771 = vmul.f32 %v1556, %v1758
        %v1772 = vmul.f32 %v1557, %v1758
        %v1773 = vmul.f32 %v1558, %v1758
        %v1774 = vmul.f32 %v1559, %v1758
        %v1775 = vmul.f32 %v1560, %v1758
        %v1776 = vmul.f32 %v1561, %v1758
        %v1777 = vmul.f32 %v1562, %v1758
        %v1778 = vmul.f32 %v1563, %v1758
        %v1779 = vmul.f32 %v1564, %v1758
        %v1780 = vmul.f32 %v1565, %v1758
        %v1781 = vmul.f32 %v1566, %v1758
        %v1782 = vmul.f32 %v1567, %v1758
        %v1783 = vmul.f32 %v1568, %v1758
        %v1784 = vmul.f32 %v1569, %v1758
        %v1785 = vmul.f32 %v1570, %v1758
        %v1786 = vmul.f32 %v1571, %v1758
        %v1787 = vmul.f32 %v1572, %v1758
        %v1788 = vmul.f32 %v1573, %v1758
        %v1789 = vmul.f32 %v1574, %v1758
        %v1790 = vmul.f32 %v1575, %v1758
        %v1791 = vlaneseq
        %v1792 = vshrl.u32 %v1791, 7
        %v1793 = vsub.s32 2, %v1792
        %v1794 = vrot.slane %v287, %v1793
        %v1795 = vadd.f32 %v1759, %v1794
        %v1796 = vadd.f32 %v1760, %v1794
        %v1797 = vadd.f32 %v1761, %v1794
        %v1798 = vadd.f32 %v1762, %v1794
        %v1799 = vadd.f32 %v1763, %v1794
        %v1800 = vadd.f32 %v1764, %v1794
        %v1801 = vadd.f32 %v1765, %v1794
        %v1802 = vadd.f32 %v1766, %v1794
        %v1803 = vadd.f32 %v1767, %v1794
        %v1804 = vadd.f32 %v1768, %v1794
        %v1805 = vadd.f32 %v1769, %v1794
        %v1806 = vadd.f32 %v1770, %v1794
        %v1807 = vadd.f32 %v1771, %v1794
        %v1808 = vadd.f32 %v1772, %v1794
        %v1809 = vadd.f32 %v1773, %v1794
        %v1810 = vadd.f32 %v1774, %v1794
        %v1811 = vadd.f32 %v1775, %v1794
        %v1812 = vadd.f32 %v1776, %v1794
        %v1813 = vadd.f32 %v1777, %v1794
        %v1814 = vadd.f32 %v1778, %v1794
        %v1815 = vadd.f32 %v1779, %v1794
        %v1816 = vadd.f32 %v1780, %v1794
        %v1817 = vadd.f32 %v1781, %v1794
        %v1818 = vadd.f32 %v1782, %v1794
        %v1819 = vadd.f32 %v1783, %v1794
        %v1820 = vadd.f32 %v1784, %v1794
        %v1821 = vadd.f32 %v1785, %v1794
        %v1822 = vadd.f32 %v1786, %v1794
        %v1823 = vadd.f32 %v1787, %v1794
        %v1824 = vadd.f32 %v1788, %v1794
        %v1825 = vadd.f32 %v1789, %v1794
        %v1826 = vadd.f32 %v1790, %v1794
        %v1827 = vsub.f32 0.0, %v1795
        %v1828 = vsub.f32 0.0, %v1796
        %v1829 = vsub.f32 0.0, %v1797
        %v1830 = vsub.f32 0.0, %v1798
        %v1831 = vsub.f32 0.0, %v1799
        %v1832 = vsub.f32 0.0, %v1800
        %v1833 = vsub.f32 0.0, %v1801
        %v1834 = vsub.f32 0.0, %v1802
        %v1835 = vsub.f32 0.0, %v1803
        %v1836 = vsub.f32 0.0, %v1804
        %v1837 = vsub.f32 0.0, %v1805
        %v1838 = vsub.f32 0.0, %v1806
        %v1839 = vsub.f32 0.0, %v1807
        %v1840 = vsub.f32 0.0, %v1808
        %v1841 = vsub.f32 0.0, %v1809
        %v1842 = vsub.f32 0.0, %v1810
        %v1843 = vsub.f32 0.0, %v1811
        %v1844 = vsub.f32 0.0, %v1812
        %v1845 = vsub.f32 0.0, %v1813
        %v1846 = vsub.f32 0.0, %v1814
        %v1847 = vsub.f32 0.0, %v1815
        %v1848 = vsub.f32 0.0, %v1816
        %v1849 = vsub.f32 0.0, %v1817
        %v1850 = vsub.f32 0.0, %v1818
        %v1851 = vsub.f32 0.0, %v1819
        %v1852 = vsub.f32 0.0, %v1820
        %v1853 = vsub.f32 0.0, %v1821
        %v1854 = vsub.f32 0.0, %v1822
        %v1855 = vsub.f32 0.0, %v1823
        %v1856 = vsub.f32 0.0, %v1824
        %v1857 = vsub.f32 0.0, %v1825
        %v1858 = vsub.f32 0.0, %v1826
        %v1859 = vmul.f32 %v1827, 1.442695
        %v1860 = vpow.pop %v1859
        %v1861 = vmul.f32 %v1828, 1.442695
        %v1862 = vpow.pop %v1861
        %v1863 = vmul.f32 %v1829, 1.442695
        %v1864 = vpow.pop %v1863
        %v1865 = vmul.f32 %v1830, 1.442695
        %v1866 = vpow.pop %v1865
        %v1867 = vmul.f32 %v1831, 1.442695
        %v1868 = vpow.pop %v1867
        %v1869 = vmul.f32 %v1832, 1.442695
        %v1870 = vpow.pop %v1869
        %v1871 = vmul.f32 %v1833, 1.442695
        %v1872 = vpow.pop %v1871
        %v1873 = vmul.f32 %v1834, 1.442695
        %v1874 = vpow.pop %v1873
        %v1875 = vmul.f32 %v1835, 1.442695
        %v1876 = vpow.pop %v1875
        %v1877 = vmul.f32 %v1836, 1.442695
        %v1878 = vpow.pop %v1877
        %v1879 = vmul.f32 %v1837, 1.442695
        %v1880 = vpow.pop %v1879
        %v1881 = vmul.f32 %v1838, 1.442695
        %v1882 = vpow.pop %v1881
        %v1883 = vmul.f32 %v1839, 1.442695
        %v1884 = vpow.pop %v1883
        %v1885 = vmul.f32 %v1840, 1.442695
        %v1886 = vpow.pop %v1885
        %v1887 = vmul.f32 %v1841, 1.442695
        %v1888 = vpow.pop %v1887
        %v1889 = vmul.f32 %v1842, 1.442695
        %v1890 = vpow.pop %v1889
        %v1891 = vmul.f32 %v1843, 1.442695
        %v1892 = vpow.pop %v1891
        %v1893 = vmul.f32 %v1844, 1.442695
        %v1894 = vpow.pop %v1893
        %v1895 = vmul.f32 %v1845, 1.442695
        %v1896 = vpow.pop %v1895
        %v1897 = vmul.f32 %v1846, 1.442695
        %v1898 = vpow.pop %v1897
        %v1899 = vmul.f32 %v1847, 1.442695
        %v1900 = vpow.pop %v1899
        %v1901 = vmul.f32 %v1848, 1.442695
        %v1902 = vpow.pop %v1901
        %v1903 = vmul.f32 %v1849, 1.442695
        %v1904 = vpow.pop %v1903
        %v1905 = vmul.f32 %v1850, 1.442695
        %v1906 = vpow.pop %v1905
        %v1907 = vmul.f32 %v1851, 1.442695
        %v1908 = vpow.pop %v1907
        %v1909 = vmul.f32 %v1852, 1.442695
        %v1910 = vpow.pop %v1909
        %v1911 = vmul.f32 %v1853, 1.442695
        %v1912 = vpow.pop %v1911
        %v1913 = vmul.f32 %v1854, 1.442695
        %v1914 = vpow.pop %v1913
        %v1915 = vmul.f32 %v1855, 1.442695
        %v1916 = vpow.pop %v1915
        %v1917 = vmul.f32 %v1856, 1.442695
        %v1918 = vpow.pop %v1917
        %v1919 = vmul.f32 %v1857, 1.442695
        %v1920 = vpow.pop %v1919
        %v1921 = vmul.f32 %v1858, 1.442695
        %v1922 = vpow.pop %v1921
        %v1923 = vadd.f32 %v1860, 1.0
        %v1924 = vadd.f32 %v1862, 1.0
        %v1925 = vadd.f32 %v1864, 1.0
        %v1926 = vadd.f32 %v1866, 1.0
        %v1927 = vadd.f32 %v1868, 1.0
        %v1928 = vadd.f32 %v1870, 1.0
        %v1929 = vadd.f32 %v1872, 1.0
        %v1930 = vadd.f32 %v1874, 1.0
        %v1931 = vadd.f32 %v1876, 1.0
        %v1932 = vadd.f32 %v1878, 1.0
        %v1933 = vadd.f32 %v1880, 1.0
        %v1934 = vadd.f32 %v1882, 1.0
        %v1935 = vadd.f32 %v1884, 1.0
        %v1936 = vadd.f32 %v1886, 1.0
        %v1937 = vadd.f32 %v1888, 1.0
        %v1938 = vadd.f32 %v1890, 1.0
        %v1939 = vadd.f32 %v1892, 1.0
        %v1940 = vadd.f32 %v1894, 1.0
        %v1941 = vadd.f32 %v1896, 1.0
        %v1942 = vadd.f32 %v1898, 1.0
        %v1943 = vadd.f32 %v1900, 1.0
        %v1944 = vadd.f32 %v1902, 1.0
        %v1945 = vadd.f32 %v1904, 1.0
        %v1946 = vadd.f32 %v1906, 1.0
        %v1947 = vadd.f32 %v1908, 1.0
        %v1948 = vadd.f32 %v1910, 1.0
        %v1949 = vadd.f32 %v1912, 1.0
        %v1950 = vadd.f32 %v1914, 1.0
        %v1951 = vadd.f32 %v1916, 1.0
        %v1952 = vadd.f32 %v1918, 1.0
        %v1953 = vadd.f32 %v1920, 1.0
        %v1954 = vadd.f32 %v1922, 1.0
        %v1955 = vrcp.pop %v1923
        %v1956 = vrcp.pop %v1924
        %v1957 = vrcp.pop %v1925
        %v1958 = vrcp.pop %v1926
        %v1959 = vrcp.pop %v1927
        %v1960 = vrcp.pop %v1928
        %v1961 = vrcp.pop %v1929
        %v1962 = vrcp.pop %v1930
        %v1963 = vrcp.pop %v1931
        %v1964 = vrcp.pop %v1932
        %v1965 = vrcp.pop %v1933
        %v1966 = vrcp.pop %v1934
        %v1967 = vrcp.pop %v1935
        %v1968 = vrcp.pop %v1936
        %v1969 = vrcp.pop %v1937
        %v1970 = vrcp.pop %v1938
        %v1971 = vrcp.pop %v1939
        %v1972 = vrcp.pop %v1940
        %v1973 = vrcp.pop %v1941
        %v1974 = vrcp.pop %v1942
        %v1975 = vrcp.pop %v1943
        %v1976 = vrcp.pop %v1944
        %v1977 = vrcp.pop %v1945
        %v1978 = vrcp.pop %v1946
        %v1979 = vrcp.pop %v1947
        %v1980 = vrcp.pop %v1948
        %v1981 = vrcp.pop %v1949
        %v1982 = vrcp.pop %v1950
        %v1983 = vrcp.pop %v1951
        %v1984 = vrcp.pop %v1952
        %v1985 = vrcp.pop %v1953
        %v1986 = vrcp.pop %v1954
        %v1987 = vmul.f32 %v1795, %v1955
        %v1988 = vmul.f32 %v1796, %v1956
        %v1989 = vmul.f32 %v1797, %v1957
        %v1990 = vmul.f32 %v1798, %v1958
        %v1991 = vmul.f32 %v1799, %v1959
        %v1992 = vmul.f32 %v1800, %v1960
        %v1993 = vmul.f32 %v1801, %v1961
        %v1994 = vmul.f32 %v1802, %v1962
        %v1995 = vmul.f32 %v1803, %v1963
        %v1996 = vmul.f32 %v1804, %v1964
        %v1997 = vmul.f32 %v1805, %v1965
        %v1998 = vmul.f32 %v1806, %v1966
        %v1999 = vmul.f32 %v1807, %v1967
        %v2000 = vmul.f32 %v1808, %v1968
        %v2001 = vmul.f32 %v1809, %v1969
        %v2002 = vmul.f32 %v1810, %v1970
        %v2003 = vmul.f32 %v1811, %v1971
        %v2004 = vmul.f32 %v1812, %v1972
        %v2005 = vmul.f32 %v1813, %v1973
        %v2006 = vmul.f32 %v1814, %v1974
        %v2007 = vmul.f32 %v1815, %v1975
        %v2008 = vmul.f32 %v1816, %v1976
        %v2009 = vmul.f32 %v1817, %v1977
        %v2010 = vmul.f32 %v1818, %v1978
        %v2011 = vmul.f32 %v1819, %v1979
        %v2012 = vmul.f32 %v1820, %v1980
        %v2013 = vmul.f32 %v1821, %v1981
        %v2014 = vmul.f32 %v1822, %v1982
        %v2015 = vmul.f32 %v1823, %v1983
        %v2016 = vmul.f32 %v1824, %v1984
        %v2017 = vmul.f32 %v1825, %v1985
        %v2018 = vmul.f32 %v1826, %v1986
        %v2019 = vpack.c.bf16 %v1988, %v1987
        %v2020 = vpack.c.bf16 %v1990, %v1989
        %v2021 = vpack.c.bf16 %v1992, %v1991
        %v2022 = vpack.c.bf16 %v1994, %v1993
        %v2023 = vpack.c.bf16 %v1996, %v1995
        %v2024 = vpack.c.bf16 %v1998, %v1997
        %v2025 = vpack.c.bf16 %v2000, %v1999
        %v2026 = vpack.c.bf16 %v2002, %v2001
        %v2027 = vpack.c.bf16 %v2004, %v2003
        %v2028 = vpack.c.bf16 %v2006, %v2005
        %v2029 = vpack.c.bf16 %v2008, %v2007
        %v2030 = vpack.c.bf16 %v2010, %v2009
        %v2031 = vpack.c.bf16 %v2012, %v2011
        %v2032 = vpack.c.bf16 %v2014, %v2013
        %v2033 = vpack.c.bf16 %v2016, %v2015
        %v2034 = vpack.c.bf16 %v2018, %v2017
        %v2036 = vshrl.u32 %v2019, 16
        %v2038 = vrot.slane %v2036, 7
        %v2039 = vshll.u32 %v2019, 16
        %v2041 = vor.u32 %v2038, %v2039
        %v2043 = vshrl.u32 %v2020, 16
        %v2045 = vrot.slane %v2043, 7
        %v2046 = vshll.u32 %v2020, 16
        %v2048 = vor.u32 %v2045, %v2046
        %v2050 = vshrl.u32 %v2021, 16
        %v2052 = vrot.slane %v2050, 7
        %v2053 = vshll.u32 %v2021, 16
        %v2055 = vor.u32 %v2052, %v2053
        %v2057 = vshrl.u32 %v2022, 16
        %v2059 = vrot.slane %v2057, 7
        %v2060 = vshll.u32 %v2022, 16
        %v2062 = vor.u32 %v2059, %v2060
        %v2064 = vshrl.u32 %v2023, 16
        %v2066 = vrot.slane %v2064, 7
        %v2067 = vshll.u32 %v2023, 16
        %v2069 = vor.u32 %v2066, %v2067
        %v2071 = vshrl.u32 %v2024, 16
        %v2073 = vrot.slane %v2071, 7
        %v2074 = vshll.u32 %v2024, 16
        %v2076 = vor.u32 %v2073, %v2074
        %v2078 = vshrl.u32 %v2025, 16
        %v2080 = vrot.slane %v2078, 7
        %v2081 = vshll.u32 %v2025, 16
        %v2083 = vor.u32 %v2080, %v2081
        %v2085 = vshrl.u32 %v2026, 16
        %v2087 = vrot.slane %v2085, 7
        %v2088 = vshll.u32 %v2026, 16
        %v2090 = vor.u32 %v2087, %v2088
        %v2092 = vshrl.u32 %v2027, 16
        %v2094 = vrot.slane %v2092, 7
        %v2095 = vshll.u32 %v2027, 16
        %v2097 = vor.u32 %v2094, %v2095
        %v2099 = vshrl.u32 %v2028, 16
        %v2101 = vrot.slane %v2099, 7
        %v2102 = vshll.u32 %v2028, 16
        %v2104 = vor.u32 %v2101, %v2102
        %v2106 = vshrl.u32 %v2029, 16
        %v2108 = vrot.slane %v2106, 7
        %v2109 = vshll.u32 %v2029, 16
        %v2111 = vor.u32 %v2108, %v2109
        %v2113 = vshrl.u32 %v2030, 16
        %v2115 = vrot.slane %v2113, 7
        %v2116 = vshll.u32 %v2030, 16
        %v2118 = vor.u32 %v2115, %v2116
        %v2120 = vshrl.u32 %v2031, 16
        %v2122 = vrot.slane %v2120, 7
        %v2123 = vshll.u32 %v2031, 16
        %v2125 = vor.u32 %v2122, %v2123
        %v2127 = vshrl.u32 %v2032, 16
        %v2129 = vrot.slane %v2127, 7
        %v2130 = vshll.u32 %v2032, 16
        %v2132 = vor.u32 %v2129, %v2130
        %v2134 = vshrl.u32 %v2033, 16
        %v2136 = vrot.slane %v2134, 7
        %v2137 = vshll.u32 %v2033, 16
        %v2139 = vor.u32 %v2136, %v2137
        %v2141 = vshrl.u32 %v2034, 16
        %v2143 = vrot.slane %v2141, 7
        %v2144 = vshll.u32 %v2034, 16
        %v2146 = vor.u32 %v2143, %v2144
        %v2163 = vsel %vm498, 0, %v2041
        %v2164 = vsel %vm498, 0, %v2048
        %v2165 = vsel %vm498, 0, %v2055
        %v2166 = vsel %vm498, 0, %v2062
        %v2167 = vsel %vm498, 0, %v2069
        %v2168 = vsel %vm498, 0, %v2076
        %v2169 = vsel %vm498, 0, %v2083
        %v2170 = vsel %vm498, 0, %v2090
        %v2171 = vsel %vm498, 0, %v2097
        %v2172 = vsel %vm498, 0, %v2104
        %v2173 = vsel %vm498, 0, %v2111
        %v2174 = vsel %vm498, 0, %v2118
        %v2175 = vsel %vm498, 0, %v2125
        %v2176 = vsel %vm498, 0, %v2132
        %v2177 = vsel %vm498, 0, %v2139
        %v2178 = vsel %vm498, 0, %v2146
        %v2179 = vrot.slane %v2039, 1
        %v2180 = vor.u32 %v2036, %v2179
        %v2181 = vrot.slane %v2046, 1
        %v2182 = vor.u32 %v2043, %v2181
        %v2183 = vrot.slane %v2053, 1
        %v2184 = vor.u32 %v2050, %v2183
        %v2185 = vrot.slane %v2060, 1
        %v2186 = vor.u32 %v2057, %v2185
        %v2187 = vrot.slane %v2067, 1
        %v2188 = vor.u32 %v2064, %v2187
        %v2189 = vrot.slane %v2074, 1
        %v2190 = vor.u32 %v2071, %v2189
        %v2191 = vrot.slane %v2081, 1
        %v2192 = vor.u32 %v2078, %v2191
        %v2193 = vrot.slane %v2088, 1
        %v2194 = vor.u32 %v2085, %v2193
        %v2195 = vrot.slane %v2095, 1
        %v2196 = vor.u32 %v2092, %v2195
        %v2197 = vrot.slane %v2102, 1
        %v2198 = vor.u32 %v2099, %v2197
        %v2199 = vrot.slane %v2109, 1
        %v2200 = vor.u32 %v2106, %v2199
        %v2201 = vrot.slane %v2116, 1
        %v2202 = vor.u32 %v2113, %v2201
        %v2203 = vrot.slane %v2123, 1
        %v2204 = vor.u32 %v2120, %v2203
        %v2205 = vrot.slane %v2130, 1
        %v2206 = vor.u32 %v2127, %v2205
        %v2207 = vrot.slane %v2137, 1
        %v2208 = vor.u32 %v2134, %v2207
        %v2209 = vrot.slane %v2144, 1
        %v2210 = vor.u32 %v2141, %v2209
        %v2227 = vsel %vm565, %v2180, 0
        %v2228 = vsel %vm565, %v2182, 0
        %v2229 = vsel %vm565, %v2184, 0
        %v2230 = vsel %vm565, %v2186, 0
        %v2231 = vsel %vm565, %v2188, 0
        %v2232 = vsel %vm565, %v2190, 0
        %v2233 = vsel %vm565, %v2192, 0
        %v2234 = vsel %vm565, %v2194, 0
        %v2235 = vsel %vm565, %v2196, 0
        %v2236 = vsel %vm565, %v2198, 0
        %v2237 = vsel %vm565, %v2200, 0
        %v2238 = vsel %vm565, %v2202, 0
        %v2239 = vsel %vm565, %v2204, 0
        %v2240 = vsel %vm565, %v2206, 0
        %v2241 = vsel %vm565, %v2208, 0
        %v2242 = vsel %vm565, %v2210, 0
        %2259 = vrot.lane.b32.xlu0 %v2019, 32
        %v2260 = vpop.permute.xlu0 %2259
        %2261 = vrot.lane.b32.xlu0 %v2020, 32
        %v2262 = vpop.permute.xlu0 %2261
        %2263 = vrot.lane.b32.xlu0 %v2021, 32
        %v2264 = vpop.permute.xlu0 %2263
        %2265 = vrot.lane.b32.xlu0 %v2022, 32
        %v2266 = vpop.permute.xlu0 %2265
        %2267 = vrot.lane.b32.xlu0 %v2023, 32
        %v2268 = vpop.permute.xlu0 %2267
        %2269 = vrot.lane.b32.xlu0 %v2024, 32
        %v2270 = vpop.permute.xlu0 %2269
        %2271 = vrot.lane.b32.xlu0 %v2025, 32
        %v2272 = vpop.permute.xlu0 %2271
        %2273 = vrot.lane.b32.xlu0 %v2026, 32
        %v2274 = vpop.permute.xlu0 %2273
        %2275 = vrot.lane.b32.xlu0 %v2027, 32
        %v2276 = vpop.permute.xlu0 %2275
        %2277 = vrot.lane.b32.xlu0 %v2028, 32
        %v2278 = vpop.permute.xlu0 %2277
        %2279 = vrot.lane.b32.xlu0 %v2029, 32
        %v2280 = vpop.permute.xlu0 %2279
        %2281 = vrot.lane.b32.xlu0 %v2030, 32
        %v2282 = vpop.permute.xlu0 %2281
        %2283 = vrot.lane.b32.xlu0 %v2031, 32
        %v2284 = vpop.permute.xlu0 %2283
        %2285 = vrot.lane.b32.xlu0 %v2032, 32
        %v2286 = vpop.permute.xlu0 %2285
        %2287 = vrot.lane.b32.xlu0 %v2033, 32
        %v2288 = vpop.permute.xlu0 %2287
        %2289 = vrot.lane.b32.xlu0 %v2034, 32
        %v2290 = vpop.permute.xlu0 %2289
        %2307 = vrot.lane.b32.xlu0 %v2227, 64
        %v2308 = vpop.permute.xlu0 %2307
        %2309 = vrot.lane.b32.xlu0 %v2228, 64
        %v2310 = vpop.permute.xlu0 %2309
        %2311 = vrot.lane.b32.xlu0 %v2229, 64
        %v2312 = vpop.permute.xlu0 %2311
        %2313 = vrot.lane.b32.xlu0 %v2230, 64
        %v2314 = vpop.permute.xlu0 %2313
        %2315 = vrot.lane.b32.xlu0 %v2231, 64
        %v2316 = vpop.permute.xlu0 %2315
        %2317 = vrot.lane.b32.xlu0 %v2232, 64
        %v2318 = vpop.permute.xlu0 %2317
        %2319 = vrot.lane.b32.xlu0 %v2233, 64
        %v2320 = vpop.permute.xlu0 %2319
        %2321 = vrot.lane.b32.xlu0 %v2234, 64
        %v2322 = vpop.permute.xlu0 %2321
        %2323 = vrot.lane.b32.xlu0 %v2235, 64
        %v2324 = vpop.permute.xlu0 %2323
        %2325 = vrot.lane.b32.xlu0 %v2236, 64
        %v2326 = vpop.permute.xlu0 %2325
        %2327 = vrot.lane.b32.xlu0 %v2237, 64
        %v2328 = vpop.permute.xlu0 %2327
        %2329 = vrot.lane.b32.xlu0 %v2238, 64
        %v2330 = vpop.permute.xlu0 %2329
        %2331 = vrot.lane.b32.xlu0 %v2239, 64
        %v2332 = vpop.permute.xlu0 %2331
        %2333 = vrot.lane.b32.xlu0 %v2240, 64
        %v2334 = vpop.permute.xlu0 %2333
        %2335 = vrot.lane.b32.xlu0 %v2241, 64
        %v2336 = vpop.permute.xlu0 %2335
        %2337 = vrot.lane.b32.xlu0 %v2242, 64
        %v2338 = vpop.permute.xlu0 %2337
        %v2341 = vsel %vm711, %v2163, %v2260
        %v2344 = vsel %vm711, %v2164, %v2262
        %v2347 = vsel %vm711, %v2165, %v2264
        %v2350 = vsel %vm711, %v2166, %v2266
        %v2353 = vsel %vm711, %v2167, %v2268
        %v2356 = vsel %vm711, %v2168, %v2270
        %v2359 = vsel %vm711, %v2169, %v2272
        %v2362 = vsel %vm711, %v2170, %v2274
        %v2365 = vsel %vm711, %v2171, %v2276
        %v2368 = vsel %vm711, %v2172, %v2278
        %v2371 = vsel %vm711, %v2173, %v2280
        %v2374 = vsel %vm711, %v2174, %v2282
        %v2377 = vsel %vm711, %v2175, %v2284
        %v2380 = vsel %vm711, %v2176, %v2286
        %v2383 = vsel %vm711, %v2177, %v2288
        %v2386 = vsel %vm711, %v2178, %v2290
        %vm2387 = vcmask 523264
        %v2389 = vsel %vm2387, %v2341, %v2308
        %v2391 = vsel %vm2387, %v2344, %v2310
        %v2393 = vsel %vm2387, %v2347, %v2312
        %v2395 = vsel %vm2387, %v2350, %v2314
        %v2397 = vsel %vm2387, %v2353, %v2316
        %v2399 = vsel %vm2387, %v2356, %v2318
        %v2401 = vsel %vm2387, %v2359, %v2320
        %v2403 = vsel %vm2387, %v2362, %v2322
        %v2405 = vsel %vm2387, %v2365, %v2324
        %v2407 = vsel %vm2387, %v2368, %v2326
        %v2409 = vsel %vm2387, %v2371, %v2328
        %v2411 = vsel %vm2387, %v2374, %v2330
        %v2413 = vsel %vm2387, %v2377, %v2332
        %v2415 = vsel %vm2387, %v2380, %v2334
        %v2417 = vsel %vm2387, %v2383, %v2336
        %v2419 = vsel %vm2387, %v2386, %v2338
        %v2420 = vld [vmem:[%s2] sm:$0xf]
        %v2421 = vld [vmem:[%s2 + $0x4] sm:$0xf]
        %v2422 = vld [vmem:[%s2 + $0x8] sm:$0xf]
        %v2423 = vld [vmem:[%s2 + $0xc] sm:$0xf]
        %v2424 = vld [vmem:[%s2 + $0x10] sm:$0xf]
        %v2425 = vld [vmem:[%s2 + $0x14] sm:$0xf]
        %v2426 = vld [vmem:[%s2 + $0x18] sm:$0xf]
        %v2427 = vld [vmem:[%s2 + $0x1c] sm:$0xf]
        %v2428 = vld [vmem:[%s2 + $0x20] sm:$0xf]
        %v2429 = vld [vmem:[%s2 + $0x24] sm:$0xf]
        %v2430 = vld [vmem:[%s2 + $0x28] sm:$0xf]
        %v2431 = vld [vmem:[%s2 + $0x2c] sm:$0xf]
        %v2444 = vunpack.c.l.b16 %v2420
        %v2445 = vunpack.c.l.b16 %v2421
        %v2446 = vunpack.c.l.b16 %v2422
        %v2447 = vunpack.c.l.b16 %v2423
        %v2448 = vunpack.c.l.b16 %v2424
        %v2449 = vunpack.c.l.b16 %v2425
        %v2450 = vunpack.c.l.b16 %v2426
        %v2451 = vunpack.c.l.b16 %v2427
        %v2452 = vunpack.c.l.b16 %v2428
        %v2453 = vunpack.c.l.b16 %v2429
        %v2454 = vunpack.c.l.b16 %v2430
        %v2455 = vunpack.c.l.b16 %v2431
        %v2456 = vpack.c.b16 %v2445, %v2444
        %v2457 = vpack.c.b16 %v2447, %v2446
        %v2458 = vpack.c.b16 %v2449, %v2448
        %v2459 = vpack.c.b16 %v2451, %v2450
        %v2460 = vpack.c.b16 %v2453, %v2452
        %v2461 = vpack.c.b16 %v2455, %v2454
        %vm2468 = vcmask 785408
        %v2469 = vsel %vm2468, %v2389, 0
        %v2471 = vsel %vm2468, %v2391, 0
        %v2473 = vsel %vm2468, %v2393, 0
        %v2475 = vsel %vm2468, %v2395, 0
        %v2477 = vsel %vm2468, %v2397, 0
        %v2479 = vsel %vm2468, %v2399, 0
        %v2481 = vsel %vm2468, %v2401, 0
        %v2483 = vsel %vm2468, %v2403, 0
        %v2485 = vsel %vm2468, %v2405, 0
        %v2487 = vsel %vm2468, %v2407, 0
        %v2489 = vsel %vm2468, %v2409, 0
        %v2491 = vsel %vm2468, %v2411, 0
        %v2493 = vsel %vm2468, %v2413, 0
        %v2495 = vsel %vm2468, %v2415, 0
        %v2497 = vsel %vm2468, %v2417, 0
        %v2499 = vsel %vm2468, %v2419, 0
        %2501 = vmatprep.subr.bf16.mxu0 0
        %2502 = vmatpush1.bf16.msra.mxu0 %v2456
        %2503 = vmatprep.subr.bf16.mxu0 0
        %2504 = vmatpush1.bf16.msra.mxu0 %v2457
        %2505 = vmatprep.subr.bf16.mxu0 0
        %2506 = vmatpush1.bf16.msra.mxu0 %v2458
        %2507 = vmatprep.subr.bf16.mxu0 0
        %2508 = vmatpush1.bf16.msra.mxu0 %v2459
        %2509 = vmatprep.subr.bf16.mxu0 0
        %2510 = vmatpush1.bf16.msra.mxu0 %v2460
        %2511 = vmatprep.subr.bf16.mxu0 0
        %2512 = vmatpush1.bf16.msra.mxu0 %v2461
        %2513 = vmatprep.subr.bf16.mxu0 0
        %2514 = vmatpush1.bf16.msra.mxu0 0
        %2515 = vmatprep.subr.bf16.mxu0 0
        %2516 = vmatpush1.bf16.msra.mxu0 0
        %2517 = vmatprep.subr.bf16.mxu0 0
        %2518 = vmatpush1.bf16.msra.mxu0 0
        %2519 = vmatprep.subr.bf16.mxu0 0
        %2520 = vmatpush1.bf16.msra.mxu0 0
        %2521 = vmatprep.subr.bf16.mxu0 0
        %2522 = vmatpush1.bf16.msra.mxu0 0
        %2523 = vmatprep.subr.bf16.mxu0 0
        %2524 = vmatpush1.bf16.msra.mxu0 0
        %2525 = vmatprep.subr.bf16.mxu0 0
        %2526 = vmatpush1.bf16.msra.mxu0 0
        %2527 = vmatprep.subr.bf16.mxu0 0
        %2528 = vmatpush1.bf16.msra.mxu0 0
        %2529 = vmatprep.subr.bf16.mxu0 0
        %2530 = vmatpush1.bf16.msra.mxu0 0
        %2531 = vmatprep.subr.bf16.mxu0 0
        %2532 = vmatpush1.bf16.msra.mxu0 0
        %2533 = vmatprep.mubr.bf16.mxu0 0
        %2534 = vmatmul.mubr.bf16.gmra.mrb[0].mxu0 %v2469
        %v2535 = vpop.f32.mrb[0].mxu0
        %v2536 = vadd.f32 0.0, %v2535
        %v2537 = vpop.f32.mrb[0].mxu0
        %v2538 = vpop.f32.mrb[0].mxu0
        %v2539 = vadd.f32 0.0, %v2538
        %v2540 = vpop.f32.mrb[0].mxu0
        %2541 = vmatprep.mubr.bf16.mxu0 0
        %2542 = vmatmul.mubr.bf16.gmra.mrb[0].mxu0 %v2471
        %v2543 = vpop.f32.mrb[0].mxu0
        %v2544 = vadd.f32 0.0, %v2543
        %v2545 = vpop.f32.mrb[0].mxu0
        %v2546 = vpop.f32.mrb[0].mxu0
        %v2547 = vadd.f32 0.0, %v2546
        %v2548 = vpop.f32.mrb[0].mxu0
        %2549 = vmatprep.mubr.bf16.mxu0 0
        %2550 = vmatmul.mubr.bf16.gmra.mrb[0].mxu0 %v2473
        %v2551 = vpop.f32.mrb[0].mxu0
        %v2552 = vadd.f32 0.0, %v2551
        %v2553 = vpop.f32.mrb[0].mxu0
        %v2554 = vpop.f32.mrb[0].mxu0
        %v2555 = vadd.f32 0.0, %v2554
        %v2556 = vpop.f32.mrb[0].mxu0
        %2557 = vmatprep.mubr.bf16.mxu0 0
        %2558 = vmatmul.mubr.bf16.gmra.mrb[0].mxu0 %v2475
        %v2559 = vpop.f32.mrb[0].mxu0
        %v2560 = vadd.f32 0.0, %v2559
        %v2561 = vpop.f32.mrb[0].mxu0
        %v2562 = vpop.f32.mrb[0].mxu0
        %v2563 = vadd.f32 0.0, %v2562
        %v2564 = vpop.f32.mrb[0].mxu0
        %2565 = vmatprep.mubr.bf16.mxu0 0
        %2566 = vmatmul.mubr.bf16.gmra.mrb[0].mxu0 %v2477
        %v2567 = vpop.f32.mrb[0].mxu0
        %v2568 = vadd.f32 0.0, %v2567
        %v2569 = vpop.f32.mrb[0].mxu0
        %v2570 = vpop.f32.mrb[0].mxu0
        %v2571 = vadd.f32 0.0, %v2570
        %v2572 = vpop.f32.mrb[0].mxu0
        %2573 = vmatprep.mubr.bf16.mxu0 0
        %2574 = vmatmul.mubr.bf16.gmra.mrb[0].mxu0 %v2479
        %v2575 = vpop.f32.mrb[0].mxu0
        %v2576 = vadd.f32 0.0, %v2575
        %v2577 = vpop.f32.mrb[0].mxu0
        %v2578 = vpop.f32.mrb[0].mxu0
        %v2579 = vadd.f32 0.0, %v2578
        %v2580 = vpop.f32.mrb[0].mxu0
        %2581 = vmatprep.mubr.bf16.mxu0 0
        %2582 = vmatmul.mubr.bf16.gmra.mrb[0].mxu0 %v2481
        %v2583 = vpop.f32.mrb[0].mxu0
        %v2584 = vadd.f32 0.0, %v2583
        %v2585 = vpop.f32.mrb[0].mxu0
        %v2586 = vpop.f32.mrb[0].mxu0
        %v2587 = vadd.f32 0.0, %v2586
        %v2588 = vpop.f32.mrb[0].mxu0
        %2589 = vmatprep.mubr.bf16.mxu0 0
        %2590 = vmatmul.mubr.bf16.gmra.mrb[0].mxu0 %v2483
        %v2591 = vpop.f32.mrb[0].mxu0
        %v2592 = vadd.f32 0.0, %v2591
        %v2593 = vpop.f32.mrb[0].mxu0
        %v2594 = vpop.f32.mrb[0].mxu0
        %v2595 = vadd.f32 0.0, %v2594
        %v2596 = vpop.f32.mrb[0].mxu0
        %2597 = vmatprep.mubr.bf16.mxu0 0
        %2598 = vmatmul.mubr.bf16.gmra.mrb[0].mxu0 %v2485
        %v2599 = vpop.f32.mrb[0].mxu0
        %v2600 = vadd.f32 0.0, %v2599
        %v2601 = vpop.f32.mrb[0].mxu0
        %v2602 = vpop.f32.mrb[0].mxu0
        %v2603 = vadd.f32 0.0, %v2602
        %v2604 = vpop.f32.mrb[0].mxu0
        %2605 = vmatprep.mubr.bf16.mxu0 0
        %2606 = vmatmul.mubr.bf16.gmra.mrb[0].mxu0 %v2487
        %v2607 = vpop.f32.mrb[0].mxu0
        %v2608 = vadd.f32 0.0, %v2607
        %v2609 = vpop.f32.mrb[0].mxu0
        %v2610 = vpop.f32.mrb[0].mxu0
        %v2611 = vadd.f32 0.0, %v2610
        %v2612 = vpop.f32.mrb[0].mxu0
        %2613 = vmatprep.mubr.bf16.mxu0 0
        %2614 = vmatmul.mubr.bf16.gmra.mrb[0].mxu0 %v2489
        %v2615 = vpop.f32.mrb[0].mxu0
        %v2616 = vadd.f32 0.0, %v2615
        %v2617 = vpop.f32.mrb[0].mxu0
        %v2618 = vpop.f32.mrb[0].mxu0
        %v2619 = vadd.f32 0.0, %v2618
        %v2620 = vpop.f32.mrb[0].mxu0
        %2621 = vmatprep.mubr.bf16.mxu0 0
        %2622 = vmatmul.mubr.bf16.gmra.mrb[0].mxu0 %v2491
        %v2623 = vpop.f32.mrb[0].mxu0
        %v2624 = vadd.f32 0.0, %v2623
        %v2625 = vpop.f32.mrb[0].mxu0
        %v2626 = vpop.f32.mrb[0].mxu0
        %v2627 = vadd.f32 0.0, %v2626
        %v2628 = vpop.f32.mrb[0].mxu0
        %2629 = vmatprep.mubr.bf16.mxu0 0
        %2630 = vmatmul.mubr.bf16.gmra.mrb[0].mxu0 %v2493
        %v2631 = vpop.f32.mrb[0].mxu0
        %v2632 = vadd.f32 0.0, %v2631
        %v2633 = vpop.f32.mrb[0].mxu0
        %v2634 = vpop.f32.mrb[0].mxu0
        %v2635 = vadd.f32 0.0, %v2634
        %v2636 = vpop.f32.mrb[0].mxu0
        %2637 = vmatprep.mubr.bf16.mxu0 0
        %2638 = vmatmul.mubr.bf16.gmra.mrb[0].mxu0 %v2495
        %v2639 = vpop.f32.mrb[0].mxu0
        %v2640 = vadd.f32 0.0, %v2639
        %v2641 = vpop.f32.mrb[0].mxu0
        %v2642 = vpop.f32.mrb[0].mxu0
        %v2643 = vadd.f32 0.0, %v2642
        %v2644 = vpop.f32.mrb[0].mxu0
        %2645 = vmatprep.mubr.bf16.mxu0 0
        %2646 = vmatmul.mubr.bf16.gmra.mrb[0].mxu0 %v2497
        %v2647 = vpop.f32.mrb[0].mxu0
        %v2648 = vadd.f32 0.0, %v2647
        %v2649 = vpop.f32.mrb[0].mxu0
        %v2650 = vpop.f32.mrb[0].mxu0
        %v2651 = vadd.f32 0.0, %v2650
        %v2652 = vpop.f32.mrb[0].mxu0
        %2653 = vmatprep.mubr.bf16.mxu0 0
        %2654 = vmatmul.mubr.bf16.gmra.mrb[0].mxu0 %v2499
        %v2655 = vpop.f32.mrb[0].mxu0
        %v2656 = vpop.f32.mrb[0].mxu0
        %v2657 = vpop.f32.mrb[0].mxu0
        %v2658 = vpop.f32.mrb[0].mxu0
        %2659 = vdwg.mxu0
        %s2660 = scalar_lea.vmem %s2, 48
        %v2661 = vld [vmem:[%s2660] sm:$0xf]
        %v2662 = vld [vmem:[%s2660 + $0x4] sm:$0xf]
        %v2663 = vld [vmem:[%s2660 + $0x8] sm:$0xf]
        %v2664 = vld [vmem:[%s2660 + $0xc] sm:$0xf]
        %v2665 = vld [vmem:[%s2660 + $0x10] sm:$0xf]
        %v2666 = vld [vmem:[%s2660 + $0x14] sm:$0xf]
        %v2667 = vld [vmem:[%s2660 + $0x18] sm:$0xf]
        %v2668 = vld [vmem:[%s2660 + $0x1c] sm:$0xf]
        %v2669 = vld [vmem:[%s2660 + $0x20] sm:$0xf]
        %v2670 = vld [vmem:[%s2660 + $0x24] sm:$0xf]
        %v2671 = vld [vmem:[%s2660 + $0x28] sm:$0xf]
        %v2672 = vld [vmem:[%s2660 + $0x2c] sm:$0xf]
        %s2673 = scalar_lea.vmem %s2, 96
        %v2674 = vld [vmem:[%s2673] sm:$0xf]
        %v2675 = vld [vmem:[%s2673 + $0x4] sm:$0xf]
        %v2676 = vld [vmem:[%s2673 + $0x8] sm:$0xf]
        %v2677 = vld [vmem:[%s2673 + $0xc] sm:$0xf]
        %v2678 = vld [vmem:[%s2673 + $0x10] sm:$0xf]
        %v2679 = vld [vmem:[%s2673 + $0x14] sm:$0xf]
        %v2680 = vld [vmem:[%s2673 + $0x18] sm:$0xf]
        %v2681 = vld [vmem:[%s2673 + $0x1c] sm:$0xf]
        %v2682 = vld [vmem:[%s2673 + $0x20] sm:$0xf]
        %v2683 = vld [vmem:[%s2673 + $0x24] sm:$0xf]
        %v2684 = vld [vmem:[%s2673 + $0x28] sm:$0xf]
        %v2685 = vld [vmem:[%s2673 + $0x2c] sm:$0xf]
        %v2698 = vunpack.c.l.b16 %v2674
        %v2699 = vunpack.c.l.b16 %v2675
        %v2700 = vunpack.c.l.b16 %v2676
        %v2701 = vunpack.c.l.b16 %v2677
        %v2702 = vunpack.c.l.b16 %v2678
        %v2703 = vunpack.c.l.b16 %v2679
        %v2704 = vunpack.c.l.b16 %v2680
        %v2705 = vunpack.c.l.b16 %v2681
        %v2706 = vunpack.c.l.b16 %v2682
        %v2707 = vunpack.c.l.b16 %v2683
        %v2708 = vunpack.c.l.b16 %v2684
        %v2709 = vunpack.c.l.b16 %v2685
        %v2710 = vpack.c.b16 %v2699, %v2698
        %v2711 = vpack.c.b16 %v2701, %v2700
        %v2712 = vpack.c.b16 %v2703, %v2702
        %v2713 = vpack.c.b16 %v2705, %v2704
        %v2714 = vpack.c.b16 %v2707, %v2706
        %v2715 = vpack.c.b16 %v2709, %v2708
        %2722 = vmatprep.subr.bf16.mxu0 0
        %2723 = vmatpush1.bf16.msra.mxu0 %v2710
        %2724 = vmatprep.subr.bf16.mxu0 0
        %2725 = vmatpush1.bf16.msra.mxu0 %v2711
        %2726 = vmatprep.subr.bf16.mxu0 0
        %2727 = vmatpush1.bf16.msra.mxu0 %v2712
        %2728 = vmatprep.subr.bf16.mxu0 0
        %2729 = vmatpush1.bf16.msra.mxu0 %v2713
        %2730 = vmatprep.subr.bf16.mxu0 0
        %2731 = vmatpush1.bf16.msra.mxu0 %v2714
        %2732 = vmatprep.subr.bf16.mxu0 0
        %2733 = vmatpush1.bf16.msra.mxu0 %v2715
        %2734 = vmatprep.subr.bf16.mxu0 0
        %2735 = vmatpush1.bf16.msra.mxu0 0
        %2736 = vmatprep.subr.bf16.mxu0 0
        %2737 = vmatpush1.bf16.msra.mxu0 0
        %2738 = vmatprep.subr.bf16.mxu0 0
        %2739 = vmatpush1.bf16.msra.mxu0 0
        %2740 = vmatprep.subr.bf16.mxu0 0
        %2741 = vmatpush1.bf16.msra.mxu0 0
        %2742 = vmatprep.subr.bf16.mxu0 0
        %2743 = vmatpush1.bf16.msra.mxu0 0
        %2744 = vmatprep.subr.bf16.mxu0 0
        %2745 = vmatpush1.bf16.msra.mxu0 0
        %2746 = vmatprep.subr.bf16.mxu0 0
        %2747 = vmatpush1.bf16.msra.mxu0 0
        %2748 = vmatprep.subr.bf16.mxu0 0
        %2749 = vmatpush1.bf16.msra.mxu0 0
        %2750 = vmatprep.subr.bf16.mxu0 0
        %2751 = vmatpush1.bf16.msra.mxu0 0
        %2752 = vmatprep.subr.bf16.mxu0 0
        %2753 = vmatpush1.bf16.msra.mxu0 0
        %2754 = vmatprep.mubr.bf16.mxu0 0
        %2755 = vmatmul.mubr.bf16.gmra.mrb[0].mxu0 %v2469
        %v2756 = vpop.f32.mrb[0].mxu0
        %v2757 = vpop.f32.mrb[0].mxu0
        %v2758 = vpop.f32.mrb[0].mxu0
        %v2759 = vpop.f32.mrb[0].mxu0
        %2760 = vmatprep.mubr.bf16.mxu0 0
        %2761 = vmatmul.mubr.bf16.gmra.mrb[0].mxu0 %v2471
        %v2762 = vpop.f32.mrb[0].mxu0
        %v2763 = vadd.f32 0.0, %v2762
        %v2764 = vpop.f32.mrb[0].mxu0
        %v2765 = vpop.f32.mrb[0].mxu0
        %v2766 = vadd.f32 0.0, %v2765
        %v2767 = vpop.f32.mrb[0].mxu0
        %2768 = vmatprep.mubr.bf16.mxu0 0
        %2769 = vmatmul.mubr.bf16.gmra.mrb[0].mxu0 %v2473
        %v2770 = vpop.f32.mrb[0].mxu0
        %v2771 = vadd.f32 0.0, %v2770
        %v2772 = vpop.f32.mrb[0].mxu0
        %v2773 = vpop.f32.mrb[0].mxu0
        %v2774 = vadd.f32 0.0, %v2773
        %v2775 = vpop.f32.mrb[0].mxu0
        %2776 = vmatprep.mubr.bf16.mxu0 0
        %2777 = vmatmul.mubr.bf16.gmra.mrb[0].mxu0 %v2475
        %v2778 = vpop.f32.mrb[0].mxu0
        %v2779 = vadd.f32 0.0, %v2778
        %v2780 = vpop.f32.mrb[0].mxu0
        %v2781 = vpop.f32.mrb[0].mxu0
        %v2782 = vadd.f32 0.0, %v2781
        %v2783 = vpop.f32.mrb[0].mxu0
        %2784 = vmatprep.mubr.bf16.mxu0 0
        %2785 = vmatmul.mubr.bf16.gmra.mrb[0].mxu0 %v2477
        %v2786 = vpop.f32.mrb[0].mxu0
        %v2787 = vadd.f32 0.0, %v2786
        %v2788 = vpop.f32.mrb[0].mxu0
        %v2789 = vpop.f32.mrb[0].mxu0
        %v2790 = vadd.f32 0.0, %v2789
        %v2791 = vpop.f32.mrb[0].mxu0
        %2792 = vmatprep.mubr.bf16.mxu0 0
        %2793 = vmatmul.mubr.bf16.gmra.mrb[0].mxu0 %v2479
        %v2794 = vpop.f32.mrb[0].mxu0
        %v2795 = vadd.f32 0.0, %v2794
        %v2796 = vpop.f32.mrb[0].mxu0
        %v2797 = vpop.f32.mrb[0].mxu0
        %v2798 = vadd.f32 0.0, %v2797
        %v2799 = vpop.f32.mrb[0].mxu0
        %2800 = vmatprep.mubr.bf16.mxu0 0
        %2801 = vmatmul.mubr.bf16.gmra.mrb[0].mxu0 %v2481
        %v2802 = vpop.f32.mrb[0].mxu0
        %v2803 = vadd.f32 0.0, %v2802
        %v2804 = vpop.f32.mrb[0].mxu0
        %v2805 = vpop.f32.mrb[0].mxu0
        %v2806 = vadd.f32 0.0, %v2805
        %v2807 = vpop.f32.mrb[0].mxu0
        %2808 = vmatprep.mubr.bf16.mxu0 0
        %2809 = vmatmul.mubr.bf16.gmra.mrb[0].mxu0 %v2483
        %v2810 = vpop.f32.mrb[0].mxu0
        %v2811 = vadd.f32 0.0, %v2810
        %v2812 = vpop.f32.mrb[0].mxu0
        %v2813 = vpop.f32.mrb[0].mxu0
        %v2814 = vadd.f32 0.0, %v2813
        %v2815 = vpop.f32.mrb[0].mxu0
        %2816 = vmatprep.mubr.bf16.mxu0 0
        %2817 = vmatmul.mubr.bf16.gmra.mrb[0].mxu0 %v2485
        %v2818 = vpop.f32.mrb[0].mxu0
        %v2819 = vadd.f32 0.0, %v2818
        %v2820 = vpop.f32.mrb[0].mxu0
        %v2821 = vpop.f32.mrb[0].mxu0
        %v2822 = vadd.f32 0.0, %v2821
        %v2823 = vpop.f32.mrb[0].mxu0
        %2824 = vmatprep.mubr.bf16.mxu0 0
        %2825 = vmatmul.mubr.bf16.gmra.mrb[0].mxu0 %v2487
        %v2826 = vpop.f32.mrb[0].mxu0
        %v2827 = vadd.f32 0.0, %v2826
        %v2828 = vpop.f32.mrb[0].mxu0
        %v2829 = vpop.f32.mrb[0].mxu0
        %v2830 = vadd.f32 0.0, %v2829
        %v2831 = vpop.f32.mrb[0].mxu0
        %2832 = vmatprep.mubr.bf16.mxu0 0
        %2833 = vmatmul.mubr.bf16.gmra.mrb[0].mxu0 %v2489
        %v2834 = vpop.f32.mrb[0].mxu0
        %v2835 = vadd.f32 0.0, %v2834
        %v2836 = vpop.f32.mrb[0].mxu0
        %v2837 = vpop.f32.mrb[0].mxu0
        %v2838 = vadd.f32 0.0, %v2837
        %v2839 = vpop.f32.mrb[0].mxu0
        %2840 = vmatprep.mubr.bf16.mxu0 0
        %2841 = vmatmul.mubr.bf16.gmra.mrb[0].mxu0 %v2491
        %v2842 = vpop.f32.mrb[0].mxu0
        %v2843 = vadd.f32 0.0, %v2842
        %v2844 = vpop.f32.mrb[0].mxu0
        %v2845 = vpop.f32.mrb[0].mxu0
        %v2846 = vadd.f32 0.0, %v2845
        %v2847 = vpop.f32.mrb[0].mxu0
        %2848 = vmatprep.mubr.bf16.mxu0 0
        %2849 = vmatmul.mubr.bf16.gmra.mrb[0].mxu0 %v2493
        %v2850 = vpop.f32.mrb[0].mxu0
        %v2851 = vadd.f32 0.0, %v2850
        %v2852 = vpop.f32.mrb[0].mxu0
        %v2853 = vpop.f32.mrb[0].mxu0
        %v2854 = vadd.f32 0.0, %v2853
        %v2855 = vpop.f32.mrb[0].mxu0
        %2856 = vmatprep.mubr.bf16.mxu0 0
        %2857 = vmatmul.mubr.bf16.gmra.mrb[0].mxu0 %v2495
        %v2858 = vpop.f32.mrb[0].mxu0
        %v2859 = vadd.f32 0.0, %v2858
        %v2860 = vpop.f32.mrb[0].mxu0
        %v2861 = vpop.f32.mrb[0].mxu0
        %v2862 = vadd.f32 0.0, %v2861
        %v2863 = vpop.f32.mrb[0].mxu0
        %2864 = vmatprep.mubr.bf16.mxu0 0
        %2865 = vmatmul.mubr.bf16.gmra.mrb[0].mxu0 %v2497
        %v2866 = vpop.f32.mrb[0].mxu0
        %v2867 = vadd.f32 0.0, %v2866
        %v2868 = vpop.f32.mrb[0].mxu0
        %v2869 = vpop.f32.mrb[0].mxu0
        %v2870 = vadd.f32 0.0, %v2869
        %v2871 = vpop.f32.mrb[0].mxu0
        %2872 = vmatprep.mubr.bf16.mxu0 0
        %2873 = vmatmul.mubr.bf16.gmra.mrb[0].mxu0 %v2499
        %v2874 = vpop.f32.mrb[0].mxu0
        %v2875 = vadd.f32 0.0, %v2874
        %v2876 = vpop.f32.mrb[0].mxu0
        %v2877 = vpop.f32.mrb[0].mxu0
        %v2878 = vadd.f32 0.0, %v2877
        %v2879 = vpop.f32.mrb[0].mxu0
        %2880 = vdwg.mxu0
        %v2881 = vlaneseq
        %v2882 = vshrl.u32 %v2881, 7
        %v2883 = vsub.s32 3, %v2882
        %v2884 = vrot.slane %v287, %v2883
        %v2897 = vunpack.c.l.b16 %v2661
        %v2898 = vunpack.c.l.b16 %v2662
        %v2899 = vunpack.c.l.b16 %v2663
        %v2900 = vunpack.c.l.b16 %v2664
        %v2901 = vunpack.c.l.b16 %v2665
        %v2902 = vunpack.c.l.b16 %v2666
        %v2903 = vunpack.c.l.b16 %v2667
        %v2904 = vunpack.c.l.b16 %v2668
        %v2905 = vunpack.c.l.b16 %v2669
        %v2906 = vunpack.c.l.b16 %v2670
        %v2907 = vunpack.c.l.b16 %v2671
        %v2908 = vunpack.c.l.b16 %v2672
        %v2909 = vpack.c.b16 %v2898, %v2897
        %v2910 = vpack.c.b16 %v2900, %v2899
        %v2911 = vpack.c.b16 %v2902, %v2901
        %v2912 = vpack.c.b16 %v2904, %v2903
        %v2913 = vpack.c.b16 %v2906, %v2905
        %v2914 = vpack.c.b16 %v2908, %v2907
        %2921 = vmatprep.subr.bf16.mxu0 0
        %2922 = vmatpush1.bf16.msra.mxu0 %v2909
        %2923 = vmatprep.subr.bf16.mxu0 0
        %2924 = vmatpush1.bf16.msra.mxu0 %v2910
        %2925 = vmatprep.subr.bf16.mxu0 0
        %2926 = vmatpush1.bf16.msra.mxu0 %v2911
        %2927 = vmatprep.subr.bf16.mxu0 0
        %2928 = vmatpush1.bf16.msra.mxu0 %v2912
        %2929 = vmatprep.subr.bf16.mxu0 0
        %2930 = vmatpush1.bf16.msra.mxu0 %v2913
        %2931 = vmatprep.subr.bf16.mxu0 0
        %2932 = vmatpush1.bf16.msra.mxu0 %v2914
        %2933 = vmatprep.subr.bf16.mxu0 0
        %2934 = vmatpush1.bf16.msra.mxu0 0
        %2935 = vmatprep.subr.bf16.mxu0 0
        %2936 = vmatpush1.bf16.msra.mxu0 0
        %2937 = vmatprep.subr.bf16.mxu0 0
        %2938 = vmatpush1.bf16.msra.mxu0 0
        %2939 = vmatprep.subr.bf16.mxu0 0
        %2940 = vmatpush1.bf16.msra.mxu0 0
        %2941 = vmatprep.subr.bf16.mxu0 0
        %2942 = vmatpush1.bf16.msra.mxu0 0
        %2943 = vmatprep.subr.bf16.mxu0 0
        %2944 = vmatpush1.bf16.msra.mxu0 0
        %2945 = vmatprep.subr.bf16.mxu0 0
        %2946 = vmatpush1.bf16.msra.mxu0 0
        %2947 = vmatprep.subr.bf16.mxu0 0
        %2948 = vmatpush1.bf16.msra.mxu0 0
        %2949 = vmatprep.subr.bf16.mxu0 0
        %2950 = vmatpush1.bf16.msra.mxu0 0
        %2951 = vmatprep.subr.bf16.mxu0 0
        %2952 = vmatpush1.bf16.msra.mxu0 0
        %2953 = vmatprep.mubr.bf16.mxu0 0
        %2954 = vmatmul.mubr.bf16.gmra.mrb[0].mxu0 %v2469
        %v2955 = vpop.f32.mrb[0].mxu0
        %v2956 = vadd.f32 %v2884, %v2955
        %v2957 = vpop.f32.mrb[0].mxu0
        %v2958 = vpop.f32.mrb[0].mxu0
        %v2959 = vadd.f32 %v2884, %v2958
        %v2960 = vpop.f32.mrb[0].mxu0
        %2961 = vmatprep.mubr.bf16.mxu0 0
        %2962 = vmatmul.mubr.bf16.gmra.mrb[0].mxu0 %v2471
        %v2963 = vpop.f32.mrb[0].mxu0
        %v2964 = vadd.f32 %v2884, %v2963
        %v2965 = vpop.f32.mrb[0].mxu0
        %v2966 = vpop.f32.mrb[0].mxu0
        %v2967 = vadd.f32 %v2884, %v2966
        %v2968 = vpop.f32.mrb[0].mxu0
        %2969 = vmatprep.mubr.bf16.mxu0 0
        %2970 = vmatmul.mubr.bf16.gmra.mrb[0].mxu0 %v2473
        %v2971 = vpop.f32.mrb[0].mxu0
        %v2972 = vadd.f32 %v2884, %v2971
        %v2973 = vpop.f32.mrb[0].mxu0
        %v2974 = vpop.f32.mrb[0].mxu0
        %v2975 = vadd.f32 %v2884, %v2974
        %v2976 = vpop.f32.mrb[0].mxu0
        %2977 = vmatprep.mubr.bf16.mxu0 0
        %2978 = vmatmul.mubr.bf16.gmra.mrb[0].mxu0 %v2475
        %v2979 = vpop.f32.mrb[0].mxu0
        %v2980 = vadd.f32 %v2884, %v2979
        %v2981 = vpop.f32.mrb[0].mxu0
        %v2982 = vpop.f32.mrb[0].mxu0
        %v2983 = vadd.f32 %v2884, %v2982
        %v2984 = vpop.f32.mrb[0].mxu0
        %2985 = vmatprep.mubr.bf16.mxu0 0
        %2986 = vmatmul.mubr.bf16.gmra.mrb[0].mxu0 %v2477
        %v2987 = vpop.f32.mrb[0].mxu0
        %v2988 = vadd.f32 %v2884, %v2987
        %v2989 = vpop.f32.mrb[0].mxu0
        %v2990 = vpop.f32.mrb[0].mxu0
        %v2991 = vadd.f32 %v2884, %v2990
        %v2992 = vpop.f32.mrb[0].mxu0
        %2993 = vmatprep.mubr.bf16.mxu0 0
        %2994 = vmatmul.mubr.bf16.gmra.mrb[0].mxu0 %v2479
        %v2995 = vpop.f32.mrb[0].mxu0
        %v2996 = vadd.f32 %v2884, %v2995
        %v2997 = vpop.f32.mrb[0].mxu0
        %v2998 = vpop.f32.mrb[0].mxu0
        %v2999 = vadd.f32 %v2884, %v2998
        %v3000 = vpop.f32.mrb[0].mxu0
        %3001 = vmatprep.mubr.bf16.mxu0 0
        %3002 = vmatmul.mubr.bf16.gmra.mrb[0].mxu0 %v2481
        %v3003 = vpop.f32.mrb[0].mxu0
        %v3004 = vadd.f32 %v2884, %v3003
        %v3005 = vpop.f32.mrb[0].mxu0
        %v3006 = vpop.f32.mrb[0].mxu0
        %v3007 = vadd.f32 %v2884, %v3006
        %v3008 = vpop.f32.mrb[0].mxu0
        %3009 = vmatprep.mubr.bf16.mxu0 0
        %3010 = vmatmul.mubr.bf16.gmra.mrb[0].mxu0 %v2483
        %v3011 = vpop.f32.mrb[0].mxu0
        %v3012 = vadd.f32 %v2884, %v3011
        %v3013 = vpop.f32.mrb[0].mxu0
        %v3014 = vpop.f32.mrb[0].mxu0
        %v3015 = vadd.f32 %v2884, %v3014
        %v3016 = vpop.f32.mrb[0].mxu0
        %3017 = vmatprep.mubr.bf16.mxu0 0
        %3018 = vmatmul.mubr.bf16.gmra.mrb[0].mxu0 %v2485
        %v3019 = vpop.f32.mrb[0].mxu0
        %v3020 = vadd.f32 %v2884, %v3019
        %v3021 = vpop.f32.mrb[0].mxu0
        %v3022 = vpop.f32.mrb[0].mxu0
        %v3023 = vadd.f32 %v2884, %v3022
        %v3024 = vpop.f32.mrb[0].mxu0
        %3025 = vmatprep.mubr.bf16.mxu0 0
        %3026 = vmatmul.mubr.bf16.gmra.mrb[0].mxu0 %v2487
        %v3027 = vpop.f32.mrb[0].mxu0
        %v3028 = vadd.f32 %v2884, %v3027
        %v3029 = vpop.f32.mrb[0].mxu0
        %v3030 = vpop.f32.mrb[0].mxu0
        %v3031 = vadd.f32 %v2884, %v3030
        %v3032 = vpop.f32.mrb[0].mxu0
        %3033 = vmatprep.mubr.bf16.mxu0 0
        %3034 = vmatmul.mubr.bf16.gmra.mrb[0].mxu0 %v2489
        %v3035 = vpop.f32.mrb[0].mxu0
        %v3036 = vadd.f32 %v2884, %v3035
        %v3037 = vpop.f32.mrb[0].mxu0
        %v3038 = vpop.f32.mrb[0].mxu0
        %v3039 = vadd.f32 %v2884, %v3038
        %v3040 = vpop.f32.mrb[0].mxu0
        %3041 = vmatprep.mubr.bf16.mxu0 0
        %3042 = vmatmul.mubr.bf16.gmra.mrb[0].mxu0 %v2491
        %v3043 = vpop.f32.mrb[0].mxu0
        %v3044 = vadd.f32 %v2884, %v3043
        %v3045 = vpop.f32.mrb[0].mxu0
        %v3046 = vpop.f32.mrb[0].mxu0
        %v3047 = vadd.f32 %v2884, %v3046
        %v3048 = vpop.f32.mrb[0].mxu0
        %3049 = vmatprep.mubr.bf16.mxu0 0
        %3050 = vmatmul.mubr.bf16.gmra.mrb[0].mxu0 %v2493
        %v3051 = vpop.f32.mrb[0].mxu0
        %v3052 = vadd.f32 %v2884, %v3051
        %v3053 = vpop.f32.mrb[0].mxu0
        %v3054 = vpop.f32.mrb[0].mxu0
        %v3055 = vadd.f32 %v2884, %v3054
        %v3056 = vpop.f32.mrb[0].mxu0
        %3057 = vmatprep.mubr.bf16.mxu0 0
        %3058 = vmatmul.mubr.bf16.gmra.mrb[0].mxu0 %v2495
        %v3059 = vpop.f32.mrb[0].mxu0
        %v3060 = vadd.f32 %v2884, %v3059
        %v3061 = vpop.f32.mrb[0].mxu0
        %v3062 = vpop.f32.mrb[0].mxu0
        %v3063 = vadd.f32 %v2884, %v3062
        %v3064 = vpop.f32.mrb[0].mxu0
        %3065 = vmatprep.mubr.bf16.mxu0 0
        %3066 = vmatmul.mubr.bf16.gmra.mrb[0].mxu0 %v2497
        %v3067 = vpop.f32.mrb[0].mxu0
        %v3068 = vadd.f32 %v2884, %v3067
        %v3069 = vpop.f32.mrb[0].mxu0
        %v3070 = vpop.f32.mrb[0].mxu0
        %v3071 = vadd.f32 %v2884, %v3070
        %v3072 = vpop.f32.mrb[0].mxu0
        %3073 = vmatprep.mubr.bf16.mxu0 0
        %3074 = vmatmul.mubr.bf16.gmra.mrb[0].mxu0 %v2499
        %v3075 = vpop.f32.mrb[0].mxu0
        %v3076 = vadd.f32 %v2884, %v3075
        %v3077 = vpop.f32.mrb[0].mxu0
        %v3078 = vpop.f32.mrb[0].mxu0
        %v3079 = vadd.f32 %v2884, %v3078
        %v3080 = vpop.f32.mrb[0].mxu0
        %3081 = vdwg.mxu0
        %v3082 = vadd.f32 %v2956, 0.0
        %v3083 = vadd.f32 %v2959, 0.0
        %v3084 = vadd.f32 %v2964, %v2536
        %v3085 = vadd.f32 %v2967, %v2539
        %v3086 = vadd.f32 %v2972, %v2544
        %v3087 = vadd.f32 %v2975, %v2547
        %v3088 = vadd.f32 %v2980, %v2552
        %v3089 = vadd.f32 %v2983, %v2555
        %v3090 = vadd.f32 %v2988, %v2560
        %v3091 = vadd.f32 %v2991, %v2563
        %v3092 = vadd.f32 %v2996, %v2568
        %v3093 = vadd.f32 %v2999, %v2571
        %v3094 = vadd.f32 %v3004, %v2576
        %v3095 = vadd.f32 %v3007, %v2579
        %v3096 = vadd.f32 %v3012, %v2584
        %v3097 = vadd.f32 %v3015, %v2587
        %v3098 = vadd.f32 %v3020, %v2592
        %v3099 = vadd.f32 %v3023, %v2595
        %v3100 = vadd.f32 %v3028, %v2600
        %v3101 = vadd.f32 %v3031, %v2603
        %v3102 = vadd.f32 %v3036, %v2608
        %v3103 = vadd.f32 %v3039, %v2611
        %v3104 = vadd.f32 %v3044, %v2616
        %v3105 = vadd.f32 %v3047, %v2619
        %v3106 = vadd.f32 %v3052, %v2624
        %v3107 = vadd.f32 %v3055, %v2627
        %v3108 = vadd.f32 %v3060, %v2632
        %v3109 = vadd.f32 %v3063, %v2635
        %v3110 = vadd.f32 %v3068, %v2640
        %v3111 = vadd.f32 %v3071, %v2643
        %v3112 = vadd.f32 %v3076, %v2648
        %v3113 = vadd.f32 %v3079, %v2651
        %v3114 = vadd.f32 %v3082, %v2763
        %v3115 = vadd.f32 %v3083, %v2766
        %v3116 = vadd.f32 %v3084, %v2771
        %v3117 = vadd.f32 %v3085, %v2774
        %v3118 = vadd.f32 %v3086, %v2779
        %v3119 = vadd.f32 %v3087, %v2782
        %v3120 = vadd.f32 %v3088, %v2787
        %v3121 = vadd.f32 %v3089, %v2790
        %v3122 = vadd.f32 %v3090, %v2795
        %v3123 = vadd.f32 %v3091, %v2798
        %v3124 = vadd.f32 %v3092, %v2803
        %v3125 = vadd.f32 %v3093, %v2806
        %v3126 = vadd.f32 %v3094, %v2811
        %v3127 = vadd.f32 %v3095, %v2814
        %v3128 = vadd.f32 %v3096, %v2819
        %v3129 = vadd.f32 %v3097, %v2822
        %v3130 = vadd.f32 %v3098, %v2827
        %v3131 = vadd.f32 %v3099, %v2830
        %v3132 = vadd.f32 %v3100, %v2835
        %v3133 = vadd.f32 %v3101, %v2838
        %v3134 = vadd.f32 %v3102, %v2843
        %v3135 = vadd.f32 %v3103, %v2846
        %v3136 = vadd.f32 %v3104, %v2851
        %v3137 = vadd.f32 %v3105, %v2854
        %v3138 = vadd.f32 %v3106, %v2859
        %v3139 = vadd.f32 %v3107, %v2862
        %v3140 = vadd.f32 %v3108, %v2867
        %v3141 = vadd.f32 %v3109, %v2870
        %v3142 = vadd.f32 %v3110, %v2875
        %v3143 = vadd.f32 %v3111, %v2878
        %v3144 = vadd.f32 %v3112, 0.0
        %v3145 = vadd.f32 %v3113, 0.0
        %v3146 = vsel %vm711, %v3114, 0.0
        %v3147 = vsel %vm711, %v3115, 0.0
        %v3148 = vadd.f32 %v3146, %v3147
        %v3149 = vsel %vm711, %v3116, 0.0
        %v3150 = vadd.f32 %v3148, %v3149
        %v3151 = vsel %vm711, %v3117, 0.0
        %v3152 = vadd.f32 %v3150, %v3151
        %v3153 = vsel %vm711, %v3118, 0.0
        %v3154 = vadd.f32 %v3152, %v3153
        %v3155 = vsel %vm711, %v3119, 0.0
        %v3156 = vadd.f32 %v3154, %v3155
        %v3157 = vsel %vm711, %v3120, 0.0
        %v3158 = vadd.f32 %v3156, %v3157
        %v3159 = vsel %vm711, %v3121, 0.0
        %v3160 = vadd.f32 %v3158, %v3159
        %v3161 = vsel %vm711, %v3122, 0.0
        %v3162 = vadd.f32 %v3160, %v3161
        %v3163 = vsel %vm711, %v3123, 0.0
        %v3164 = vadd.f32 %v3162, %v3163
        %v3165 = vsel %vm711, %v3124, 0.0
        %v3166 = vadd.f32 %v3164, %v3165
        %v3167 = vsel %vm711, %v3125, 0.0
        %v3168 = vadd.f32 %v3166, %v3167
        %v3169 = vsel %vm711, %v3126, 0.0
        %v3170 = vadd.f32 %v3168, %v3169
        %v3171 = vsel %vm711, %v3127, 0.0
        %v3172 = vadd.f32 %v3170, %v3171
        %v3173 = vsel %vm711, %v3128, 0.0
        %v3174 = vadd.f32 %v3172, %v3173
        %v3175 = vsel %vm711, %v3129, 0.0
        %v3176 = vadd.f32 %v3174, %v3175
        %v3177 = vsel %vm711, %v3130, 0.0
        %v3178 = vadd.f32 %v3176, %v3177
        %v3179 = vsel %vm711, %v3131, 0.0
        %v3180 = vadd.f32 %v3178, %v3179
        %v3181 = vsel %vm711, %v3132, 0.0
        %v3182 = vadd.f32 %v3180, %v3181
        %v3183 = vsel %vm711, %v3133, 0.0
        %v3184 = vadd.f32 %v3182, %v3183
        %v3185 = vsel %vm711, %v3134, 0.0
        %v3186 = vadd.f32 %v3184, %v3185
        %v3187 = vsel %vm711, %v3135, 0.0
        %v3188 = vadd.f32 %v3186, %v3187
        %v3189 = vsel %vm711, %v3136, 0.0
        %v3190 = vadd.f32 %v3188, %v3189
        %v3191 = vsel %vm711, %v3137, 0.0
        %v3192 = vadd.f32 %v3190, %v3191
        %v3193 = vsel %vm711, %v3138, 0.0
        %v3194 = vadd.f32 %v3192, %v3193
        %v3195 = vsel %vm711, %v3139, 0.0
        %v3196 = vadd.f32 %v3194, %v3195
        %v3197 = vsel %vm711, %v3140, 0.0
        %v3198 = vadd.f32 %v3196, %v3197
        %v3199 = vsel %vm711, %v3141, 0.0
        %v3200 = vadd.f32 %v3198, %v3199
        %v3201 = vsel %vm711, %v3142, 0.0
        %v3202 = vadd.f32 %v3200, %v3201
        %v3203 = vsel %vm711, %v3143, 0.0
        %v3204 = vadd.f32 %v3202, %v3203
        %v3205 = vsel %vm711, %v3144, 0.0
        %v3206 = vadd.f32 %v3204, %v3205
        %v3207 = vsel %vm711, %v3145, 0.0
        %v3208 = vadd.f32 %v3206, %v3207
        %v3209 = vrot.slane %v3208, 4
        %v3210 = vadd.f32 %v3208, %v3209
        %v3211 = vrot.slane %v3210, 2
        %v3212 = vadd.f32 %v3210, %v3211
        %v3213 = vrot.slane %v3212, 1
        %v3214 = vadd.f32 %v3212, %v3213
        %v3216 = vsel %vm711, %v3214, 0
        %3218 = vmatprep.subr.mxu0 0.0
        %3219 = vmatpush1.msra.mxu0 %v283
        %3220 = vmatprep.subr.mxu0 0.0
        %3221 = vmatpush1.msra.mxu0 %v284
        %3222 = vmatprep.subr.mxu0 0.0
        %3223 = vmatpush1.msra.mxu0 %v285
        %3224 = vmatprep.subr.mxu0 0.0
        %3225 = vmatpush1.msra.mxu0 %v286
        %3226 = vmatprep.subr.mxu0 0.0
        %3227 = vmatpush1.msra.mxu0 0.0
        %3228 = vmatprep.subr.mxu0 0.0
        %3229 = vmatpush1.msra.mxu0 0.0
        %3230 = vmatprep.subr.mxu0 0.0
        %3231 = vmatpush1.msra.mxu0 0.0
        %3232 = vmatprep.subr.mxu0 0.0
        %3233 = vmatpush1.msra.mxu0 0.0
        %3234 = vmatprep.subr.mxu0 0.0
        %3235 = vmatpush1.msra.mxu0 0.0
        %3236 = vmatprep.subr.mxu0 0.0
        %3237 = vmatpush1.msra.mxu0 0.0
        %3238 = vmatprep.subr.mxu0 0.0
        %3239 = vmatpush1.msra.mxu0 0.0
        %3240 = vmatprep.subr.mxu0 0.0
        %3241 = vmatpush1.msra.mxu0 0.0
        %3242 = vmatprep.subr.mxu0 0.0
        %3243 = vmatpush1.msra.mxu0 0.0
        %3244 = vmatprep.subr.mxu0 0.0
        %3245 = vmatpush1.msra.mxu0 0.0
        %3246 = vmatprep.subr.mxu0 0.0
        %3247 = vmatpush1.msra.mxu0 0.0
        %3248 = vmatprep.subr.mxu0 0.0
        %3249 = vmatpush1.msra.mxu0 0.0
        %3250 = vmatprep.subr.mxu0 0.0
        %3251 = vmatpush1.msra.mxu0 0.0
        %3252 = vmatprep.subr.mxu0 0.0
        %3253 = vmatpush1.msra.mxu0 0.0
        %3254 = vmatprep.subr.mxu0 0.0
        %3255 = vmatpush1.msra.mxu0 0.0
        %3256 = vmatprep.subr.mxu0 0.0
        %3257 = vmatpush1.msra.mxu0 0.0
        %3258 = vmatprep.subr.mxu0 0.0
        %3259 = vmatpush1.msra.mxu0 0.0
        %3260 = vmatprep.subr.mxu0 0.0
        %3261 = vmatpush1.msra.mxu0 0.0
        %3262 = vmatprep.subr.mxu0 0.0
        %3263 = vmatpush1.msra.mxu0 0.0
        %3264 = vmatprep.subr.mxu0 0.0
        %3265 = vmatpush1.msra.mxu0 0.0
        %3266 = vmatprep.subr.mxu0 0.0
        %3267 = vmatpush1.msra.mxu0 0.0
        %3268 = vmatprep.subr.mxu0 0.0
        %3269 = vmatpush1.msra.mxu0 0.0
        %3270 = vmatprep.subr.mxu0 0.0
        %3271 = vmatpush1.msra.mxu0 0.0
        %3272 = vmatprep.subr.mxu0 0.0
        %3273 = vmatpush1.msra.mxu0 0.0
        %3274 = vmatprep.subr.mxu0 0.0
        %3275 = vmatpush1.msra.mxu0 0.0
        %3276 = vmatprep.subr.mxu0 0.0
        %3277 = vmatpush1.msra.mxu0 0.0
        %3278 = vmatprep.subr.mxu0 0.0
        %3279 = vmatpush1.msra.mxu0 0.0
        %3280 = vmatprep.subr.mxu0 0.0
        %3281 = vmatpush1.msra.mxu0 0.0
        %3282 = vmatprep.mubr.f32.mxu0 0.0
        %3283 = vmatmul.mubr.f32.gmra.mrb[0].mxu0 %v3216
        %v3284 = vpop.f32.mrb[0].mxu0
        %v3285 = vadd.f32 0.0, %v3284
        %v3286 = vpop.f32.mrb[0].mxu0
        %3287 = vdwg.mxu0
        %v3288 = vlaneseq
        %v3289 = vshrl.u32 %v3288, 7
        %v3290 = vsub.s32 0, %v3289
        %v3291 = vrot.slane %v3285, %v3290
        %v3292 = vsub.f32 %v3114, %v3291
        %v3293 = vsub.f32 %v3115, %v3291
        %v3294 = vsub.f32 %v3116, %v3291
        %v3295 = vsub.f32 %v3117, %v3291
        %v3296 = vsub.f32 %v3118, %v3291
        %v3297 = vsub.f32 %v3119, %v3291
        %v3298 = vsub.f32 %v3120, %v3291
        %v3299 = vsub.f32 %v3121, %v3291
        %v3300 = vsub.f32 %v3122, %v3291
        %v3301 = vsub.f32 %v3123, %v3291
        %v3302 = vsub.f32 %v3124, %v3291
        %v3303 = vsub.f32 %v3125, %v3291
        %v3304 = vsub.f32 %v3126, %v3291
        %v3305 = vsub.f32 %v3127, %v3291
        %v3306 = vsub.f32 %v3128, %v3291
        %v3307 = vsub.f32 %v3129, %v3291
        %v3308 = vsub.f32 %v3130, %v3291
        %v3309 = vsub.f32 %v3131, %v3291
        %v3310 = vsub.f32 %v3132, %v3291
        %v3311 = vsub.f32 %v3133, %v3291
        %v3312 = vsub.f32 %v3134, %v3291
        %v3313 = vsub.f32 %v3135, %v3291
        %v3314 = vsub.f32 %v3136, %v3291
        %v3315 = vsub.f32 %v3137, %v3291
        %v3316 = vsub.f32 %v3138, %v3291
        %v3317 = vsub.f32 %v3139, %v3291
        %v3318 = vsub.f32 %v3140, %v3291
        %v3319 = vsub.f32 %v3141, %v3291
        %v3320 = vsub.f32 %v3142, %v3291
        %v3321 = vsub.f32 %v3143, %v3291
        %v3322 = vsub.f32 %v3144, %v3291
        %v3323 = vsub.f32 %v3145, %v3291
        %v3324 = vmul.f32 %v3292, %v3292
        %v3325 = vmul.f32 %v3293, %v3293
        %v3326 = vmul.f32 %v3294, %v3294
        %v3327 = vmul.f32 %v3295, %v3295
        %v3328 = vmul.f32 %v3296, %v3296
        %v3329 = vmul.f32 %v3297, %v3297
        %v3330 = vmul.f32 %v3298, %v3298
        %v3331 = vmul.f32 %v3299, %v3299
        %v3332 = vmul.f32 %v3300, %v3300
        %v3333 = vmul.f32 %v3301, %v3301
        %v3334 = vmul.f32 %v3302, %v3302
        %v3335 = vmul.f32 %v3303, %v3303
        %v3336 = vmul.f32 %v3304, %v3304
        %v3337 = vmul.f32 %v3305, %v3305
        %v3338 = vmul.f32 %v3306, %v3306
        %v3339 = vmul.f32 %v3307, %v3307
        %v3340 = vmul.f32 %v3308, %v3308
        %v3341 = vmul.f32 %v3309, %v3309
        %v3342 = vmul.f32 %v3310, %v3310
        %v3343 = vmul.f32 %v3311, %v3311
        %v3344 = vmul.f32 %v3312, %v3312
        %v3345 = vmul.f32 %v3313, %v3313
        %v3346 = vmul.f32 %v3314, %v3314
        %v3347 = vmul.f32 %v3315, %v3315
        %v3348 = vmul.f32 %v3316, %v3316
        %v3349 = vmul.f32 %v3317, %v3317
        %v3350 = vmul.f32 %v3318, %v3318
        %v3351 = vmul.f32 %v3319, %v3319
        %v3352 = vmul.f32 %v3320, %v3320
        %v3353 = vmul.f32 %v3321, %v3321
        %v3354 = vmul.f32 %v3322, %v3322
        %v3355 = vmul.f32 %v3323, %v3323
        %v3356 = vsel %vm711, %v3324, 0.0
        %v3357 = vsel %vm711, %v3325, 0.0
        %v3358 = vadd.f32 %v3356, %v3357
        %v3359 = vsel %vm711, %v3326, 0.0
        %v3360 = vadd.f32 %v3358, %v3359
        %v3361 = vsel %vm711, %v3327, 0.0
        %v3362 = vadd.f32 %v3360, %v3361
        %v3363 = vsel %vm711, %v3328, 0.0
        %v3364 = vadd.f32 %v3362, %v3363
        %v3365 = vsel %vm711, %v3329, 0.0
        %v3366 = vadd.f32 %v3364, %v3365
        %v3367 = vsel %vm711, %v3330, 0.0
        %v3368 = vadd.f32 %v3366, %v3367
        %v3369 = vsel %vm711, %v3331, 0.0
        %v3370 = vadd.f32 %v3368, %v3369
        %v3371 = vsel %vm711, %v3332, 0.0
        %v3372 = vadd.f32 %v3370, %v3371
        %v3373 = vsel %vm711, %v3333, 0.0
        %v3374 = vadd.f32 %v3372, %v3373
        %v3375 = vsel %vm711, %v3334, 0.0
        %v3376 = vadd.f32 %v3374, %v3375
        %v3377 = vsel %vm711, %v3335, 0.0
        %v3378 = vadd.f32 %v3376, %v3377
        %v3379 = vsel %vm711, %v3336, 0.0
        %v3380 = vadd.f32 %v3378, %v3379
        %v3381 = vsel %vm711, %v3337, 0.0
        %v3382 = vadd.f32 %v3380, %v3381
        %v3383 = vsel %vm711, %v3338, 0.0
        %v3384 = vadd.f32 %v3382, %v3383
        %v3385 = vsel %vm711, %v3339, 0.0
        %v3386 = vadd.f32 %v3384, %v3385
        %v3387 = vsel %vm711, %v3340, 0.0
        %v3388 = vadd.f32 %v3386, %v3387
        %v3389 = vsel %vm711, %v3341, 0.0
        %v3390 = vadd.f32 %v3388, %v3389
        %v3391 = vsel %vm711, %v3342, 0.0
        %v3392 = vadd.f32 %v3390, %v3391
        %v3393 = vsel %vm711, %v3343, 0.0
        %v3394 = vadd.f32 %v3392, %v3393
        %v3395 = vsel %vm711, %v3344, 0.0
        %v3396 = vadd.f32 %v3394, %v3395
        %v3397 = vsel %vm711, %v3345, 0.0
        %v3398 = vadd.f32 %v3396, %v3397
        %v3399 = vsel %vm711, %v3346, 0.0
        %v3400 = vadd.f32 %v3398, %v3399
        %v3401 = vsel %vm711, %v3347, 0.0
        %v3402 = vadd.f32 %v3400, %v3401
        %v3403 = vsel %vm711, %v3348, 0.0
        %v3404 = vadd.f32 %v3402, %v3403
        %v3405 = vsel %vm711, %v3349, 0.0
        %v3406 = vadd.f32 %v3404, %v3405
        %v3407 = vsel %vm711, %v3350, 0.0
        %v3408 = vadd.f32 %v3406, %v3407
        %v3409 = vsel %vm711, %v3351, 0.0
        %v3410 = vadd.f32 %v3408, %v3409
        %v3411 = vsel %vm711, %v3352, 0.0
        %v3412 = vadd.f32 %v3410, %v3411
        %v3413 = vsel %vm711, %v3353, 0.0
        %v3414 = vadd.f32 %v3412, %v3413
        %v3415 = vsel %vm711, %v3354, 0.0
        %v3416 = vadd.f32 %v3414, %v3415
        %v3417 = vsel %vm711, %v3355, 0.0
        %v3418 = vadd.f32 %v3416, %v3417
        %v3419 = vrot.slane %v3418, 4
        %v3420 = vadd.f32 %v3418, %v3419
        %v3421 = vrot.slane %v3420, 2
        %v3422 = vadd.f32 %v3420, %v3421
        %v3423 = vrot.slane %v3422, 1
        %v3424 = vadd.f32 %v3422, %v3423
        %v3426 = vsel %vm711, %v3424, 0
        %3428 = vmatprep.subr.mxu0 0.0
        %3429 = vmatpush1.msra.mxu0 %v283
        %3430 = vmatprep.subr.mxu0 0.0
        %3431 = vmatpush1.msra.mxu0 %v284
        %3432 = vmatprep.subr.mxu0 0.0
        %3433 = vmatpush1.msra.mxu0 %v285
        %3434 = vmatprep.subr.mxu0 0.0
        %3435 = vmatpush1.msra.mxu0 %v286
        %3436 = vmatprep.subr.mxu0 0.0
        %3437 = vmatpush1.msra.mxu0 0.0
        %3438 = vmatprep.subr.mxu0 0.0
        %3439 = vmatpush1.msra.mxu0 0.0
        %3440 = vmatprep.subr.mxu0 0.0
        %3441 = vmatpush1.msra.mxu0 0.0
        %3442 = vmatprep.subr.mxu0 0.0
        %3443 = vmatpush1.msra.mxu0 0.0
        %3444 = vmatprep.subr.mxu0 0.0
        %3445 = vmatpush1.msra.mxu0 0.0
        %3446 = vmatprep.subr.mxu0 0.0
        %3447 = vmatpush1.msra.mxu0 0.0
        %3448 = vmatprep.subr.mxu0 0.0
        %3449 = vmatpush1.msra.mxu0 0.0
        %3450 = vmatprep.subr.mxu0 0.0
        %3451 = vmatpush1.msra.mxu0 0.0
        %3452 = vmatprep.subr.mxu0 0.0
        %3453 = vmatpush1.msra.mxu0 0.0
        %3454 = vmatprep.subr.mxu0 0.0
        %3455 = vmatpush1.msra.mxu0 0.0
        %3456 = vmatprep.subr.mxu0 0.0
        %3457 = vmatpush1.msra.mxu0 0.0
        %3458 = vmatprep.subr.mxu0 0.0
        %3459 = vmatpush1.msra.mxu0 0.0
        %3460 = vmatprep.subr.mxu0 0.0
        %3461 = vmatpush1.msra.mxu0 0.0
        %3462 = vmatprep.subr.mxu0 0.0
        %3463 = vmatpush1.msra.mxu0 0.0
        %3464 = vmatprep.subr.mxu0 0.0
        %3465 = vmatpush1.msra.mxu0 0.0
        %3466 = vmatprep.subr.mxu0 0.0
        %3467 = vmatpush1.msra.mxu0 0.0
        %3468 = vmatprep.subr.mxu0 0.0
        %3469 = vmatpush1.msra.mxu0 0.0
        %3470 = vmatprep.subr.mxu0 0.0
        %3471 = vmatpush1.msra.mxu0 0.0
        %3472 = vmatprep.subr.mxu0 0.0
        %3473 = vmatpush1.msra.mxu0 0.0
        %3474 = vmatprep.subr.mxu0 0.0
        %3475 = vmatpush1.msra.mxu0 0.0
        %3476 = vmatprep.subr.mxu0 0.0
        %3477 = vmatpush1.msra.mxu0 0.0
        %3478 = vmatprep.subr.mxu0 0.0
        %3479 = vmatpush1.msra.mxu0 0.0
        %3480 = vmatprep.subr.mxu0 0.0
        %3481 = vmatpush1.msra.mxu0 0.0
        %3482 = vmatprep.subr.mxu0 0.0
        %3483 = vmatpush1.msra.mxu0 0.0
        %3484 = vmatprep.subr.mxu0 0.0
        %3485 = vmatpush1.msra.mxu0 0.0
        %3486 = vmatprep.subr.mxu0 0.0
        %3487 = vmatpush1.msra.mxu0 0.0
        %3488 = vmatprep.subr.mxu0 0.0
        %3489 = vmatpush1.msra.mxu0 0.0
        %3490 = vmatprep.subr.mxu0 0.0
        %3491 = vmatpush1.msra.mxu0 0.0
        %3492 = vmatprep.mubr.f32.mxu0 0.0
        %3493 = vmatmul.mubr.f32.gmra.mrb[0].mxu0 %v3426
        %v3494 = vpop.f32.mrb[0].mxu0
        %v3495 = vadd.f32 1e-05, %v3494
        %v3496 = vpop.f32.mrb[0].mxu0
        %3497 = vdwg.mxu0
        %v3498 = vrsqrt.pop %v3495
        %v3499 = vrot.slane %v287, 4
        %v3501 = vmul.f32 %v3498, %v3499
        %v3502 = vlaneseq
        %v3503 = vshrl.u32 %v3502, 7
        %v3504 = vsub.s32 0, %v3503
        %v3505 = vrot.slane %v3501, %v3504
        %v3506 = vmul.f32 %v3292, %v3505
        %v3507 = vmul.f32 %v3293, %v3505
        %v3508 = vmul.f32 %v3294, %v3505
        %v3509 = vmul.f32 %v3295, %v3505
        %v3510 = vmul.f32 %v3296, %v3505
        %v3511 = vmul.f32 %v3297, %v3505
        %v3512 = vmul.f32 %v3298, %v3505
        %v3513 = vmul.f32 %v3299, %v3505
        %v3514 = vmul.f32 %v3300, %v3505
        %v3515 = vmul.f32 %v3301, %v3505
        %v3516 = vmul.f32 %v3302, %v3505
        %v3517 = vmul.f32 %v3303, %v3505
        %v3518 = vmul.f32 %v3304, %v3505
        %v3519 = vmul.f32 %v3305, %v3505
        %v3520 = vmul.f32 %v3306, %v3505
        %v3521 = vmul.f32 %v3307, %v3505
        %v3522 = vmul.f32 %v3308, %v3505
        %v3523 = vmul.f32 %v3309, %v3505
        %v3524 = vmul.f32 %v3310, %v3505
        %v3525 = vmul.f32 %v3311, %v3505
        %v3526 = vmul.f32 %v3312, %v3505
        %v3527 = vmul.f32 %v3313, %v3505
        %v3528 = vmul.f32 %v3314, %v3505
        %v3529 = vmul.f32 %v3315, %v3505
        %v3530 = vmul.f32 %v3316, %v3505
        %v3531 = vmul.f32 %v3317, %v3505
        %v3532 = vmul.f32 %v3318, %v3505
        %v3533 = vmul.f32 %v3319, %v3505
        %v3534 = vmul.f32 %v3320, %v3505
        %v3535 = vmul.f32 %v3321, %v3505
        %v3536 = vmul.f32 %v3322, %v3505
        %v3537 = vmul.f32 %v3323, %v3505
        %v3538 = vlaneseq
        %v3539 = vshrl.u32 %v3538, 7
        %v3540 = vsub.s32 5, %v3539
        %v3541 = vrot.slane %v287, %v3540
        %v3542 = vadd.f32 %v3506, %v3541
        %v3543 = vadd.f32 %v3507, %v3541
        %v3544 = vadd.f32 %v3508, %v3541
        %v3545 = vadd.f32 %v3509, %v3541
        %v3546 = vadd.f32 %v3510, %v3541
        %v3547 = vadd.f32 %v3511, %v3541
        %v3548 = vadd.f32 %v3512, %v3541
        %v3549 = vadd.f32 %v3513, %v3541
        %v3550 = vadd.f32 %v3514, %v3541
        %v3551 = vadd.f32 %v3515, %v3541
        %v3552 = vadd.f32 %v3516, %v3541
        %v3553 = vadd.f32 %v3517, %v3541
        %v3554 = vadd.f32 %v3518, %v3541
        %v3555 = vadd.f32 %v3519, %v3541
        %v3556 = vadd.f32 %v3520, %v3541
        %v3557 = vadd.f32 %v3521, %v3541
        %v3558 = vadd.f32 %v3522, %v3541
        %v3559 = vadd.f32 %v3523, %v3541
        %v3560 = vadd.f32 %v3524, %v3541
        %v3561 = vadd.f32 %v3525, %v3541
        %v3562 = vadd.f32 %v3526, %v3541
        %v3563 = vadd.f32 %v3527, %v3541
        %v3564 = vadd.f32 %v3528, %v3541
        %v3565 = vadd.f32 %v3529, %v3541
        %v3566 = vadd.f32 %v3530, %v3541
        %v3567 = vadd.f32 %v3531, %v3541
        %v3568 = vadd.f32 %v3532, %v3541
        %v3569 = vadd.f32 %v3533, %v3541
        %v3570 = vadd.f32 %v3534, %v3541
        %v3571 = vadd.f32 %v3535, %v3541
        %v3572 = vadd.f32 %v3536, %v3541
        %v3573 = vadd.f32 %v3537, %v3541
        %v3574 = vsub.f32 0.0, %v3542
        %v3575 = vsub.f32 0.0, %v3543
        %v3576 = vsub.f32 0.0, %v3544
        %v3577 = vsub.f32 0.0, %v3545
        %v3578 = vsub.f32 0.0, %v3546
        %v3579 = vsub.f32 0.0, %v3547
        %v3580 = vsub.f32 0.0, %v3548
        %v3581 = vsub.f32 0.0, %v3549
        %v3582 = vsub.f32 0.0, %v3550
        %v3583 = vsub.f32 0.0, %v3551
        %v3584 = vsub.f32 0.0, %v3552
        %v3585 = vsub.f32 0.0, %v3553
        %v3586 = vsub.f32 0.0, %v3554
        %v3587 = vsub.f32 0.0, %v3555
        %v3588 = vsub.f32 0.0, %v3556
        %v3589 = vsub.f32 0.0, %v3557
        %v3590 = vsub.f32 0.0, %v3558
        %v3591 = vsub.f32 0.0, %v3559
        %v3592 = vsub.f32 0.0, %v3560
        %v3593 = vsub.f32 0.0, %v3561
        %v3594 = vsub.f32 0.0, %v3562
        %v3595 = vsub.f32 0.0, %v3563
        %v3596 = vsub.f32 0.0, %v3564
        %v3597 = vsub.f32 0.0, %v3565
        %v3598 = vsub.f32 0.0, %v3566
        %v3599 = vsub.f32 0.0, %v3567
        %v3600 = vsub.f32 0.0, %v3568
        %v3601 = vsub.f32 0.0, %v3569
        %v3602 = vsub.f32 0.0, %v3570
        %v3603 = vsub.f32 0.0, %v3571
        %v3604 = vsub.f32 0.0, %v3572
        %v3605 = vsub.f32 0.0, %v3573
        %v3606 = vmul.f32 %v3574, 1.442695
        %v3607 = vpow.pop %v3606
        %v3608 = vmul.f32 %v3575, 1.442695
        %v3609 = vpow.pop %v3608
        %v3610 = vmul.f32 %v3576, 1.442695
        %v3611 = vpow.pop %v3610
        %v3612 = vmul.f32 %v3577, 1.442695
        %v3613 = vpow.pop %v3612
        %v3614 = vmul.f32 %v3578, 1.442695
        %v3615 = vpow.pop %v3614
        %v3616 = vmul.f32 %v3579, 1.442695
        %v3617 = vpow.pop %v3616
        %v3618 = vmul.f32 %v3580, 1.442695
        %v3619 = vpow.pop %v3618
        %v3620 = vmul.f32 %v3581, 1.442695
        %v3621 = vpow.pop %v3620
        %v3622 = vmul.f32 %v3582, 1.442695
        %v3623 = vpow.pop %v3622
        %v3624 = vmul.f32 %v3583, 1.442695
        %v3625 = vpow.pop %v3624
        %v3626 = vmul.f32 %v3584, 1.442695
        %v3627 = vpow.pop %v3626
        %v3628 = vmul.f32 %v3585, 1.442695
        %v3629 = vpow.pop %v3628
        %v3630 = vmul.f32 %v3586, 1.442695
        %v3631 = vpow.pop %v3630
        %v3632 = vmul.f32 %v3587, 1.442695
        %v3633 = vpow.pop %v3632
        %v3634 = vmul.f32 %v3588, 1.442695
        %v3635 = vpow.pop %v3634
        %v3636 = vmul.f32 %v3589, 1.442695
        %v3637 = vpow.pop %v3636
        %v3638 = vmul.f32 %v3590, 1.442695
        %v3639 = vpow.pop %v3638
        %v3640 = vmul.f32 %v3591, 1.442695
        %v3641 = vpow.pop %v3640
        %v3642 = vmul.f32 %v3592, 1.442695
        %v3643 = vpow.pop %v3642
        %v3644 = vmul.f32 %v3593, 1.442695
        %v3645 = vpow.pop %v3644
        %v3646 = vmul.f32 %v3594, 1.442695
        %v3647 = vpow.pop %v3646
        %v3648 = vmul.f32 %v3595, 1.442695
        %v3649 = vpow.pop %v3648
        %v3650 = vmul.f32 %v3596, 1.442695
        %v3651 = vpow.pop %v3650
        %v3652 = vmul.f32 %v3597, 1.442695
        %v3653 = vpow.pop %v3652
        %v3654 = vmul.f32 %v3598, 1.442695
        %v3655 = vpow.pop %v3654
        %v3656 = vmul.f32 %v3599, 1.442695
        %v3657 = vpow.pop %v3656
        %v3658 = vmul.f32 %v3600, 1.442695
        %v3659 = vpow.pop %v3658
        %v3660 = vmul.f32 %v3601, 1.442695
        %v3661 = vpow.pop %v3660
        %v3662 = vmul.f32 %v3602, 1.442695
        %v3663 = vpow.pop %v3662
        %v3664 = vmul.f32 %v3603, 1.442695
        %v3665 = vpow.pop %v3664
        %v3666 = vmul.f32 %v3604, 1.442695
        %v3667 = vpow.pop %v3666
        %v3668 = vmul.f32 %v3605, 1.442695
        %v3669 = vpow.pop %v3668
        %v3670 = vadd.f32 %v3607, 1.0
        %v3671 = vadd.f32 %v3609, 1.0
        %v3672 = vadd.f32 %v3611, 1.0
        %v3673 = vadd.f32 %v3613, 1.0
        %v3674 = vadd.f32 %v3615, 1.0
        %v3675 = vadd.f32 %v3617, 1.0
        %v3676 = vadd.f32 %v3619, 1.0
        %v3677 = vadd.f32 %v3621, 1.0
        %v3678 = vadd.f32 %v3623, 1.0
        %v3679 = vadd.f32 %v3625, 1.0
        %v3680 = vadd.f32 %v3627, 1.0
        %v3681 = vadd.f32 %v3629, 1.0
        %v3682 = vadd.f32 %v3631, 1.0
        %v3683 = vadd.f32 %v3633, 1.0
        %v3684 = vadd.f32 %v3635, 1.0
        %v3685 = vadd.f32 %v3637, 1.0
        %v3686 = vadd.f32 %v3639, 1.0
        %v3687 = vadd.f32 %v3641, 1.0
        %v3688 = vadd.f32 %v3643, 1.0
        %v3689 = vadd.f32 %v3645, 1.0
        %v3690 = vadd.f32 %v3647, 1.0
        %v3691 = vadd.f32 %v3649, 1.0
        %v3692 = vadd.f32 %v3651, 1.0
        %v3693 = vadd.f32 %v3653, 1.0
        %v3694 = vadd.f32 %v3655, 1.0
        %v3695 = vadd.f32 %v3657, 1.0
        %v3696 = vadd.f32 %v3659, 1.0
        %v3697 = vadd.f32 %v3661, 1.0
        %v3698 = vadd.f32 %v3663, 1.0
        %v3699 = vadd.f32 %v3665, 1.0
        %v3700 = vadd.f32 %v3667, 1.0
        %v3701 = vadd.f32 %v3669, 1.0
        %v3702 = vrcp.pop %v3670
        %v3703 = vrcp.pop %v3671
        %v3704 = vrcp.pop %v3672
        %v3705 = vrcp.pop %v3673
        %v3706 = vrcp.pop %v3674
        %v3707 = vrcp.pop %v3675
        %v3708 = vrcp.pop %v3676
        %v3709 = vrcp.pop %v3677
        %v3710 = vrcp.pop %v3678
        %v3711 = vrcp.pop %v3679
        %v3712 = vrcp.pop %v3680
        %v3713 = vrcp.pop %v3681
        %v3714 = vrcp.pop %v3682
        %v3715 = vrcp.pop %v3683
        %v3716 = vrcp.pop %v3684
        %v3717 = vrcp.pop %v3685
        %v3718 = vrcp.pop %v3686
        %v3719 = vrcp.pop %v3687
        %v3720 = vrcp.pop %v3688
        %v3721 = vrcp.pop %v3689
        %v3722 = vrcp.pop %v3690
        %v3723 = vrcp.pop %v3691
        %v3724 = vrcp.pop %v3692
        %v3725 = vrcp.pop %v3693
        %v3726 = vrcp.pop %v3694
        %v3727 = vrcp.pop %v3695
        %v3728 = vrcp.pop %v3696
        %v3729 = vrcp.pop %v3697
        %v3730 = vrcp.pop %v3698
        %v3731 = vrcp.pop %v3699
        %v3732 = vrcp.pop %v3700
        %v3733 = vrcp.pop %v3701
        %v3734 = vmul.f32 %v3542, %v3702
        %v3735 = vmul.f32 %v3543, %v3703
        %v3736 = vmul.f32 %v3544, %v3704
        %v3737 = vmul.f32 %v3545, %v3705
        %v3738 = vmul.f32 %v3546, %v3706
        %v3739 = vmul.f32 %v3547, %v3707
        %v3740 = vmul.f32 %v3548, %v3708
        %v3741 = vmul.f32 %v3549, %v3709
        %v3742 = vmul.f32 %v3550, %v3710
        %v3743 = vmul.f32 %v3551, %v3711
        %v3744 = vmul.f32 %v3552, %v3712
        %v3745 = vmul.f32 %v3553, %v3713
        %v3746 = vmul.f32 %v3554, %v3714
        %v3747 = vmul.f32 %v3555, %v3715
        %v3748 = vmul.f32 %v3556, %v3716
        %v3749 = vmul.f32 %v3557, %v3717
        %v3750 = vmul.f32 %v3558, %v3718
        %v3751 = vmul.f32 %v3559, %v3719
        %v3752 = vmul.f32 %v3560, %v3720
        %v3753 = vmul.f32 %v3561, %v3721
        %v3754 = vmul.f32 %v3562, %v3722
        %v3755 = vmul.f32 %v3563, %v3723
        %v3756 = vmul.f32 %v3564, %v3724
        %v3757 = vmul.f32 %v3565, %v3725
        %v3758 = vmul.f32 %v3566, %v3726
        %v3759 = vmul.f32 %v3567, %v3727
        %v3760 = vmul.f32 %v3568, %v3728
        %v3761 = vmul.f32 %v3569, %v3729
        %v3762 = vmul.f32 %v3570, %v3730
        %v3763 = vmul.f32 %v3571, %v3731
        %v3764 = vmul.f32 %v3572, %v3732
        %v3765 = vmul.f32 %v3573, %v3733
        %v3766 = vld [vmem:[%s3] sm:$0xf]
        %v3767 = vld [vmem:[%s3 + $0x4] sm:$0xf]
        %v3768 = vlaneseq
        %v3769 = vshrl.u32 %v3768, 7
        %v3770 = vsub.s32 6, %v3769
        %v3771 = vrot.slane %v287, %v3770
        %v3774 = vunpack.c.l.b16 %v3766
        %v3775 = vunpack.c.l.b16 %v3767
        %v3776 = vpack.c.b16 %v3775, %v3774
        %v3778 = vsel %vm662, %v352, 0
        %v3780 = vsel %vm662, %v353, 0
        %v3782 = vsel %vm662, %v354, 0
        %v3784 = vsel %vm662, %v355, 0
        %v3786 = vsel %vm662, %v356, 0
        %v3788 = vsel %vm662, %v357, 0
        %v3790 = vsel %vm662, %v358, 0
        %v3792 = vsel %vm662, %v359, 0
        %v3794 = vsel %vm662, %v360, 0
        %v3796 = vsel %vm662, %v361, 0
        %v3798 = vsel %vm662, %v362, 0
        %v3800 = vsel %vm662, %v363, 0
        %v3802 = vsel %vm662, %v364, 0
        %v3804 = vsel %vm662, %v365, 0
        %v3806 = vsel %vm662, %v366, 0
        %v3808 = vsel %vm662, %v367, 0
        %3810 = vmatprep.subr.bf16.mxu0 0
        %3811 = vmatpush1.bf16.msra.mxu0 %v3776
        %3812 = vmatprep.subr.bf16.mxu0 0
        %3813 = vmatpush1.bf16.msra.mxu0 0
        %3814 = vmatprep.subr.bf16.mxu0 0
        %3815 = vmatpush1.bf16.msra.mxu0 0
        %3816 = vmatprep.subr.bf16.mxu0 0
        %3817 = vmatpush1.bf16.msra.mxu0 0
        %3818 = vmatprep.subr.bf16.mxu0 0
        %3819 = vmatpush1.bf16.msra.mxu0 0
        %3820 = vmatprep.subr.bf16.mxu0 0
        %3821 = vmatpush1.bf16.msra.mxu0 0
        %3822 = vmatprep.subr.bf16.mxu0 0
        %3823 = vmatpush1.bf16.msra.mxu0 0
        %3824 = vmatprep.subr.bf16.mxu0 0
        %3825 = vmatpush1.bf16.msra.mxu0 0
        %3826 = vmatprep.subr.bf16.mxu0 0
        %3827 = vmatpush1.bf16.msra.mxu0 0
        %3828 = vmatprep.subr.bf16.mxu0 0
        %3829 = vmatpush1.bf16.msra.mxu0 0
        %3830 = vmatprep.subr.bf16.mxu0 0
        %3831 = vmatpush1.bf16.msra.mxu0 0
        %3832 = vmatprep.subr.bf16.mxu0 0
        %3833 = vmatpush1.bf16.msra.mxu0 0
        %3834 = vmatprep.subr.bf16.mxu0 0
        %3835 = vmatpush1.bf16.msra.mxu0 0
        %3836 = vmatprep.subr.bf16.mxu0 0
        %3837 = vmatpush1.bf16.msra.mxu0 0
        %3838 = vmatprep.subr.bf16.mxu0 0
        %3839 = vmatpush1.bf16.msra.mxu0 0
        %3840 = vmatprep.subr.bf16.mxu0 0
        %3841 = vmatpush1.bf16.msra.mxu0 0
        %3842 = vmatprep.mubr.bf16.mxu0 0
        %3843 = vmatmul.mubr.bf16.gmra.mrb[0].mxu0 %v3778
        %v3844 = vpop.f32.mrb[0].mxu0
        %v3845 = vadd.f32 %v3771, %v3844
        %v3846 = vpop.f32.mrb[0].mxu0
        %v3847 = vpop.f32.mrb[0].mxu0
        %v3848 = vadd.f32 %v3771, %v3847
        %v3849 = vpop.f32.mrb[0].mxu0
        %3850 = vmatprep.mubr.bf16.mxu0 0
        %3851 = vmatmul.mubr.bf16.gmra.mrb[0].mxu0 %v3780
        %v3852 = vpop.f32.mrb[0].mxu0
        %v3853 = vadd.f32 %v3771, %v3852
        %v3854 = vpop.f32.mrb[0].mxu0
        %v3855 = vpop.f32.mrb[0].mxu0
        %v3856 = vadd.f32 %v3771, %v3855
        %v3857 = vpop.f32.mrb[0].mxu0
        %3858 = vmatprep.mubr.bf16.mxu0 0
        %3859 = vmatmul.mubr.bf16.gmra.mrb[0].mxu0 %v3782
        %v3860 = vpop.f32.mrb[0].mxu0
        %v3861 = vadd.f32 %v3771, %v3860
        %v3862 = vpop.f32.mrb[0].mxu0
        %v3863 = vpop.f32.mrb[0].mxu0
        %v3864 = vadd.f32 %v3771, %v3863
        %v3865 = vpop.f32.mrb[0].mxu0
        %3866 = vmatprep.mubr.bf16.mxu0 0
        %3867 = vmatmul.mubr.bf16.gmra.mrb[0].mxu0 %v3784
        %v3868 = vpop.f32.mrb[0].mxu0
        %v3869 = vadd.f32 %v3771, %v3868
        %v3870 = vpop.f32.mrb[0].mxu0
        %v3871 = vpop.f32.mrb[0].mxu0
        %v3872 = vadd.f32 %v3771, %v3871
        %v3873 = vpop.f32.mrb[0].mxu0
        %3874 = vmatprep.mubr.bf16.mxu0 0
        %3875 = vmatmul.mubr.bf16.gmra.mrb[0].mxu0 %v3786
        %v3876 = vpop.f32.mrb[0].mxu0
        %v3877 = vadd.f32 %v3771, %v3876
        %v3878 = vpop.f32.mrb[0].mxu0
        %v3879 = vpop.f32.mrb[0].mxu0
        %v3880 = vadd.f32 %v3771, %v3879
        %v3881 = vpop.f32.mrb[0].mxu0
        %3882 = vmatprep.mubr.bf16.mxu0 0
        %3883 = vmatmul.mubr.bf16.gmra.mrb[0].mxu0 %v3788
        %v3884 = vpop.f32.mrb[0].mxu0
        %v3885 = vadd.f32 %v3771, %v3884
        %v3886 = vpop.f32.mrb[0].mxu0
        %v3887 = vpop.f32.mrb[0].mxu0
        %v3888 = vadd.f32 %v3771, %v3887
        %v3889 = vpop.f32.mrb[0].mxu0
        %3890 = vmatprep.mubr.bf16.mxu0 0
        %3891 = vmatmul.mubr.bf16.gmra.mrb[0].mxu0 %v3790
        %v3892 = vpop.f32.mrb[0].mxu0
        %v3893 = vadd.f32 %v3771, %v3892
        %v3894 = vpop.f32.mrb[0].mxu0
        %v3895 = vpop.f32.mrb[0].mxu0
        %v3896 = vadd.f32 %v3771, %v3895
        %v3897 = vpop.f32.mrb[0].mxu0
        %3898 = vmatprep.mubr.bf16.mxu0 0
        %3899 = vmatmul.mubr.bf16.gmra.mrb[0].mxu0 %v3792
        %v3900 = vpop.f32.mrb[0].mxu0
        %v3901 = vadd.f32 %v3771, %v3900
        %v3902 = vpop.f32.mrb[0].mxu0
        %v3903 = vpop.f32.mrb[0].mxu0
        %v3904 = vadd.f32 %v3771, %v3903
        %v3905 = vpop.f32.mrb[0].mxu0
        %3906 = vmatprep.mubr.bf16.mxu0 0
        %3907 = vmatmul.mubr.bf16.gmra.mrb[0].mxu0 %v3794
        %v3908 = vpop.f32.mrb[0].mxu0
        %v3909 = vadd.f32 %v3771, %v3908
        %v3910 = vpop.f32.mrb[0].mxu0
        %v3911 = vpop.f32.mrb[0].mxu0
        %v3912 = vadd.f32 %v3771, %v3911
        %v3913 = vpop.f32.mrb[0].mxu0
        %3914 = vmatprep.mubr.bf16.mxu0 0
        %3915 = vmatmul.mubr.bf16.gmra.mrb[0].mxu0 %v3796
        %v3916 = vpop.f32.mrb[0].mxu0
        %v3917 = vadd.f32 %v3771, %v3916
        %v3918 = vpop.f32.mrb[0].mxu0
        %v3919 = vpop.f32.mrb[0].mxu0
        %v3920 = vadd.f32 %v3771, %v3919
        %v3921 = vpop.f32.mrb[0].mxu0
        %3922 = vmatprep.mubr.bf16.mxu0 0
        %3923 = vmatmul.mubr.bf16.gmra.mrb[0].mxu0 %v3798
        %v3924 = vpop.f32.mrb[0].mxu0
        %v3925 = vadd.f32 %v3771, %v3924
        %v3926 = vpop.f32.mrb[0].mxu0
        %v3927 = vpop.f32.mrb[0].mxu0
        %v3928 = vadd.f32 %v3771, %v3927
        %v3929 = vpop.f32.mrb[0].mxu0
        %3930 = vmatprep.mubr.bf16.mxu0 0
        %3931 = vmatmul.mubr.bf16.gmra.mrb[0].mxu0 %v3800
        %v3932 = vpop.f32.mrb[0].mxu0
        %v3933 = vadd.f32 %v3771, %v3932
        %v3934 = vpop.f32.mrb[0].mxu0
        %v3935 = vpop.f32.mrb[0].mxu0
        %v3936 = vadd.f32 %v3771, %v3935
        %v3937 = vpop.f32.mrb[0].mxu0
        %3938 = vmatprep.mubr.bf16.mxu0 0
        %3939 = vmatmul.mubr.bf16.gmra.mrb[0].mxu0 %v3802
        %v3940 = vpop.f32.mrb[0].mxu0
        %v3941 = vadd.f32 %v3771, %v3940
        %v3942 = vpop.f32.mrb[0].mxu0
        %v3943 = vpop.f32.mrb[0].mxu0
        %v3944 = vadd.f32 %v3771, %v3943
        %v3945 = vpop.f32.mrb[0].mxu0
        %3946 = vmatprep.mubr.bf16.mxu0 0
        %3947 = vmatmul.mubr.bf16.gmra.mrb[0].mxu0 %v3804
        %v3948 = vpop.f32.mrb[0].mxu0
        %v3949 = vadd.f32 %v3771, %v3948
        %v3950 = vpop.f32.mrb[0].mxu0
        %v3951 = vpop.f32.mrb[0].mxu0
        %v3952 = vadd.f32 %v3771, %v3951
        %v3953 = vpop.f32.mrb[0].mxu0
        %3954 = vmatprep.mubr.bf16.mxu0 0
        %3955 = vmatmul.mubr.bf16.gmra.mrb[0].mxu0 %v3806
        %v3956 = vpop.f32.mrb[0].mxu0
        %v3957 = vadd.f32 %v3771, %v3956
        %v3958 = vpop.f32.mrb[0].mxu0
        %v3959 = vpop.f32.mrb[0].mxu0
        %v3960 = vadd.f32 %v3771, %v3959
        %v3961 = vpop.f32.mrb[0].mxu0
        %3962 = vmatprep.mubr.bf16.mxu0 0
        %3963 = vmatmul.mubr.bf16.gmra.mrb[0].mxu0 %v3808
        %v3964 = vpop.f32.mrb[0].mxu0
        %v3965 = vadd.f32 %v3771, %v3964
        %v3966 = vpop.f32.mrb[0].mxu0
        %v3967 = vpop.f32.mrb[0].mxu0
        %v3968 = vadd.f32 %v3771, %v3967
        %v3969 = vpop.f32.mrb[0].mxu0
        %3970 = vdwg.mxu0
        %v3971 = vadd.f32 %v3734, %v3845
        %v3972 = vadd.f32 %v3735, %v3848
        %v3973 = vadd.f32 %v3736, %v3853
        %v3974 = vadd.f32 %v3737, %v3856
        %v3975 = vadd.f32 %v3738, %v3861
        %v3976 = vadd.f32 %v3739, %v3864
        %v3977 = vadd.f32 %v3740, %v3869
        %v3978 = vadd.f32 %v3741, %v3872
        %v3979 = vadd.f32 %v3742, %v3877
        %v3980 = vadd.f32 %v3743, %v3880
        %v3981 = vadd.f32 %v3744, %v3885
        %v3982 = vadd.f32 %v3745, %v3888
        %v3983 = vadd.f32 %v3746, %v3893
        %v3984 = vadd.f32 %v3747, %v3896
        %v3985 = vadd.f32 %v3748, %v3901
        %v3986 = vadd.f32 %v3749, %v3904
        %v3987 = vadd.f32 %v3750, %v3909
        %v3988 = vadd.f32 %v3751, %v3912
        %v3989 = vadd.f32 %v3752, %v3917
        %v3990 = vadd.f32 %v3753, %v3920
        %v3991 = vadd.f32 %v3754, %v3925
        %v3992 = vadd.f32 %v3755, %v3928
        %v3993 = vadd.f32 %v3756, %v3933
        %v3994 = vadd.f32 %v3757, %v3936
        %v3995 = vadd.f32 %v3758, %v3941
        %v3996 = vadd.f32 %v3759, %v3944
        %v3997 = vadd.f32 %v3760, %v3949
        %v3998 = vadd.f32 %v3761, %v3952
        %v3999 = vadd.f32 %v3762, %v3957
        %v4000 = vadd.f32 %v3763, %v3960
        %v4001 = vadd.f32 %v3764, %v3965
        %v4002 = vadd.f32 %v3765, %v3968
        %v4003 = vpack.c.bf16 %v3972, %v3971
        %v4004 = vpack.c.bf16 %v3974, %v3973
        %v4005 = vpack.c.bf16 %v3976, %v3975
        %v4006 = vpack.c.bf16 %v3978, %v3977
        %v4007 = vpack.c.bf16 %v3980, %v3979
        %v4008 = vpack.c.bf16 %v3982, %v3981
        %v4009 = vpack.c.bf16 %v3984, %v3983
        %v4010 = vpack.c.bf16 %v3986, %v3985
        %v4011 = vpack.c.bf16 %v3988, %v3987
        %v4012 = vpack.c.bf16 %v3990, %v3989
        %v4013 = vpack.c.bf16 %v3992, %v3991
        %v4014 = vpack.c.bf16 %v3994, %v3993
        %v4015 = vpack.c.bf16 %v3996, %v3995
        %v4016 = vpack.c.bf16 %v3998, %v3997
        %v4017 = vpack.c.bf16 %v4000, %v3999
        %v4018 = vpack.c.bf16 %v4002, %v4001
        %v4035 = vunpack.c.l.b16 %v4003
        %v4036 = vunpack.c.h.b16 %v4003
        %v4037 = vunpack.c.l.b16 %v4004
        %v4038 = vunpack.c.h.b16 %v4004
        %v4039 = vunpack.c.l.b16 %v4005
        %v4040 = vunpack.c.h.b16 %v4005
        %v4041 = vunpack.c.l.b16 %v4006
        %v4042 = vunpack.c.h.b16 %v4006
        %v4043 = vunpack.c.l.b16 %v4007
        %v4044 = vunpack.c.h.b16 %v4007
        %v4045 = vunpack.c.l.b16 %v4008
        %v4046 = vunpack.c.h.b16 %v4008
        %v4047 = vunpack.c.l.b16 %v4009
        %v4048 = vunpack.c.h.b16 %v4009
        %v4049 = vunpack.c.l.b16 %v4010
        %v4050 = vunpack.c.h.b16 %v4010
        %v4051 = vunpack.c.l.b16 %v4011
        %v4052 = vunpack.c.h.b16 %v4011
        %v4053 = vunpack.c.l.b16 %v4012
        %v4054 = vunpack.c.h.b16 %v4012
        %v4055 = vunpack.c.l.b16 %v4013
        %v4056 = vunpack.c.h.b16 %v4013
        %v4057 = vunpack.c.l.b16 %v4014
        %v4058 = vunpack.c.h.b16 %v4014
        %v4059 = vunpack.c.l.b16 %v4015
        %v4060 = vunpack.c.h.b16 %v4015
        %v4061 = vunpack.c.l.b16 %v4016
        %v4062 = vunpack.c.h.b16 %v4016
        %v4063 = vunpack.c.l.b16 %v4017
        %v4064 = vunpack.c.h.b16 %v4017
        %v4065 = vunpack.c.l.b16 %v4018
        %v4066 = vunpack.c.h.b16 %v4018
        %v4067 = vpack.c.b16 %v4035, %v4035
        %v4068 = vpack.c.b16 %v4036, %v4036
        %v4069 = vpack.c.b16 %v4037, %v4037
        %v4070 = vpack.c.b16 %v4038, %v4038
        %v4071 = vpack.c.b16 %v4039, %v4039
        %v4072 = vpack.c.b16 %v4040, %v4040
        %v4073 = vpack.c.b16 %v4041, %v4041
        %v4074 = vpack.c.b16 %v4042, %v4042
        %v4075 = vpack.c.b16 %v4043, %v4043
        %v4076 = vpack.c.b16 %v4044, %v4044
        %v4077 = vpack.c.b16 %v4045, %v4045
        %v4078 = vpack.c.b16 %v4046, %v4046
        %v4079 = vpack.c.b16 %v4047, %v4047
        %v4080 = vpack.c.b16 %v4048, %v4048
        %v4081 = vpack.c.b16 %v4049, %v4049
        %v4082 = vpack.c.b16 %v4050, %v4050
        %v4083 = vpack.c.b16 %v4051, %v4051
        %v4084 = vpack.c.b16 %v4052, %v4052
        %v4085 = vpack.c.b16 %v4053, %v4053
        %v4086 = vpack.c.b16 %v4054, %v4054
        %v4087 = vpack.c.b16 %v4055, %v4055
        %v4088 = vpack.c.b16 %v4056, %v4056
        %v4089 = vpack.c.b16 %v4057, %v4057
        %v4090 = vpack.c.b16 %v4058, %v4058
        %v4091 = vpack.c.b16 %v4059, %v4059
        %v4092 = vpack.c.b16 %v4060, %v4060
        %v4093 = vpack.c.b16 %v4061, %v4061
        %v4094 = vpack.c.b16 %v4062, %v4062
        %v4095 = vpack.c.b16 %v4063, %v4063
        %v4096 = vpack.c.b16 %v4064, %v4064
        %v4097 = vpack.c.b16 %v4065, %v4065
        %v4098 = vpack.c.b16 %v4066, %v4066
        %vm4131 = vcmask 257024
        %4132 = vst.msk [vmem:[%s244] sm:$0xf] %vm4131, %v4067
        %4133 = vst.msk [vmem:[%s244 + $0x4] sm:$0xf] %vm4131, %v4068
        %4134 = vst.msk [vmem:[%s244 + $0x8] sm:$0xf] %vm4131, %v4069
        %4135 = vst.msk [vmem:[%s244 + $0xc] sm:$0xf] %vm4131, %v4070
        %4136 = vst.msk [vmem:[%s244 + $0x10] sm:$0xf] %vm4131, %v4071
        %4137 = vst.msk [vmem:[%s244 + $0x14] sm:$0xf] %vm4131, %v4072
        %4138 = vst.msk [vmem:[%s244 + $0x18] sm:$0xf] %vm4131, %v4073
        %4139 = vst.msk [vmem:[%s244 + $0x1c] sm:$0xf] %vm4131, %v4074
        %4140 = vst.msk [vmem:[%s244 + $0x20] sm:$0xf] %vm4131, %v4075
        %4141 = vst.msk [vmem:[%s244 + $0x24] sm:$0xf] %vm4131, %v4076
        %4142 = vst.msk [vmem:[%s244 + $0x28] sm:$0xf] %vm4131, %v4077
        %4143 = vst.msk [vmem:[%s244 + $0x2c] sm:$0xf] %vm4131, %v4078
        %4144 = vst.msk [vmem:[%s244 + $0x30] sm:$0xf] %vm4131, %v4079
        %4145 = vst.msk [vmem:[%s244 + $0x34] sm:$0xf] %vm4131, %v4080
        %4146 = vst.msk [vmem:[%s244 + $0x38] sm:$0xf] %vm4131, %v4081
        %4147 = vst.msk [vmem:[%s244 + $0x3c] sm:$0xf] %vm4131, %v4082
        %4148 = vst.msk [vmem:[%s244 + $0x40] sm:$0xf] %vm4131, %v4083
        %4149 = vst.msk [vmem:[%s244 + $0x44] sm:$0xf] %vm4131, %v4084
        %4150 = vst.msk [vmem:[%s244 + $0x48] sm:$0xf] %vm4131, %v4085
        %4151 = vst.msk [vmem:[%s244 + $0x4c] sm:$0xf] %vm4131, %v4086
        %4152 = vst.msk [vmem:[%s244 + $0x50] sm:$0xf] %vm4131, %v4087
        %4153 = vst.msk [vmem:[%s244 + $0x54] sm:$0xf] %vm4131, %v4088
        %4154 = vst.msk [vmem:[%s244 + $0x58] sm:$0xf] %vm4131, %v4089
        %4155 = vst.msk [vmem:[%s244 + $0x5c] sm:$0xf] %vm4131, %v4090
        %4156 = vst.msk [vmem:[%s244 + $0x60] sm:$0xf] %vm4131, %v4091
        %4157 = vst.msk [vmem:[%s244 + $0x64] sm:$0xf] %vm4131, %v4092
        %4158 = vst.msk [vmem:[%s244 + $0x68] sm:$0xf] %vm4131, %v4093
        %4159 = vst.msk [vmem:[%s244 + $0x6c] sm:$0xf] %vm4131, %v4094
        %4160 = vst.msk [vmem:[%s244 + $0x70] sm:$0xf] %vm4131, %v4095
        %4161 = vst.msk [vmem:[%s244 + $0x74] sm:$0xf] %vm4131, %v4096
        %4162 = vst.msk [vmem:[%s244 + $0x78] sm:$0xf] %vm4131, %v4097
        %4163 = vst.msk [vmem:[%s244 + $0x7c] sm:$0xf] %vm4131, %v4098
        %s4164 = sand.u32 %s159, 1
        %s4165 = scalar_lea.sflag [#allocation3], %s4164
        %s4166 = sand.u32 %s159, 1
        %s4167 = smul.addr %s4166, 128
        %s4168 = scalar_lea.vmem [#allocation2], %s4167
        // Predicated region
        $region45: #{conv_block_forward.1} parent=43 // pred_check
          %p4169 = pneg %p169
        $region46: #{conv_block_forward.1} parent=43 // pred_check_branch
          %4171 = sbr.rel (%p4169) target = $region48
        $region47: #{conv_block_forward.1} parent=43 // pred_region
          %s4173 = ssub.s32 2048, 2048
          %4174 = vsyncadd %s4165, %s4173
          %s4175 = smul.addr %s20, 32
          %s4176 = smul.addr %s4175, 64
          %s4177 = scalar_lea.hbm %s6, %s4176
          %s4178 = sshll.u32 %s4168, 4
          %s4179 = int_to_ptr.vmem [resolvable:$true] %s4178
          %4184 = dma.vmem_to_hbm [thread:$0]  %s4179, 2048, %s4177, %s4165, 64, 64, 4
        $region48: #{conv_block_forward.1} parent=43 // pred_fallthru
          _
      $region44: #{conv_block_forward.1} parent=5 // pred_fallthru
        _
      %p4185 = scmp.le.s32.totalorder 2, %s15
      // Predicated region
      $region49: #{conv_block_forward.1} parent=5 // pred_check
        %p4186 = pneg %p4185
      $region50: #{conv_block_forward.1} parent=5 // pred_check_branch
        %4188 = sbr.rel (%p4186) target = $region52
      $region51: #{conv_block_forward.1} parent=5 // pred_region
        %s4189 = ssub.s32 %s15, 2
        // Predicated region
        $region53: #{conv_block_forward.1} parent=51 // pred_check
          %p4190 = pneg %p175
        $region54: #{conv_block_forward.1} parent=51 // pred_check_branch
          %4192 = sbr.rel (%p4190) target = $region56
        $region55: #{conv_block_forward.1} parent=51 // pred_region
          %s4193 = sand.u32 %s160, 1
          %s4194 = scalar_lea.sflag [#allocation3], %s4193
          %s4195 = sand.u32 %s160, 1
          %s4196 = smul.addr %s4195, 128
          %s4197 = scalar_lea.vmem [#allocation2], %s4196
          %4198 = dma.done %s4194, 2048
        $region56: #{conv_block_forward.1} parent=51 // pred_fallthru
          _
      $region52: #{conv_block_forward.1} parent=5 // pred_fallthru
        _
    $region6: #{conv_block_forward.1} parent=1 // loop_footer
      %s19 = sadd.s32 1, %s15
    $region7: #{conv_block_forward.1} parent=1 // loop_footer_branch
      %14 = sbr.rel target = $region3
    $region8: #{conv_block_forward.1} parent=1 // loop_exit
      _
    %4199 = vsyncpa [#allocation3], 1
    %s4200 = scalar_lea.sflag [#allocation3], 1
    %4201 = vsyncpa %s4200, 1

</llo_original>
